<compile_context>
chip_gen: v5e
topology: v5e:2x2
jax: 0.10.0
libtpu: 0.0.40
codegen_flags: <defaults>
</compile_context>

<pallas_src>
import functools

import jax
import jax.numpy as jnp
from jax import lax
from jax.experimental import pallas as pl
from jax.experimental.pallas import tpu as pltpu


# ----------------------------- Pallas kernels ------------------------------ #

def _conv_stats_kernel(x_ref, w_ref, conv_ref, sum_ref, sq_ref, *,
                       taps, c_in, m_rows, s_slice, wp, h, w):
    """3x3x3 conv (stride 1, pad 1) for one sample + masked per-channel partials.

    x_ref   : (1, C_in, RT) bf16   zero-padded, depth-flattened sample (channel-first)
    w_ref   : (C_out, 27*C_in) bf16 dense weight operand, tap-major column blocks
    conv_ref: (1, C_out, M)  bf16   conv output, channel-first, lane-dense (M = D*Hp*Wp)
    sum/sq  : (1, C_out, 1)  f32    per-sample partial sum / sum-of-squares (valid voxels)
    """
    slab = x_ref[0]                     # (C_in, RT) bf16, VMEM-resident, read once
    w_all = w_ref[...]                  # (C_out, 27*C_in) bf16
    c_out = w_all.shape[0]

    # 27 shifted matmuls; each tap is a static lane-offset slice of the flat slab.
    # TODO(synk): packing all taps into one K=27*C_in contraction needs misaligned
    # (4-lane) operand packing in VMEM; kept as 27 full-sample dots instead.
    acc = jnp.zeros((c_out, m_rows), jnp.float32)
    for t, st in enumerate(taps):
        x_t = slab[:, st:st + m_rows]                        # (C_in, M) bf16
        w_t = w_all[:, t * c_in:(t + 1) * c_in]              # (C_out, C_in) bf16
        acc = acc + jnp.dot(w_t, x_t, preferred_element_type=jnp.float32)

    # Border mask built in-kernel (no mask DMA). Index math in f32 is exact for
    # these magnitudes (< 2^23); the +0.5 guard keeps floor() robust to division
    # rounding at exact multiples.
    g = lax.broadcasted_iota(jnp.int32, (1, m_rows), 1).astype(jnp.float32)
    d_idx = jnp.floor((g + 0.5) / s_slice)
    rr = g - d_idx * s_slice
    hh = jnp.floor((rr + 0.5) / wp)
    ww = rr - hh * wp
    mask = jnp.where((hh < h) & (ww >= 1) & (ww <= w), 1.0, 0.0)

    masked = acc * mask
    conv_ref[0] = acc.astype(jnp.bfloat16)
    sum_ref[0] = jnp.sum(masked, axis=1, keepdims=True)
    sq_ref[0] = jnp.sum(masked * masked, axis=1, keepdims=True)


def _bn_apply_kernel(y_ref, scale_ref, shift_ref, o_ref):
    """Lane-dense elementwise y * scale + shift with per-channel broadcast."""
    o_ref[0] = y_ref[0].astype(jnp.float32) * scale_ref[...] + shift_ref[...]


# ------------------------------ JAX wrapper -------------------------------- #

@jax.jit
def conv_bn_3d(x, conv_w, gamma, beta, eps=1e-5):
    """x: (N, C_in, D, H, W); conv_w: (C_out, C_in, 3, 3, 3) -> (N, C_out, D, H, W)."""
    n, c_in, d, h, w = x.shape
    c_out = conv_w.shape[0]
    dp, hp, wp = d + 2, h + 2, w + 2
    s_slice = hp * wp                 # flattened padded rows per depth slice
    m_rows = d * s_slice              # output rows computed per sample (incl. borders)
    rt = m_rows + 2 * s_slice + 2 * wp + 2        # span covering all 27 tap shifts
    rt = ((rt + 127) // 128) * 128                # lane-tile aligned

    # ---- layout prep: pad D/H/W once, flatten, bf16; stays channel-first ------
    xp = jnp.pad(x, ((0, 0), (0, 0), (1, 1), (1, 1), (1, 1)))   # (N,Ci,Dp,Hp,Wp)
    xf = xp.reshape(n, c_in, dp * s_slice)
    xf = jnp.pad(xf, ((0, 0), (0, 0), (1, rt - 1 - dp * s_slice)))
    xf = xf.astype(jnp.bfloat16)                                 # (N, Ci, RT)

    # Dense 2-D weight operand: (C_out, 27*C_in), tap-major column blocks.
    w2 = jnp.transpose(conv_w, (0, 2, 3, 4, 1)).reshape(c_out, 27 * c_in)
    w2 = w2.astype(jnp.bfloat16)

    # Static tap shifts into the flattened padded slab (kd, kh, kw order = w2 order).
    taps = tuple(kd * s_slice + kh * wp + kw
                 for kd in range(3) for kh in range(3) for kw in range(3))

    kernel1 = functools.partial(
        _conv_stats_kernel, taps=taps, c_in=c_in, m_rows=m_rows,
        s_slice=s_slice, wp=wp, h=h, w=w)

    # --- kernel 1: whole-sample conv + per-sample masked BN partials ----------
    conv_out, psum, psq = pl.pallas_call(
        kernel1,
        out_shape=(
            jax.ShapeDtypeStruct((n, c_out, m_rows), jnp.bfloat16),
            jax.ShapeDtypeStruct((n, c_out, 1), jnp.float32),
            jax.ShapeDtypeStruct((n, c_out, 1), jnp.float32),
        ),
        grid_spec=pltpu.PrefetchScalarGridSpec(
            num_scalar_prefetch=0,
            grid=(n,),
            in_specs=[
                pl.BlockSpec((1, c_in, rt), lambda i: (i, 0, 0)),
                pl.BlockSpec((c_out, 27 * c_in), lambda i: (0, 0)),
            ],
            out_specs=[
                pl.BlockSpec((1, c_out, m_rows), lambda i: (i, 0, 0)),
                pl.BlockSpec((1, c_out, 1), lambda i: (i, 0, 0)),
                pl.BlockSpec((1, c_out, 1), lambda i: (i, 0, 0)),
            ],
        ),
        compiler_params=pltpu.CompilerParams(
            dimension_semantics=("parallel",),
            vmem_limit_bytes=64 * 1024 * 1024),
    )(xf, w2)

    # ---- per-channel batch stats (training-mode BN: biased variance) ----------
    m = n * d * h * w
    ch_sum = jnp.sum(psum[:, :, 0], axis=0)
    ch_sq = jnp.sum(psq[:, :, 0], axis=0)
    mean = ch_sum / m
    # TODO(synk): E[x^2]-E[x]^2 in f32 can cancel for large-mean activations; use a
    # shifted/Welford formulation for production workloads.
    var = jnp.maximum(ch_sq / m - mean * mean, 0.0)
    inv_std = lax.rsqrt(var + eps)
    scale = (gamma * inv_std).reshape(c_out, 1).astype(jnp.float32)
    shift = (beta - mean * gamma * inv_std).reshape(c_out, 1).astype(jnp.float32)

    # --- kernel 2: lane-dense BN apply on the channel-first intermediate -------
    y2 = pl.pallas_call(
        _bn_apply_kernel,
        out_shape=jax.ShapeDtypeStruct((n, c_out, m_rows), jnp.float32),
        grid_spec=pltpu.PrefetchScalarGridSpec(
            num_scalar_prefetch=0,
            grid=(n,),
            in_specs=[
                pl.BlockSpec((1, c_out, m_rows), lambda i: (i, 0, 0)),
                pl.BlockSpec((c_out, 1), lambda i: (0, 0)),
                pl.BlockSpec((c_out, 1), lambda i: (0, 0)),
            ],
            out_specs=pl.BlockSpec((1, c_out, m_rows), lambda i: (i, 0, 0)),
        ),
        compiler_params=pltpu.CompilerParams(
            dimension_semantics=("parallel",),
            vmem_limit_bytes=64 * 1024 * 1024),
    )(conv_out, scale, shift)

    # ---- drop padded borders; output is already channel-first (no transpose) --
    # TODO(synk): fold this small strided border slice into kernel 2's output
    # (needs per-row lane extraction in-kernel); it is a single tiny XLA copy here.
    y = y2.reshape(n, c_out, d, hp, wp)[:, :, :, :h, 1:1 + w]
    return y


# ------------------------------- reference --------------------------------- #

def conv_bn_3d_ref(x, conv_w, gamma, beta, eps=1e-5):
    out = lax.conv_general_dilated(
        x.astype(jnp.float32), conv_w.astype(jnp.float32),
        window_strides=(1, 1, 1), padding=((1, 1), (1, 1), (1, 1)),
        dimension_numbers=("NCDHW", "OIDHW", "NCDHW"))
    mean = jnp.mean(out, axis=(0, 2, 3, 4), keepdims=True)
    var = jnp.mean((out - mean) ** 2, axis=(0, 2, 3, 4), keepdims=True)
    g = gamma.reshape(1, -1, 1, 1, 1)
    b = beta.reshape(1, -1, 1, 1, 1)
    return (out - mean) * lax.rsqrt(var + eps) * g + b


# --------------------------------- main ------------------------------------ #

if __name__ == "__main__":
    key = jax.random.PRNGKey(0)
    k_x, k_w, k_g, k_b = jax.random.split(key, 4)

    N, C_IN, C_OUT, D, H, W = 2, 4, 8, 8, 8, 8

    x = jax.random.normal(k_x, (N, C_IN, D, H, W), dtype=jnp.float32)
    # Conv3d has no bias; BN affine params drawn deterministically.
    conv_w = jax.random.normal(k_w, (C_OUT, C_IN, 3, 3, 3), dtype=jnp.float32) * 0.1
    gamma = 1.0 + 0.1 * jax.random.normal(k_g, (C_OUT,), dtype=jnp.float32)
    beta = 0.1 * jax.random.normal(k_b, (C_OUT,), dtype=jnp.float32)

    out = jax.block_until_ready(conv_bn_3d(x, conv_w, gamma, beta))

    # Reference at matched (bf16-rounded) conv precision, accumulated in f32.
    xr = x.astype(jnp.bfloat16).astype(jnp.float32)
    wr = conv_w.astype(jnp.bfloat16).astype(jnp.float32)
    ref = jax.block_until_ready(conv_bn_3d_ref(xr, wr, gamma, beta))

    assert out.shape == (N, C_OUT, D, H, W)
    assert jnp.allclose(out, ref, atol=1e-2, rtol=1e-2), "mismatch vs reference"

    print("KERNEL_OK")
</pallas_src>

<mosaic_0001>
module attributes {stable_mosaic.version = 11 : i64} {
  func.func @_conv_stats_kernel(%arg0: i32, %arg1: memref<1x4x1024xbf16, #tpu.memory_space<vmem>>, %arg2: memref<8x108xbf16, #tpu.memory_space<vmem>>, %arg3: memref<1x8x800xbf16, #tpu.memory_space<vmem>>, %arg4: memref<1x8x1xf32, #tpu.memory_space<vmem>>, %arg5: memref<1x8x1xf32, #tpu.memory_space<vmem>>) attributes {dimension_semantics = [#tpu.dimension_semantics<parallel>], iteration_bounds = array<i64: 2>, scalar_prefetch = 0 : i64, scratch_operands = 0 : i64, tpu.core_type = #tpu.core_type<tc>, window_params = [{transform_indices = @transform_0, window_bounds = array<i64: 1, 4, 1024>}, {pipeline_mode = #tpu.pipeline_mode<synchronous>, transform_indices = @transform_1, window_bounds = array<i64: 8, 108>}, {transform_indices = @transform_2, window_bounds = array<i64: 1, 8, 800>}, {transform_indices = @transform_3, window_bounds = array<i64: 1, 8, 1>}, {transform_indices = @transform_4, window_bounds = array<i64: 1, 8, 1>}]} {
    %c0 = arith.constant 0 : index
    %c0_0 = arith.constant 0 : index
    %c0_1 = arith.constant 0 : index
    %0 = vector.load %arg1[%c0, %c0_0, %c0_1] : memref<1x4x1024xbf16, #tpu.memory_space<vmem>>, vector<1x4x1024xbf16>
    %1 = vector.shape_cast %0 : vector<1x4x1024xbf16> to vector<4x1024xbf16>
    %c0_2 = arith.constant 0 : index
    %c0_3 = arith.constant 0 : index
    %2 = vector.load %arg2[%c0_2, %c0_3] : memref<8x108xbf16, #tpu.memory_space<vmem>>, vector<8x108xbf16>
    %cst = arith.constant 0.000000e+00 : f32
    %3 = vector.broadcast %cst : f32 to vector<8x800xf32>
    %4 = vector.extract_strided_slice %1 {offsets = [0, 0], sizes = [4, 800], strides = [1, 1]} : vector<4x1024xbf16> to vector<4x800xbf16>
    %5 = vector.extract_strided_slice %2 {offsets = [0, 0], sizes = [8, 4], strides = [1, 1]} : vector<8x108xbf16> to vector<8x4xbf16>
    %cst_4 = arith.constant dense<0.000000e+00> : vector<8x800xf32>
    %6 = tpu.matmul %5, %4, %cst_4 {dimension_numbers = #tpu.dot_dimension_numbers<[1], [0], [0], [1], [0, 0, 1, 1], [], []>} : vector<8x4xbf16>, vector<4x800xbf16>, vector<8x800xf32> -> vector<8x800xf32>
    %7 = arith.addf %3, %6 : vector<8x800xf32>
    %8 = vector.extract_strided_slice %1 {offsets = [0, 1], sizes = [4, 800], strides = [1, 1]} : vector<4x1024xbf16> to vector<4x800xbf16>
    %9 = vector.extract_strided_slice %2 {offsets = [0, 4], sizes = [8, 4], strides = [1, 1]} : vector<8x108xbf16> to vector<8x4xbf16>
    %cst_5 = arith.constant dense<0.000000e+00> : vector<8x800xf32>
    %10 = tpu.matmul %9, %8, %cst_5 {dimension_numbers = #tpu.dot_dimension_numbers<[1], [0], [0], [1], [0, 0, 1, 1], [], []>} : vector<8x4xbf16>, vector<4x800xbf16>, vector<8x800xf32> -> vector<8x800xf32>
    %11 = arith.addf %7, %10 : vector<8x800xf32>
    %12 = vector.extract_strided_slice %1 {offsets = [0, 2], sizes = [4, 800], strides = [1, 1]} : vector<4x1024xbf16> to vector<4x800xbf16>
    %13 = vector.extract_strided_slice %2 {offsets = [0, 8], sizes = [8, 4], strides = [1, 1]} : vector<8x108xbf16> to vector<8x4xbf16>
    %cst_6 = arith.constant dense<0.000000e+00> : vector<8x800xf32>
    %14 = tpu.matmul %13, %12, %cst_6 {dimension_numbers = #tpu.dot_dimension_numbers<[1], [0], [0], [1], [0, 0, 1, 1], [], []>} : vector<8x4xbf16>, vector<4x800xbf16>, vector<8x800xf32> -> vector<8x800xf32>
    %15 = arith.addf %11, %14 : vector<8x800xf32>
    %16 = vector.extract_strided_slice %1 {offsets = [0, 10], sizes = [4, 800], strides = [1, 1]} : vector<4x1024xbf16> to vector<4x800xbf16>
    %17 = vector.extract_strided_slice %2 {offsets = [0, 12], sizes = [8, 4], strides = [1, 1]} : vector<8x108xbf16> to vector<8x4xbf16>
    %cst_7 = arith.constant dense<0.000000e+00> : vector<8x800xf32>
    %18 = tpu.matmul %17, %16, %cst_7 {dimension_numbers = #tpu.dot_dimension_numbers<[1], [0], [0], [1], [0, 0, 1, 1], [], []>} : vector<8x4xbf16>, vector<4x800xbf16>, vector<8x800xf32> -> vector<8x800xf32>
    %19 = arith.addf %15, %18 : vector<8x800xf32>
    %20 = vector.extract_strided_slice %1 {offsets = [0, 11], sizes = [4, 800], strides = [1, 1]} : vector<4x1024xbf16> to vector<4x800xbf16>
    %21 = vector.extract_strided_slice %2 {offsets = [0, 16], sizes = [8, 4], strides = [1, 1]} : vector<8x108xbf16> to vector<8x4xbf16>
    %cst_8 = arith.constant dense<0.000000e+00> : vector<8x800xf32>
    %22 = tpu.matmul %21, %20, %cst_8 {dimension_numbers = #tpu.dot_dimension_numbers<[1], [0], [0], [1], [0, 0, 1, 1], [], []>} : vector<8x4xbf16>, vector<4x800xbf16>, vector<8x800xf32> -> vector<8x800xf32>
    %23 = arith.addf %19, %22 : vector<8x800xf32>
    %24 = vector.extract_strided_slice %1 {offsets = [0, 12], sizes = [4, 800], strides = [1, 1]} : vector<4x1024xbf16> to vector<4x800xbf16>
    %25 = vector.extract_strided_slice %2 {offsets = [0, 20], sizes = [8, 4], strides = [1, 1]} : vector<8x108xbf16> to vector<8x4xbf16>
    %cst_9 = arith.constant dense<0.000000e+00> : vector<8x800xf32>
    %26 = tpu.matmul %25, %24, %cst_9 {dimension_numbers = #tpu.dot_dimension_numbers<[1], [0], [0], [1], [0, 0, 1, 1], [], []>} : vector<8x4xbf16>, vector<4x800xbf16>, vector<8x800xf32> -> vector<8x800xf32>
    %27 = arith.addf %23, %26 : vector<8x800xf32>
    %28 = vector.extract_strided_slice %1 {offsets = [0, 20], sizes = [4, 800], strides = [1, 1]} : vector<4x1024xbf16> to vector<4x800xbf16>
    %29 = vector.extract_strided_slice %2 {offsets = [0, 24], sizes = [8, 4], strides = [1, 1]} : vector<8x108xbf16> to vector<8x4xbf16>
    %cst_10 = arith.constant dense<0.000000e+00> : vector<8x800xf32>
    %30 = tpu.matmul %29, %28, %cst_10 {dimension_numbers = #tpu.dot_dimension_numbers<[1], [0], [0], [1], [0, 0, 1, 1], [], []>} : vector<8x4xbf16>, vector<4x800xbf16>, vector<8x800xf32> -> vector<8x800xf32>
    %31 = arith.addf %27, %30 : vector<8x800xf32>
    %32 = vector.extract_strided_slice %1 {offsets = [0, 21], sizes = [4, 800], strides = [1, 1]} : vector<4x1024xbf16> to vector<4x800xbf16>
    %33 = vector.extract_strided_slice %2 {offsets = [0, 28], sizes = [8, 4], strides = [1, 1]} : vector<8x108xbf16> to vector<8x4xbf16>
    %cst_11 = arith.constant dense<0.000000e+00> : vector<8x800xf32>
    %34 = tpu.matmul %33, %32, %cst_11 {dimension_numbers = #tpu.dot_dimension_numbers<[1], [0], [0], [1], [0, 0, 1, 1], [], []>} : vector<8x4xbf16>, vector<4x800xbf16>, vector<8x800xf32> -> vector<8x800xf32>
    %35 = arith.addf %31, %34 : vector<8x800xf32>
    %36 = vector.extract_strided_slice %1 {offsets = [0, 22], sizes = [4, 800], strides = [1, 1]} : vector<4x1024xbf16> to vector<4x800xbf16>
    %37 = vector.extract_strided_slice %2 {offsets = [0, 32], sizes = [8, 4], strides = [1, 1]} : vector<8x108xbf16> to vector<8x4xbf16>
    %cst_12 = arith.constant dense<0.000000e+00> : vector<8x800xf32>
    %38 = tpu.matmul %37, %36, %cst_12 {dimension_numbers = #tpu.dot_dimension_numbers<[1], [0], [0], [1], [0, 0, 1, 1], [], []>} : vector<8x4xbf16>, vector<4x800xbf16>, vector<8x800xf32> -> vector<8x800xf32>
    %39 = arith.addf %35, %38 : vector<8x800xf32>
    %40 = vector.extract_strided_slice %1 {offsets = [0, 100], sizes = [4, 800], strides = [1, 1]} : vector<4x1024xbf16> to vector<4x800xbf16>
    %41 = vector.extract_strided_slice %2 {offsets = [0, 36], sizes = [8, 4], strides = [1, 1]} : vector<8x108xbf16> to vector<8x4xbf16>
    %cst_13 = arith.constant dense<0.000000e+00> : vector<8x800xf32>
    %42 = tpu.matmul %41, %40, %cst_13 {dimension_numbers = #tpu.dot_dimension_numbers<[1], [0], [0], [1], [0, 0, 1, 1], [], []>} : vector<8x4xbf16>, vector<4x800xbf16>, vector<8x800xf32> -> vector<8x800xf32>
    %43 = arith.addf %39, %42 : vector<8x800xf32>
    %44 = vector.extract_strided_slice %1 {offsets = [0, 101], sizes = [4, 800], strides = [1, 1]} : vector<4x1024xbf16> to vector<4x800xbf16>
    %45 = vector.extract_strided_slice %2 {offsets = [0, 40], sizes = [8, 4], strides = [1, 1]} : vector<8x108xbf16> to vector<8x4xbf16>
    %cst_14 = arith.constant dense<0.000000e+00> : vector<8x800xf32>
    %46 = tpu.matmul %45, %44, %cst_14 {dimension_numbers = #tpu.dot_dimension_numbers<[1], [0], [0], [1], [0, 0, 1, 1], [], []>} : vector<8x4xbf16>, vector<4x800xbf16>, vector<8x800xf32> -> vector<8x800xf32>
    %47 = arith.addf %43, %46 : vector<8x800xf32>
    %48 = vector.extract_strided_slice %1 {offsets = [0, 102], sizes = [4, 800], strides = [1, 1]} : vector<4x1024xbf16> to vector<4x800xbf16>
    %49 = vector.extract_strided_slice %2 {offsets = [0, 44], sizes = [8, 4], strides = [1, 1]} : vector<8x108xbf16> to vector<8x4xbf16>
    %cst_15 = arith.constant dense<0.000000e+00> : vector<8x800xf32>
    %50 = tpu.matmul %49, %48, %cst_15 {dimension_numbers = #tpu.dot_dimension_numbers<[1], [0], [0], [1], [0, 0, 1, 1], [], []>} : vector<8x4xbf16>, vector<4x800xbf16>, vector<8x800xf32> -> vector<8x800xf32>
    %51 = arith.addf %47, %50 : vector<8x800xf32>
    %52 = vector.extract_strided_slice %1 {offsets = [0, 110], sizes = [4, 800], strides = [1, 1]} : vector<4x1024xbf16> to vector<4x800xbf16>
    %53 = vector.extract_strided_slice %2 {offsets = [0, 48], sizes = [8, 4], strides = [1, 1]} : vector<8x108xbf16> to vector<8x4xbf16>
    %cst_16 = arith.constant dense<0.000000e+00> : vector<8x800xf32>
    %54 = tpu.matmul %53, %52, %cst_16 {dimension_numbers = #tpu.dot_dimension_numbers<[1], [0], [0], [1], [0, 0, 1, 1], [], []>} : vector<8x4xbf16>, vector<4x800xbf16>, vector<8x800xf32> -> vector<8x800xf32>
    %55 = arith.addf %51, %54 : vector<8x800xf32>
    %56 = vector.extract_strided_slice %1 {offsets = [0, 111], sizes = [4, 800], strides = [1, 1]} : vector<4x1024xbf16> to vector<4x800xbf16>
    %57 = vector.extract_strided_slice %2 {offsets = [0, 52], sizes = [8, 4], strides = [1, 1]} : vector<8x108xbf16> to vector<8x4xbf16>
    %cst_17 = arith.constant dense<0.000000e+00> : vector<8x800xf32>
    %58 = tpu.matmul %57, %56, %cst_17 {dimension_numbers = #tpu.dot_dimension_numbers<[1], [0], [0], [1], [0, 0, 1, 1], [], []>} : vector<8x4xbf16>, vector<4x800xbf16>, vector<8x800xf32> -> vector<8x800xf32>
    %59 = arith.addf %55, %58 : vector<8x800xf32>
    %60 = vector.extract_strided_slice %1 {offsets = [0, 112], sizes = [4, 800], strides = [1, 1]} : vector<4x1024xbf16> to vector<4x800xbf16>
    %61 = vector.extract_strided_slice %2 {offsets = [0, 56], sizes = [8, 4], strides = [1, 1]} : vector<8x108xbf16> to vector<8x4xbf16>
    %cst_18 = arith.constant dense<0.000000e+00> : vector<8x800xf32>
    %62 = tpu.matmul %61, %60, %cst_18 {dimension_numbers = #tpu.dot_dimension_numbers<[1], [0], [0], [1], [0, 0, 1, 1], [], []>} : vector<8x4xbf16>, vector<4x800xbf16>, vector<8x800xf32> -> vector<8x800xf32>
    %63 = arith.addf %59, %62 : vector<8x800xf32>
    %64 = vector.extract_strided_slice %1 {offsets = [0, 120], sizes = [4, 800], strides = [1, 1]} : vector<4x1024xbf16> to vector<4x800xbf16>
    %65 = vector.extract_strided_slice %2 {offsets = [0, 60], sizes = [8, 4], strides = [1, 1]} : vector<8x108xbf16> to vector<8x4xbf16>
    %cst_19 = arith.constant dense<0.000000e+00> : vector<8x800xf32>
    %66 = tpu.matmul %65, %64, %cst_19 {dimension_numbers = #tpu.dot_dimension_numbers<[1], [0], [0], [1], [0, 0, 1, 1], [], []>} : vector<8x4xbf16>, vector<4x800xbf16>, vector<8x800xf32> -> vector<8x800xf32>
    %67 = arith.addf %63, %66 : vector<8x800xf32>
    %68 = vector.extract_strided_slice %1 {offsets = [0, 121], sizes = [4, 800], strides = [1, 1]} : vector<4x1024xbf16> to vector<4x800xbf16>
    %69 = vector.extract_strided_slice %2 {offsets = [0, 64], sizes = [8, 4], strides = [1, 1]} : vector<8x108xbf16> to vector<8x4xbf16>
    %cst_20 = arith.constant dense<0.000000e+00> : vector<8x800xf32>
    %70 = tpu.matmul %69, %68, %cst_20 {dimension_numbers = #tpu.dot_dimension_numbers<[1], [0], [0], [1], [0, 0, 1, 1], [], []>} : vector<8x4xbf16>, vector<4x800xbf16>, vector<8x800xf32> -> vector<8x800xf32>
    %71 = arith.addf %67, %70 : vector<8x800xf32>
    %72 = vector.extract_strided_slice %1 {offsets = [0, 122], sizes = [4, 800], strides = [1, 1]} : vector<4x1024xbf16> to vector<4x800xbf16>
    %73 = vector.extract_strided_slice %2 {offsets = [0, 68], sizes = [8, 4], strides = [1, 1]} : vector<8x108xbf16> to vector<8x4xbf16>
    %cst_21 = arith.constant dense<0.000000e+00> : vector<8x800xf32>
    %74 = tpu.matmul %73, %72, %cst_21 {dimension_numbers = #tpu.dot_dimension_numbers<[1], [0], [0], [1], [0, 0, 1, 1], [], []>} : vector<8x4xbf16>, vector<4x800xbf16>, vector<8x800xf32> -> vector<8x800xf32>
    %75 = arith.addf %71, %74 : vector<8x800xf32>
    %76 = vector.extract_strided_slice %1 {offsets = [0, 200], sizes = [4, 800], strides = [1, 1]} : vector<4x1024xbf16> to vector<4x800xbf16>
    %77 = vector.extract_strided_slice %2 {offsets = [0, 72], sizes = [8, 4], strides = [1, 1]} : vector<8x108xbf16> to vector<8x4xbf16>
    %cst_22 = arith.constant dense<0.000000e+00> : vector<8x800xf32>
    %78 = tpu.matmul %77, %76, %cst_22 {dimension_numbers = #tpu.dot_dimension_numbers<[1], [0], [0], [1], [0, 0, 1, 1], [], []>} : vector<8x4xbf16>, vector<4x800xbf16>, vector<8x800xf32> -> vector<8x800xf32>
    %79 = arith.addf %75, %78 : vector<8x800xf32>
    %80 = vector.extract_strided_slice %1 {offsets = [0, 201], sizes = [4, 800], strides = [1, 1]} : vector<4x1024xbf16> to vector<4x800xbf16>
    %81 = vector.extract_strided_slice %2 {offsets = [0, 76], sizes = [8, 4], strides = [1, 1]} : vector<8x108xbf16> to vector<8x4xbf16>
    %cst_23 = arith.constant dense<0.000000e+00> : vector<8x800xf32>
    %82 = tpu.matmul %81, %80, %cst_23 {dimension_numbers = #tpu.dot_dimension_numbers<[1], [0], [0], [1], [0, 0, 1, 1], [], []>} : vector<8x4xbf16>, vector<4x800xbf16>, vector<8x800xf32> -> vector<8x800xf32>
    %83 = arith.addf %79, %82 : vector<8x800xf32>
    %84 = vector.extract_strided_slice %1 {offsets = [0, 202], sizes = [4, 800], strides = [1, 1]} : vector<4x1024xbf16> to vector<4x800xbf16>
    %85 = vector.extract_strided_slice %2 {offsets = [0, 80], sizes = [8, 4], strides = [1, 1]} : vector<8x108xbf16> to vector<8x4xbf16>
    %cst_24 = arith.constant dense<0.000000e+00> : vector<8x800xf32>
    %86 = tpu.matmul %85, %84, %cst_24 {dimension_numbers = #tpu.dot_dimension_numbers<[1], [0], [0], [1], [0, 0, 1, 1], [], []>} : vector<8x4xbf16>, vector<4x800xbf16>, vector<8x800xf32> -> vector<8x800xf32>
    %87 = arith.addf %83, %86 : vector<8x800xf32>
    %88 = vector.extract_strided_slice %1 {offsets = [0, 210], sizes = [4, 800], strides = [1, 1]} : vector<4x1024xbf16> to vector<4x800xbf16>
    %89 = vector.extract_strided_slice %2 {offsets = [0, 84], sizes = [8, 4], strides = [1, 1]} : vector<8x108xbf16> to vector<8x4xbf16>
    %cst_25 = arith.constant dense<0.000000e+00> : vector<8x800xf32>
    %90 = tpu.matmul %89, %88, %cst_25 {dimension_numbers = #tpu.dot_dimension_numbers<[1], [0], [0], [1], [0, 0, 1, 1], [], []>} : vector<8x4xbf16>, vector<4x800xbf16>, vector<8x800xf32> -> vector<8x800xf32>
    %91 = arith.addf %87, %90 : vector<8x800xf32>
    %92 = vector.extract_strided_slice %1 {offsets = [0, 211], sizes = [4, 800], strides = [1, 1]} : vector<4x1024xbf16> to vector<4x800xbf16>
    %93 = vector.extract_strided_slice %2 {offsets = [0, 88], sizes = [8, 4], strides = [1, 1]} : vector<8x108xbf16> to vector<8x4xbf16>
    %cst_26 = arith.constant dense<0.000000e+00> : vector<8x800xf32>
    %94 = tpu.matmul %93, %92, %cst_26 {dimension_numbers = #tpu.dot_dimension_numbers<[1], [0], [0], [1], [0, 0, 1, 1], [], []>} : vector<8x4xbf16>, vector<4x800xbf16>, vector<8x800xf32> -> vector<8x800xf32>
    %95 = arith.addf %91, %94 : vector<8x800xf32>
    %96 = vector.extract_strided_slice %1 {offsets = [0, 212], sizes = [4, 800], strides = [1, 1]} : vector<4x1024xbf16> to vector<4x800xbf16>
    %97 = vector.extract_strided_slice %2 {offsets = [0, 92], sizes = [8, 4], strides = [1, 1]} : vector<8x108xbf16> to vector<8x4xbf16>
    %cst_27 = arith.constant dense<0.000000e+00> : vector<8x800xf32>
    %98 = tpu.matmul %97, %96, %cst_27 {dimension_numbers = #tpu.dot_dimension_numbers<[1], [0], [0], [1], [0, 0, 1, 1], [], []>} : vector<8x4xbf16>, vector<4x800xbf16>, vector<8x800xf32> -> vector<8x800xf32>
    %99 = arith.addf %95, %98 : vector<8x800xf32>
    %100 = vector.extract_strided_slice %1 {offsets = [0, 220], sizes = [4, 800], strides = [1, 1]} : vector<4x1024xbf16> to vector<4x800xbf16>
    %101 = vector.extract_strided_slice %2 {offsets = [0, 96], sizes = [8, 4], strides = [1, 1]} : vector<8x108xbf16> to vector<8x4xbf16>
    %cst_28 = arith.constant dense<0.000000e+00> : vector<8x800xf32>
    %102 = tpu.matmul %101, %100, %cst_28 {dimension_numbers = #tpu.dot_dimension_numbers<[1], [0], [0], [1], [0, 0, 1, 1], [], []>} : vector<8x4xbf16>, vector<4x800xbf16>, vector<8x800xf32> -> vector<8x800xf32>
    %103 = arith.addf %99, %102 : vector<8x800xf32>
    %104 = vector.extract_strided_slice %1 {offsets = [0, 221], sizes = [4, 800], strides = [1, 1]} : vector<4x1024xbf16> to vector<4x800xbf16>
    %105 = vector.extract_strided_slice %2 {offsets = [0, 100], sizes = [8, 4], strides = [1, 1]} : vector<8x108xbf16> to vector<8x4xbf16>
    %cst_29 = arith.constant dense<0.000000e+00> : vector<8x800xf32>
    %106 = tpu.matmul %105, %104, %cst_29 {dimension_numbers = #tpu.dot_dimension_numbers<[1], [0], [0], [1], [0, 0, 1, 1], [], []>} : vector<8x4xbf16>, vector<4x800xbf16>, vector<8x800xf32> -> vector<8x800xf32>
    %107 = arith.addf %103, %106 : vector<8x800xf32>
    %108 = vector.extract_strided_slice %1 {offsets = [0, 222], sizes = [4, 800], strides = [1, 1]} : vector<4x1024xbf16> to vector<4x800xbf16>
    %109 = vector.extract_strided_slice %2 {offsets = [0, 104], sizes = [8, 4], strides = [1, 1]} : vector<8x108xbf16> to vector<8x4xbf16>
    %cst_30 = arith.constant dense<0.000000e+00> : vector<8x800xf32>
    %110 = tpu.matmul %109, %108, %cst_30 {dimension_numbers = #tpu.dot_dimension_numbers<[1], [0], [0], [1], [0, 0, 1, 1], [], []>} : vector<8x4xbf16>, vector<4x800xbf16>, vector<8x800xf32> -> vector<8x800xf32>
    %111 = arith.addf %107, %110 : vector<8x800xf32>
    %112 = tpu.iota {dimensions = array<i32: 1>} : vector<1x800xi32>
    %113 = arith.sitofp %112 : vector<1x800xi32> to vector<1x800xf32>
    %cst_31 = arith.constant 5.000000e-01 : f32
    %114 = vector.broadcast %cst_31 : f32 to vector<1x800xf32>
    %115 = arith.addf %113, %114 : vector<1x800xf32>
    %cst_32 = arith.constant 1.000000e+02 : f32
    %116 = vector.broadcast %cst_32 : f32 to vector<1x800xf32>
    %117 = arith.divf %115, %116 : vector<1x800xf32>
    %118 = math.floor %117 : vector<1x800xf32>
    %cst_33 = arith.constant 1.000000e+02 : f32
    %119 = vector.broadcast %cst_33 : f32 to vector<1x800xf32>
    %120 = arith.mulf %118, %119 : vector<1x800xf32>
    %121 = arith.subf %113, %120 : vector<1x800xf32>
    %cst_34 = arith.constant 5.000000e-01 : f32
    %122 = vector.broadcast %cst_34 : f32 to vector<1x800xf32>
    %123 = arith.addf %121, %122 : vector<1x800xf32>
    %cst_35 = arith.constant 1.000000e+01 : f32
    %124 = vector.broadcast %cst_35 : f32 to vector<1x800xf32>
    %125 = arith.divf %123, %124 : vector<1x800xf32>
    %126 = math.floor %125 : vector<1x800xf32>
    %cst_36 = arith.constant 1.000000e+01 : f32
    %127 = vector.broadcast %cst_36 : f32 to vector<1x800xf32>
    %128 = arith.mulf %126, %127 : vector<1x800xf32>
    %129 = arith.subf %121, %128 : vector<1x800xf32>
    %cst_37 = arith.constant 8.000000e+00 : f32
    %130 = vector.broadcast %cst_37 : f32 to vector<1x800xf32>
    %131 = arith.cmpf olt, %126, %130 : vector<1x800xf32>
    %cst_38 = arith.constant 1.000000e+00 : f32
    %132 = vector.broadcast %cst_38 : f32 to vector<1x800xf32>
    %133 = arith.cmpf oge, %129, %132 : vector<1x800xf32>
    %134 = arith.andi %131, %133 : vector<1x800xi1>
    %cst_39 = arith.constant 8.000000e+00 : f32
    %135 = vector.broadcast %cst_39 : f32 to vector<1x800xf32>
    %136 = arith.cmpf ole, %129, %135 : vector<1x800xf32>
    %137 = arith.andi %134, %136 : vector<1x800xi1>
    %cst_40 = arith.constant 1.000000e+00 : f32
    %cst_41 = arith.constant 0.000000e+00 : f32
    %138 = vector.broadcast %cst_40 : f32 to vector<1x800xf32>
    %139 = vector.broadcast %cst_41 : f32 to vector<1x800xf32>
    %140 = arith.select %137, %138, %139 : vector<1x800xi1>, vector<1x800xf32>
    %141 = vector.broadcast %140 : vector<1x800xf32> to vector<8x800xf32>
    %142 = arith.mulf %111, %141 : vector<8x800xf32>
    %143 = arith.truncf %111 : vector<8x800xf32> to vector<8x800xbf16>
    %c0_42 = arith.constant 0 : index
    %c0_43 = arith.constant 0 : index
    %c0_44 = arith.constant 0 : index
    %144 = vector.load %arg3[%c0_42, %c0_43, %c0_44] : memref<1x8x800xbf16, #tpu.memory_space<vmem>>, vector<1x8x800xbf16>
    %145 = vector.shape_cast %144 : vector<1x8x800xbf16> to vector<8x800xbf16>
    %146 = vector.shape_cast %143 : vector<8x800xbf16> to vector<1x8x800xbf16>
    tpu.vector_store %arg3[%c0_42, %c0_43, %c0_44], %146 {strides = array<i32>} : memref<1x8x800xbf16, #tpu.memory_space<vmem>>, vector<1x8x800xbf16>,
    %cst_45 = arith.constant dense<0.000000e+00> : vector<8xf32>
    %147 = vector.multi_reduction <add>, %142, %cst_45 [1] : vector<8x800xf32> to vector<8xf32>
    %148 = vector.shape_cast %147 : vector<8xf32> to vector<8x1xf32>
    %c0_46 = arith.constant 0 : index
    %c0_47 = arith.constant 0 : index
    %c0_48 = arith.constant 0 : index
    %149 = vector.load %arg4[%c0_46, %c0_47, %c0_48] : memref<1x8x1xf32, #tpu.memory_space<vmem>>, vector<1x8x1xf32>
    %150 = vector.shape_cast %149 : vector<1x8x1xf32> to vector<8x1xf32>
    %151 = vector.shape_cast %148 : vector<8x1xf32> to vector<1x8x1xf32>
    tpu.vector_store %arg4[%c0_46, %c0_47, %c0_48], %151 {strides = array<i32>} : memref<1x8x1xf32, #tpu.memory_space<vmem>>, vector<1x8x1xf32>,
    %152 = arith.mulf %142, %142 : vector<8x800xf32>
    %cst_49 = arith.constant dense<0.000000e+00> : vector<8xf32>
    %153 = vector.multi_reduction <add>, %152, %cst_49 [1] : vector<8x800xf32> to vector<8xf32>
    %154 = vector.shape_cast %153 : vector<8xf32> to vector<8x1xf32>
    %c0_50 = arith.constant 0 : index
    %c0_51 = arith.constant 0 : index
    %c0_52 = arith.constant 0 : index
    %155 = vector.load %arg5[%c0_50, %c0_51, %c0_52] : memref<1x8x1xf32, #tpu.memory_space<vmem>>, vector<1x8x1xf32>
    %156 = vector.shape_cast %155 : vector<1x8x1xf32> to vector<8x1xf32>
    %157 = vector.shape_cast %154 : vector<8x1xf32> to vector<1x8x1xf32>
    tpu.vector_store %arg5[%c0_50, %c0_51, %c0_52], %157 {strides = array<i32>} : memref<1x8x1xf32, #tpu.memory_space<vmem>>, vector<1x8x1xf32>,
    return
  }
  func.func @transform_0(%arg0: i32) -> (i32, i32, i32) {
    %c0_i32 = arith.constant 0 : i32
    %c0_i32_0 = arith.constant 0 : i32
    %c0_i32_1 = arith.constant 0 : i32
    return %arg0, %c0_i32, %c0_i32_0 : i32, i32, i32
  }
  func.func @transform_1(%arg0: i32) -> (i32, i32) {
    %c0_i32 = arith.constant 0 : i32
    %c0_i32_0 = arith.constant 0 : i32
    %c0_i32_1 = arith.constant 0 : i32
    return %c0_i32, %c0_i32_0 : i32, i32
  }
  func.func @transform_2(%arg0: i32) -> (i32, i32, i32) {
    %c0_i32 = arith.constant 0 : i32
    %c0_i32_0 = arith.constant 0 : i32
    %c0_i32_1 = arith.constant 0 : i32
    return %arg0, %c0_i32, %c0_i32_0 : i32, i32, i32
  }
  func.func @transform_3(%arg0: i32) -> (i32, i32, i32) {
    %c0_i32 = arith.constant 0 : i32
    %c0_i32_0 = arith.constant 0 : i32
    %c0_i32_1 = arith.constant 0 : i32
    return %arg0, %c0_i32, %c0_i32_0 : i32, i32, i32
  }
  func.func @transform_4(%arg0: i32) -> (i32, i32, i32) {
    %c0_i32 = arith.constant 0 : i32
    %c0_i32_0 = arith.constant 0 : i32
    %c0_i32_1 = arith.constant 0 : i32
    return %arg0, %c0_i32, %c0_i32_0 : i32, i32, i32
  }
}

module attributes {stable_mosaic.version = 11 : i64} {
  func.func @_bn_apply_kernel(%arg0: i32, %arg1: memref<1x8x800xbf16, #tpu.memory_space<vmem>>, %arg2: memref<8x1xf32, #tpu.memory_space<vmem>>, %arg3: memref<8x1xf32, #tpu.memory_space<vmem>>, %arg4: memref<1x8x800xf32, #tpu.memory_space<vmem>>) attributes {dimension_semantics = [#tpu.dimension_semantics<parallel>], iteration_bounds = array<i64: 2>, scalar_prefetch = 0 : i64, scratch_operands = 0 : i64, tpu.core_type = #tpu.core_type<tc>, window_params = [{transform_indices = @transform_0, window_bounds = array<i64: 1, 8, 800>}, {pipeline_mode = #tpu.pipeline_mode<synchronous>, transform_indices = @transform_1, window_bounds = array<i64: 8, 1>}, {pipeline_mode = #tpu.pipeline_mode<synchronous>, transform_indices = @transform_2, window_bounds = array<i64: 8, 1>}, {transform_indices = @transform_3, window_bounds = array<i64: 1, 8, 800>}]} {
    %c0 = arith.constant 0 : index
    %c0_0 = arith.constant 0 : index
    %c0_1 = arith.constant 0 : index
    %0 = vector.load %arg1[%c0, %c0_0, %c0_1] : memref<1x8x800xbf16, #tpu.memory_space<vmem>>, vector<1x8x800xbf16>
    %1 = vector.shape_cast %0 : vector<1x8x800xbf16> to vector<8x800xbf16>
    %2 = arith.extf %1 : vector<8x800xbf16> to vector<8x800xf32>
    %c0_2 = arith.constant 0 : index
    %c0_3 = arith.constant 0 : index
    %3 = vector.load %arg2[%c0_2, %c0_3] : memref<8x1xf32, #tpu.memory_space<vmem>>, vector<8x1xf32>
    %4 = vector.broadcast %3 : vector<8x1xf32> to vector<8x800xf32>
    %5 = arith.mulf %2, %4 : vector<8x800xf32>
    %c0_4 = arith.constant 0 : index
    %c0_5 = arith.constant 0 : index
    %6 = vector.load %arg3[%c0_4, %c0_5] : memref<8x1xf32, #tpu.memory_space<vmem>>, vector<8x1xf32>
    %7 = vector.broadcast %6 : vector<8x1xf32> to vector<8x800xf32>
    %8 = arith.addf %5, %7 : vector<8x800xf32>
    %c0_6 = arith.constant 0 : index
    %c0_7 = arith.constant 0 : index
    %c0_8 = arith.constant 0 : index
    %9 = vector.load %arg4[%c0_6, %c0_7, %c0_8] : memref<1x8x800xf32, #tpu.memory_space<vmem>>, vector<1x8x800xf32>
    %10 = vector.shape_cast %9 : vector<1x8x800xf32> to vector<8x800xf32>
    %11 = vector.shape_cast %8 : vector<8x800xf32> to vector<1x8x800xf32>
    tpu.vector_store %arg4[%c0_6, %c0_7, %c0_8], %11 {strides = array<i32>} : memref<1x8x800xf32, #tpu.memory_space<vmem>>, vector<1x8x800xf32>,
    return
  }
  func.func @transform_0(%arg0: i32) -> (i32, i32, i32) {
    %c0_i32 = arith.constant 0 : i32
    %c0_i32_0 = arith.constant 0 : i32
    %c0_i32_1 = arith.constant 0 : i32
    return %arg0, %c0_i32, %c0_i32_0 : i32, i32, i32
  }
  func.func @transform_1(%arg0: i32) -> (i32, i32) {
    %c0_i32 = arith.constant 0 : i32
    %c0_i32_0 = arith.constant 0 : i32
    %c0_i32_1 = arith.constant 0 : i32
    return %c0_i32, %c0_i32_0 : i32, i32
  }
  func.func @transform_2(%arg0: i32) -> (i32, i32) {
    %c0_i32 = arith.constant 0 : i32
    %c0_i32_0 = arith.constant 0 : i32
    %c0_i32_1 = arith.constant 0 : i32
    return %c0_i32, %c0_i32_0 : i32, i32
  }
  func.func @transform_3(%arg0: i32) -> (i32, i32, i32) {
    %c0_i32 = arith.constant 0 : i32
    %c0_i32_0 = arith.constant 0 : i32
    %c0_i32_1 = arith.constant 0 : i32
    return %arg0, %c0_i32, %c0_i32_0 : i32, i32, i32
  }
}

</mosaic_0001>

<llo_original>
// kernel: conv_bn_3d.3
$region0: #{conv_bn_3d.3}
  #allocation0 [shape = 'u32[]', space=smem, size = 0x4, offset = 0x4, fixed_abs, tag = 'smem constant byte address 0x4 - core index']
  #allocation1 [shape = 'u32[72,128]{1,0:T(1,128)}', space=vmem, size = 0x9000, scoped, tag = 'internal scratch']
  %s0 = inlined_call_operand.vmem [shape: bf16[2,8,800], index: 0, kind: input, shape index: {}]
  %s1 = inlined_call_operand.vmem [shape: f32[8,1], index: 1, kind: input, shape index: {}]
  %s2 = inlined_call_operand.vmem [shape: f32[8,1], index: 2, kind: input, shape index: {}]
  %s3 = inlined_call_operand.vmem [shape: f32[2,8,800], index: 3, kind: output, shape index: {}]
  %s4 = sld [smem:[#allocation0]]
  $region45: #{conv_bn_3d.3} parent=0
    _
  %s6 = ssub.s32 1, %s4
  %s7 = scalar_select 0, %s6, %s4
  loop: start=0, step=1, limit=4
  $region2: #{conv_bn_3d.3} parent=0 // loop_pre_header
    _
  $region3: #{conv_bn_3d.3} parent=0 // loop_header
    %s9 = sphi 0, %s13
    %p10 = scmp.ge.s32.totalorder %s9, 4
    %s19 = sphi 0, %s21
    %s22 = sphi 0, %s19
    %s23 = sphi 0, %s22
    %s39 = sphi 0, %s23
    %s43 = sphi 0, %s43
    %s45 = sphi 0, %s43
    %s46 = sphi 0, %s45
    %s60 = sphi 0, %s46
    %s64 = sphi 0, %s64
    %s66 = sphi 0, %s64
    %s67 = sphi 0, %s66
    %s81 = sphi 0, %s67
    %s87 = sphi 0, %s89
    %s90 = sphi 0, %s87
    %s91 = sphi 0, %s90
    %s107 = sphi 0, %s91
  $region4: #{conv_bn_3d.3} parent=0 // loop_header_branch
    %12 = sbr.rel (%p10) target = $region8
  $region5: #{conv_bn_3d.3} parent=0 // loop_body
    %s14 = ssub.s32 %s9, 1
    %s15 = ssub.s32 %s9, 2
    %s16 = sadd.s32 %s9, 1
    %s17 = ssub.s32 %s9, %s16
    %p18 = scmp.eq.s32.totalorder %s17, 0
    %s20 = sadd.s32 %s19, 1
    %s21 = scalar_select %p18, %s19, %s20
    %p24 = pneg %p18
    %p25 = scmp.eq.s32.totalorder %s9, 1
    %p26 = por %p24, %p25
    %p27 = scmp.ne.s32.totalorder %s19, %s22
    %p28 = scmp.eq.s32.totalorder %s9, 0
    %p29 = por %p27, %p28
    %p30 = scmp.ne.s32.totalorder %s19, %s22
    %p31 = scmp.eq.s32.totalorder %s14, 1
    %p32 = por %p30, %p31
    %p33 = scmp.ne.s32.totalorder %s22, %s23
    %p34 = scmp.eq.s32.totalorder %s14, 0
    %p35 = por %p33, %p34
    %p36 = scmp.ne.s32.totalorder %s22, %s23
    %p37 = scmp.eq.s32.totalorder %s15, 1
    %p38 = por %p36, %p37
    %p40 = scmp.ne.s32.totalorder %s23, %s39
    %p41 = scmp.eq.s32.totalorder %s15, 0
    %p42 = por %p40, %p41
    %s44 = sadd.s32 %s43, 1
    %p47 = scmp.eq.s32.totalorder %s9, 1
    %p48 = scmp.ne.s32.totalorder %s43, %s45
    %p49 = scmp.eq.s32.totalorder %s9, 0
    %p50 = por %p48, %p49
    %p51 = scmp.ne.s32.totalorder %s43, %s45
    %p52 = scmp.eq.s32.totalorder %s14, 1
    %p53 = por %p51, %p52
    %p54 = scmp.ne.s32.totalorder %s45, %s46
    %p55 = scmp.eq.s32.totalorder %s14, 0
    %p56 = por %p54, %p55
    %p57 = scmp.ne.s32.totalorder %s45, %s46
    %p58 = scmp.eq.s32.totalorder %s15, 1
    %p59 = por %p57, %p58
    %p61 = scmp.ne.s32.totalorder %s46, %s60
    %p62 = scmp.eq.s32.totalorder %s15, 0
    %p63 = por %p61, %p62
    %s65 = sadd.s32 %s64, 1
    %p68 = scmp.eq.s32.totalorder %s9, 1
    %p69 = scmp.ne.s32.totalorder %s64, %s66
    %p70 = scmp.eq.s32.totalorder %s9, 0
    %p71 = por %p69, %p70
    %p72 = scmp.ne.s32.totalorder %s64, %s66
    %p73 = scmp.eq.s32.totalorder %s14, 1
    %p74 = por %p72, %p73
    %p75 = scmp.ne.s32.totalorder %s66, %s67
    %p76 = scmp.eq.s32.totalorder %s14, 0
    %p77 = por %p75, %p76
    %p78 = scmp.ne.s32.totalorder %s66, %s67
    %p79 = scmp.eq.s32.totalorder %s15, 1
    %p80 = por %p78, %p79
    %p82 = scmp.ne.s32.totalorder %s67, %s81
    %p83 = scmp.eq.s32.totalorder %s15, 0
    %p84 = por %p82, %p83
    %s85 = ssub.s32 %s9, %s16
    %p86 = scmp.eq.s32.totalorder %s85, 0
    %s88 = sadd.s32 %s87, 1
    %s89 = scalar_select %p86, %s87, %s88
    %p92 = pneg %p86
    %p93 = scmp.eq.s32.totalorder %s9, 1
    %p94 = por %p92, %p93
    %p95 = scmp.ne.s32.totalorder %s87, %s90
    %p96 = scmp.eq.s32.totalorder %s9, 0
    %p97 = por %p95, %p96
    %p98 = scmp.ne.s32.totalorder %s87, %s90
    %p99 = scmp.eq.s32.totalorder %s14, 1
    %p100 = por %p98, %p99
    %p101 = scmp.ne.s32.totalorder %s90, %s91
    %p102 = scmp.eq.s32.totalorder %s14, 0
    %p103 = por %p101, %p102
    %p104 = scmp.ne.s32.totalorder %s90, %s91
    %p105 = scmp.eq.s32.totalorder %s15, 1
    %p106 = por %p104, %p105
    %p108 = scmp.ne.s32.totalorder %s91, %s107
    %p109 = scmp.eq.s32.totalorder %s15, 0
    %p110 = por %p108, %p109
    %p111 = scmp.le.s32.totalorder 1, %s9
    %p112 = scmp.lt.s32.totalorder %s9, 3
    %p113 = pnand %p111, %p112
    %p114 = pneg %p113
    // Predicated region
    $region9: #{conv_bn_3d.3} parent=5 // pred_check
      _
    $region10: #{conv_bn_3d.3} parent=5 // pred_check_branch
      %116 = sbr.rel (%p113) target = $region12
    $region11: #{conv_bn_3d.3} parent=5 // pred_region
      %s117 = ssub.s32 %s9, 1
      // Predicated region
      $region13: #{conv_bn_3d.3} parent=11 // pred_check
        %p118 = pneg %p56
      $region14: #{conv_bn_3d.3} parent=11 // pred_check_branch
        %120 = sbr.rel (%p118) target = $region16
      $region15: #{conv_bn_3d.3} parent=11 // pred_region
        _
      $region16: #{conv_bn_3d.3} parent=11 // pred_fallthru
        _
      // Predicated region
      $region17: #{conv_bn_3d.3} parent=11 // pred_check
        %p121 = pneg %p77
      $region18: #{conv_bn_3d.3} parent=11 // pred_check_branch
        %123 = sbr.rel (%p121) target = $region20
      $region19: #{conv_bn_3d.3} parent=11 // pred_region
        _
      $region20: #{conv_bn_3d.3} parent=11 // pred_fallthru
        _
    $region12: #{conv_bn_3d.3} parent=5 // pred_fallthru
      _
    %p124 = scmp.lt.s32.totalorder %s9, 2
    // Predicated region
    $region21: #{conv_bn_3d.3} parent=5 // pred_check
      %p125 = pneg %p124
    $region22: #{conv_bn_3d.3} parent=5 // pred_check_branch
      %127 = sbr.rel (%p125) target = $region24
    $region23: #{conv_bn_3d.3} parent=5 // pred_region
      // Predicated region
      $region25: #{conv_bn_3d.3} parent=23 // pred_check
        %p128 = pneg %p29
      $region26: #{conv_bn_3d.3} parent=23 // pred_check_branch
        %130 = sbr.rel (%p128) target = $region28
      $region27: #{conv_bn_3d.3} parent=23 // pred_region
        %p131 = scmp.lt.s32.totalorder %s9, 1
        %s132 = scalar_select %p131, %s9, 1
        %s133 = smul.addr %s132, 7
        %s134 = smul.addr %s133, 4
        %s135 = scalar_lea.vmem %s0, %s134
      $region28: #{conv_bn_3d.3} parent=23 // pred_fallthru
        _
    $region24: #{conv_bn_3d.3} parent=5 // pred_fallthru
      _
    %p136 = scmp.le.s32.totalorder 1, %s9
    %p137 = scmp.lt.s32.totalorder %s9, 3
    %p138 = pnand %p136, %p137
    %p139 = pneg %p138
    // Predicated region
    $region29: #{conv_bn_3d.3} parent=5 // pred_check
      _
    $region30: #{conv_bn_3d.3} parent=5 // pred_check_branch
      %141 = sbr.rel (%p138) target = $region32
    $region31: #{conv_bn_3d.3} parent=5 // pred_region
      %s142 = ssub.s32 %s9, 1
      %p143 = scmp.lt.s32.totalorder %s14, 1
      %s144 = scalar_select %p143, %s14, 1
      %s145 = smul.addr %s144, 7
      %s146 = smul.addr %s145, 4
      %s147 = scalar_lea.vmem %s0, %s146
      %p148 = pneg %p35
      %p149 = pneg %p32
      %p150 = pneg %p56
      %p151 = pneg %p53
      %p152 = pneg %p77
      %p153 = pneg %p74
      %p154 = pneg %p103
      %p155 = pneg %p100
      %p156 = scmp.lt.s32.totalorder %s14, 1
      %s157 = scalar_select %p156, %s14, 1
      %s158 = smul.addr %s157, 7
      %s159 = smul.addr %s158, 8
      %s160 = scalar_lea.vmem %s3, %s159
      %p161 = scmp.lt.s32.totalorder %s14, 1
      %s162 = scalar_select %p161, %s14, 1
      %s163 = smul.addr %s162, 7
      %s164 = smul.addr %s163, 4
      %s165 = scalar_lea.vmem %s0, %s164
      %p166 = scmp.lt.s32.totalorder %s14, 1
      %s167 = scalar_select %p166, %s14, 1
      %s168 = smul.addr %s167, 7
      %s169 = smul.addr %s168, 8
      %s170 = scalar_lea.vmem %s3, %s169
      %v171 = vld [vmem:[%s165] sm:$0xff]
      %v172 = vld [vmem:[%s165 + $0x8] sm:$0xff]
      %v173 = vld [vmem:[%s165 + $0x10] sm:$0xff]
      %v174 = vld [vmem:[%s165 + $0x18] sm:$0xf]
      %v175 = vunpack.c.l.bf16 %v171
      %v176 = vunpack.c.h.bf16 %v171
      %v177 = vunpack.c.l.bf16 %v172
      %v178 = vunpack.c.h.bf16 %v172
      %v179 = vunpack.c.l.bf16 %v173
      %v180 = vunpack.c.h.bf16 %v173
      %v181 = vunpack.c.l.bf16 %v174
      %v182 = vld [vmem:[%s1] sm:$0xff]
      %184 = vset.pattern.permute.xlu0 0
      %185 = vperm.xlu0 %184, %v182
      %v186 = vpop.permute.xlu0 %185
      %v188 = vmul.f32 %v175, %v186
      %v189 = vmul.f32 %v176, %v186
      %v190 = vmul.f32 %v177, %v186
      %v191 = vmul.f32 %v178, %v186
      %v192 = vmul.f32 %v179, %v186
      %v193 = vmul.f32 %v180, %v186
      %v194 = vmul.f32 %v181, %v186
      %v195 = vld [vmem:[%s2] sm:$0xff]
      %197 = vset.pattern.permute.xlu0 0
      %198 = vperm.xlu0 %197, %v195
      %v199 = vpop.permute.xlu0 %198
      %v201 = vadd.f32 %v188, %v199
      %v202 = vadd.f32 %v189, %v199
      %v203 = vadd.f32 %v190, %v199
      %v204 = vadd.f32 %v191, %v199
      %v205 = vadd.f32 %v192, %v199
      %v206 = vadd.f32 %v193, %v199
      %v207 = vadd.f32 %v194, %v199
      %208 = vst [vmem:[%s170] sm:$0xff] %v201
      %209 = vst [vmem:[%s170 + $0x8] sm:$0xff] %v202
      %210 = vst [vmem:[%s170 + $0x10] sm:$0xff] %v203
      %211 = vst [vmem:[%s170 + $0x18] sm:$0xff] %v204
      %212 = vst [vmem:[%s170 + $0x20] sm:$0xff] %v205
      %213 = vst [vmem:[%s170 + $0x28] sm:$0xff] %v206
      %vm214 = vcmask 261120
      %215 = vst.msk [vmem:[%s170 + $0x30] sm:$0xff] %vm214, %v207
      %p216 = scmp.lt.s32.totalorder %s14, 1
      %s217 = scalar_select %p216, %s14, 1
      %s218 = smul.addr %s217, 7
      %s219 = smul.addr %s218, 8
      %s220 = scalar_lea.vmem %s3, %s219
      // Predicated region
      $region33: #{conv_bn_3d.3} parent=31 // pred_check
        %p221 = pneg %p100
      $region34: #{conv_bn_3d.3} parent=31 // pred_check_branch
        %223 = sbr.rel (%p221) target = $region36
      $region35: #{conv_bn_3d.3} parent=31 // pred_region
        _
      $region36: #{conv_bn_3d.3} parent=31 // pred_fallthru
        _
    $region32: #{conv_bn_3d.3} parent=5 // pred_fallthru
      _
    %p224 = scmp.le.s32.totalorder 2, %s9
    // Predicated region
    $region37: #{conv_bn_3d.3} parent=5 // pred_check
      %p225 = pneg %p224
    $region38: #{conv_bn_3d.3} parent=5 // pred_check_branch
      %227 = sbr.rel (%p225) target = $region40
    $region39: #{conv_bn_3d.3} parent=5 // pred_region
      %s228 = ssub.s32 %s9, 2
      // Predicated region
      $region41: #{conv_bn_3d.3} parent=39 // pred_check
        %p229 = pneg %p106
      $region42: #{conv_bn_3d.3} parent=39 // pred_check_branch
        %231 = sbr.rel (%p229) target = $region44
      $region43: #{conv_bn_3d.3} parent=39 // pred_region
        %p232 = scmp.lt.s32.totalorder %s15, 1
        %s233 = scalar_select %p232, %s15, 1
        %s234 = smul.addr %s233, 7
        %s235 = smul.addr %s234, 8
        %s236 = scalar_lea.vmem %s3, %s235
      $region44: #{conv_bn_3d.3} parent=39 // pred_fallthru
        _
    $region40: #{conv_bn_3d.3} parent=5 // pred_fallthru
      _
  $region6: #{conv_bn_3d.3} parent=0 // loop_footer
    %s13 = sadd.s32 1, %s9
  $region7: #{conv_bn_3d.3} parent=0 // loop_footer_branch
    %8 = sbr.rel target = $region3
  $region8: #{conv_bn_3d.3} parent=0 // loop_exit
    _

// kernel: conv_bn_3d.2
$region0: #{conv_bn_3d.2}
  #allocation0 [shape = 'u32[]', space=smem, size = 0x4, offset = 0x4, fixed_abs, tag = 'smem constant byte address 0x4 - core index']
  #allocation1 [shape = 'u32[72,128]{1,0:T(1,128)}', space=vmem, size = 0x9000, scoped, tag = 'internal scratch']
  %s0 = inlined_call_operand.vmem [shape: bf16[2,4,1024], index: 0, kind: input, shape index: {}]
  %s1 = inlined_call_operand.vmem [shape: bf16[8,108], index: 1, kind: input, shape index: {}]
  %s2 = inlined_call_operand.vmem [shape: bf16[2,8,800], index: 2, kind: output, shape index: {0}]
  %s3 = inlined_call_operand.vmem [shape: f32[2,8,1], index: 3, kind: output, shape index: {1}]
  %s4 = inlined_call_operand.vmem [shape: f32[2,8,1], index: 4, kind: output, shape index: {2}]
  %5 = xla_tuple %s2, %s3, %s4
  %s6 = sld [smem:[#allocation0]]
  $region57: #{conv_bn_3d.2} parent=0
    _
  %s8 = ssub.s32 1, %s6
  %s9 = scalar_select 0, %s8, %s6
  loop: start=0, step=1, limit=4
  $region2: #{conv_bn_3d.2} parent=0 // loop_pre_header
    _
  $region3: #{conv_bn_3d.2} parent=0 // loop_header
    %s11 = sphi 0, %s15
    %p12 = scmp.ge.s32.totalorder %s11, 4
    %s21 = sphi 0, %s23
    %s24 = sphi 0, %s21
    %s25 = sphi 0, %s24
    %s41 = sphi 0, %s25
    %s45 = sphi 0, %s45
    %s47 = sphi 0, %s45
    %s48 = sphi 0, %s47
    %s62 = sphi 0, %s48
    %s68 = sphi 0, %s70
    %s71 = sphi 0, %s68
    %s72 = sphi 0, %s71
    %s88 = sphi 0, %s72
    %s94 = sphi 0, %s96
    %s97 = sphi 0, %s94
    %s98 = sphi 0, %s97
    %s114 = sphi 0, %s98
    %s120 = sphi 0, %s122
    %s123 = sphi 0, %s120
    %s124 = sphi 0, %s123
    %s140 = sphi 0, %s124
  $region4: #{conv_bn_3d.2} parent=0 // loop_header_branch
    %14 = sbr.rel (%p12) target = $region8
  $region5: #{conv_bn_3d.2} parent=0 // loop_body
    %s16 = ssub.s32 %s11, 1
    %s17 = ssub.s32 %s11, 2
    %s18 = sadd.s32 %s11, 1
    %s19 = ssub.s32 %s11, %s18
    %p20 = scmp.eq.s32.totalorder %s19, 0
    %s22 = sadd.s32 %s21, 1
    %s23 = scalar_select %p20, %s21, %s22
    %p26 = pneg %p20
    %p27 = scmp.eq.s32.totalorder %s11, 1
    %p28 = por %p26, %p27
    %p29 = scmp.ne.s32.totalorder %s21, %s24
    %p30 = scmp.eq.s32.totalorder %s11, 0
    %p31 = por %p29, %p30
    %p32 = scmp.ne.s32.totalorder %s21, %s24
    %p33 = scmp.eq.s32.totalorder %s16, 1
    %p34 = por %p32, %p33
    %p35 = scmp.ne.s32.totalorder %s24, %s25
    %p36 = scmp.eq.s32.totalorder %s16, 0
    %p37 = por %p35, %p36
    %p38 = scmp.ne.s32.totalorder %s24, %s25
    %p39 = scmp.eq.s32.totalorder %s17, 1
    %p40 = por %p38, %p39
    %p42 = scmp.ne.s32.totalorder %s25, %s41
    %p43 = scmp.eq.s32.totalorder %s17, 0
    %p44 = por %p42, %p43
    %s46 = sadd.s32 %s45, 1
    %p49 = scmp.eq.s32.totalorder %s11, 1
    %p50 = scmp.ne.s32.totalorder %s45, %s47
    %p51 = scmp.eq.s32.totalorder %s11, 0
    %p52 = por %p50, %p51
    %p53 = scmp.ne.s32.totalorder %s45, %s47
    %p54 = scmp.eq.s32.totalorder %s16, 1
    %p55 = por %p53, %p54
    %p56 = scmp.ne.s32.totalorder %s47, %s48
    %p57 = scmp.eq.s32.totalorder %s16, 0
    %p58 = por %p56, %p57
    %p59 = scmp.ne.s32.totalorder %s47, %s48
    %p60 = scmp.eq.s32.totalorder %s17, 1
    %p61 = por %p59, %p60
    %p63 = scmp.ne.s32.totalorder %s48, %s62
    %p64 = scmp.eq.s32.totalorder %s17, 0
    %p65 = por %p63, %p64
    %s66 = ssub.s32 %s11, %s18
    %p67 = scmp.eq.s32.totalorder %s66, 0
    %s69 = sadd.s32 %s68, 1
    %s70 = scalar_select %p67, %s68, %s69
    %p73 = pneg %p67
    %p74 = scmp.eq.s32.totalorder %s11, 1
    %p75 = por %p73, %p74
    %p76 = scmp.ne.s32.totalorder %s68, %s71
    %p77 = scmp.eq.s32.totalorder %s11, 0
    %p78 = por %p76, %p77
    %p79 = scmp.ne.s32.totalorder %s68, %s71
    %p80 = scmp.eq.s32.totalorder %s16, 1
    %p81 = por %p79, %p80
    %p82 = scmp.ne.s32.totalorder %s71, %s72
    %p83 = scmp.eq.s32.totalorder %s16, 0
    %p84 = por %p82, %p83
    %p85 = scmp.ne.s32.totalorder %s71, %s72
    %p86 = scmp.eq.s32.totalorder %s17, 1
    %p87 = por %p85, %p86
    %p89 = scmp.ne.s32.totalorder %s72, %s88
    %p90 = scmp.eq.s32.totalorder %s17, 0
    %p91 = por %p89, %p90
    %s92 = ssub.s32 %s11, %s18
    %p93 = scmp.eq.s32.totalorder %s92, 0
    %s95 = sadd.s32 %s94, 1
    %s96 = scalar_select %p93, %s94, %s95
    %p99 = pneg %p93
    %p100 = scmp.eq.s32.totalorder %s11, 1
    %p101 = por %p99, %p100
    %p102 = scmp.ne.s32.totalorder %s94, %s97
    %p103 = scmp.eq.s32.totalorder %s11, 0
    %p104 = por %p102, %p103
    %p105 = scmp.ne.s32.totalorder %s94, %s97
    %p106 = scmp.eq.s32.totalorder %s16, 1
    %p107 = por %p105, %p106
    %p108 = scmp.ne.s32.totalorder %s97, %s98
    %p109 = scmp.eq.s32.totalorder %s16, 0
    %p110 = por %p108, %p109
    %p111 = scmp.ne.s32.totalorder %s97, %s98
    %p112 = scmp.eq.s32.totalorder %s17, 1
    %p113 = por %p111, %p112
    %p115 = scmp.ne.s32.totalorder %s98, %s114
    %p116 = scmp.eq.s32.totalorder %s17, 0
    %p117 = por %p115, %p116
    %s118 = ssub.s32 %s11, %s18
    %p119 = scmp.eq.s32.totalorder %s118, 0
    %s121 = sadd.s32 %s120, 1
    %s122 = scalar_select %p119, %s120, %s121
    %p125 = pneg %p119
    %p126 = scmp.eq.s32.totalorder %s11, 1
    %p127 = por %p125, %p126
    %p128 = scmp.ne.s32.totalorder %s120, %s123
    %p129 = scmp.eq.s32.totalorder %s11, 0
    %p130 = por %p128, %p129
    %p131 = scmp.ne.s32.totalorder %s120, %s123
    %p132 = scmp.eq.s32.totalorder %s16, 1
    %p133 = por %p131, %p132
    %p134 = scmp.ne.s32.totalorder %s123, %s124
    %p135 = scmp.eq.s32.totalorder %s16, 0
    %p136 = por %p134, %p135
    %p137 = scmp.ne.s32.totalorder %s123, %s124
    %p138 = scmp.eq.s32.totalorder %s17, 1
    %p139 = por %p137, %p138
    %p141 = scmp.ne.s32.totalorder %s124, %s140
    %p142 = scmp.eq.s32.totalorder %s17, 0
    %p143 = por %p141, %p142
    %p144 = scmp.le.s32.totalorder 1, %s11
    %p145 = scmp.lt.s32.totalorder %s11, 3
    %p146 = pnand %p144, %p145
    %p147 = pneg %p146
    // Predicated region
    $region9: #{conv_bn_3d.2} parent=5 // pred_check
      _
    $region10: #{conv_bn_3d.2} parent=5 // pred_check_branch
      %149 = sbr.rel (%p146) target = $region12
    $region11: #{conv_bn_3d.2} parent=5 // pred_region
      %s150 = ssub.s32 %s11, 1
      // Predicated region
      $region13: #{conv_bn_3d.2} parent=11 // pred_check
        %p151 = pneg %p58
      $region14: #{conv_bn_3d.2} parent=11 // pred_check_branch
        %153 = sbr.rel (%p151) target = $region16
      $region15: #{conv_bn_3d.2} parent=11 // pred_region
        _
      $region16: #{conv_bn_3d.2} parent=11 // pred_fallthru
        _
    $region12: #{conv_bn_3d.2} parent=5 // pred_fallthru
      _
    %p154 = scmp.lt.s32.totalorder %s11, 2
    // Predicated region
    $region17: #{conv_bn_3d.2} parent=5 // pred_check
      %p155 = pneg %p154
    $region18: #{conv_bn_3d.2} parent=5 // pred_check_branch
      %157 = sbr.rel (%p155) target = $region20
    $region19: #{conv_bn_3d.2} parent=5 // pred_region
      // Predicated region
      $region21: #{conv_bn_3d.2} parent=19 // pred_check
        %p158 = pneg %p31
      $region22: #{conv_bn_3d.2} parent=19 // pred_check_branch
        %160 = sbr.rel (%p158) target = $region24
      $region23: #{conv_bn_3d.2} parent=19 // pred_region
        %p161 = scmp.lt.s32.totalorder %s11, 1
        %s162 = scalar_select %p161, %s11, 1
        %s163 = smul.addr %s162, 8
        %s164 = smul.addr %s163, 2
        %s165 = scalar_lea.vmem %s0, %s164
      $region24: #{conv_bn_3d.2} parent=19 // pred_fallthru
        _
    $region20: #{conv_bn_3d.2} parent=5 // pred_fallthru
      _
    %p166 = scmp.le.s32.totalorder 1, %s11
    %p167 = scmp.lt.s32.totalorder %s11, 3
    %p168 = pnand %p166, %p167
    %p169 = pneg %p168
    // Predicated region
    $region25: #{conv_bn_3d.2} parent=5 // pred_check
      _
    $region26: #{conv_bn_3d.2} parent=5 // pred_check_branch
      %171 = sbr.rel (%p168) target = $region28
    $region27: #{conv_bn_3d.2} parent=5 // pred_region
      %s172 = ssub.s32 %s11, 1
      %p173 = scmp.lt.s32.totalorder %s16, 1
      %s174 = scalar_select %p173, %s16, 1
      %s175 = smul.addr %s174, 8
      %s176 = smul.addr %s175, 2
      %s177 = scalar_lea.vmem %s0, %s176
      %p178 = pneg %p37
      %p179 = pneg %p34
      %p180 = pneg %p58
      %p181 = pneg %p55
      %p182 = pneg %p84
      %p183 = pneg %p81
      %p184 = scmp.lt.s32.totalorder %s16, 1
      %s185 = scalar_select %p184, %s16, 1
      %s186 = smul.addr %s185, 7
      %s187 = smul.addr %s186, 4
      %s188 = scalar_lea.vmem %s2, %s187
      %p189 = pneg %p110
      %p190 = pneg %p107
      %p191 = scmp.lt.s32.totalorder %s16, 1
      %s192 = scalar_select %p191, %s16, 1
      %s193 = smul.addr %s192, 8
      %s194 = scalar_lea.vmem %s3, %s193
      %p195 = pneg %p136
      %p196 = pneg %p133
      %p197 = scmp.lt.s32.totalorder %s16, 1
      %s198 = scalar_select %p197, %s16, 1
      %s199 = smul.addr %s198, 8
      %s200 = scalar_lea.vmem %s4, %s199
      %p201 = scmp.lt.s32.totalorder %s16, 1
      %s202 = scalar_select %p201, %s16, 1
      %s203 = smul.addr %s202, 8
      %s204 = smul.addr %s203, 2
      %s205 = scalar_lea.vmem %s0, %s204
      %p206 = scmp.lt.s32.totalorder %s16, 1
      %s207 = scalar_select %p206, %s16, 1
      %s208 = smul.addr %s207, 7
      %s209 = smul.addr %s208, 4
      %s210 = scalar_lea.vmem %s2, %s209
      %p211 = scmp.lt.s32.totalorder %s16, 1
      %s212 = scalar_select %p211, %s16, 1
      %s213 = smul.addr %s212, 8
      %s214 = scalar_lea.vmem %s3, %s213
      %p215 = scmp.lt.s32.totalorder %s16, 1
      %s216 = scalar_select %p215, %s16, 1
      %s217 = smul.addr %s216, 8
      %s218 = scalar_lea.vmem %s4, %s217
      %v220 = vld [vmem:[%s205] sm:$0xff]
      %v221 = vld [vmem:[%s205 + $0x8] sm:$0xff]
      %v222 = vld [vmem:[%s1] sm:$0xf]
      %v224 = vunpack.c.l.b16 %v222
      %v225 = vpack.c.b16 %v224, %v224
      %226 = vrot.lane.b32.xlu0 %v225, 124
      %v227 = vpop.permute.xlu0 %226
      %229 = vst [vmem:[#allocation1] ss:$4 sm:$0xff] %v220
      %s231 = scalar_lea.vmem [#allocation1], 32
      %232 = vst [vmem:[%s231] ss:$4 sm:$0xff] %v221
      %v233 = vld.sshfl [vmem:[#allocation1] sm:$0xff pattern:$0x73625140]
      %v235 = vld.sshfl [vmem:[#allocation1 + $0x8] sm:$0xff pattern:$0x73625140]
      %v237 = vld.sshfl [vmem:[#allocation1 + $0x10] sm:$0xff pattern:$0x73625140]
      %v239 = vld.sshfl [vmem:[#allocation1 + $0x18] sm:$0xff pattern:$0x73625140]
      %v241 = vld.sshfl [vmem:[#allocation1 + $0x20] sm:$0xff pattern:$0x73625140]
      %v243 = vld.sshfl [vmem:[#allocation1 + $0x28] sm:$0xff pattern:$0x73625140]
      %v245 = vld.sshfl [vmem:[#allocation1 + $0x30] sm:$0xff pattern:$0x73625140]
      %247 = vrot.lane.b32.xlu0 %v233, 127
      %v248 = vpop.permute.xlu0 %247
      %249 = vrot.lane.b32.xlu0 %v235, 127
      %v250 = vpop.permute.xlu0 %249
      %251 = vrot.lane.b32.xlu0 %v237, 127
      %v252 = vpop.permute.xlu0 %251
      %253 = vrot.lane.b32.xlu0 %v239, 127
      %v254 = vpop.permute.xlu0 %253
      %255 = vrot.lane.b32.xlu0 %v241, 127
      %v256 = vpop.permute.xlu0 %255
      %257 = vrot.lane.b32.xlu0 %v243, 127
      %v258 = vpop.permute.xlu0 %257
      %259 = vrot.lane.b32.xlu0 %v245, 127
      %v260 = vpop.permute.xlu0 %259
      %vm261 = vcmask 1039360
      %v262 = vsel %vm261, %v248, %v250
      %v263 = vsel %vm261, %v250, %v252
      %v264 = vsel %vm261, %v252, %v254
      %v265 = vsel %vm261, %v254, %v256
      %v266 = vsel %vm261, %v256, %v258
      %v267 = vsel %vm261, %v258, %v260
      %vm268 = vcmask 31744
      %v270 = vsel %vm268, %v227, 0
      %vm272 = vcmask 1041408
      %v274 = vsel %vm272, %v262, 0
      %v277 = vsel %vm272, %v263, 0
      %v280 = vsel %vm272, %v264, 0
      %v283 = vsel %vm272, %v265, 0
      %v286 = vsel %vm272, %v266, 0
      %v289 = vsel %vm272, %v267, 0
      %v292 = vsel %vm272, %v260, 0
      %294 = vmatpush.bf16.msra.mxu0 0
      %295 = vmatpush.bf16.msra.mxu0 0
      %296 = vmatpush.bf16.msra.mxu0 0
      %297 = vmatpush.bf16.msra.mxu0 0
      %298 = vmatpush.bf16.msra.mxu0 0
      %299 = vmatpush.bf16.msra.mxu0 0
      %300 = vmatpush.bf16.msra.mxu0 0
      %301 = vmatpush.bf16.msra.mxu0 %v274
      %302 = vmatmul.bf16.gmra.mxu0 %v270
      %v303 = vpop.f32.mrf.mxu0
      %v304 = vadd.f32 0.0, %v303
      %v305 = vpop.f32.mrf.mxu0
      %306 = vdwg.mxu0
      %307 = vmatpush.bf16.msra.mxu0 0
      %308 = vmatpush.bf16.msra.mxu0 0
      %309 = vmatpush.bf16.msra.mxu0 0
      %310 = vmatpush.bf16.msra.mxu0 0
      %311 = vmatpush.bf16.msra.mxu0 0
      %312 = vmatpush.bf16.msra.mxu0 0
      %313 = vmatpush.bf16.msra.mxu0 0
      %314 = vmatpush.bf16.msra.mxu0 %v277
      %315 = vmatmul.bf16.gmra.mxu0 %v270
      %v316 = vpop.f32.mrf.mxu0
      %v317 = vadd.f32 0.0, %v316
      %v318 = vpop.f32.mrf.mxu0
      %319 = vdwg.mxu0
      %320 = vmatpush.bf16.msra.mxu0 0
      %321 = vmatpush.bf16.msra.mxu0 0
      %322 = vmatpush.bf16.msra.mxu0 0
      %323 = vmatpush.bf16.msra.mxu0 0
      %324 = vmatpush.bf16.msra.mxu0 0
      %325 = vmatpush.bf16.msra.mxu0 0
      %326 = vmatpush.bf16.msra.mxu0 0
      %327 = vmatpush.bf16.msra.mxu0 %v280
      %328 = vmatmul.bf16.gmra.mxu0 %v270
      %v329 = vpop.f32.mrf.mxu0
      %v330 = vadd.f32 0.0, %v329
      %v331 = vpop.f32.mrf.mxu0
      %332 = vdwg.mxu0
      %333 = vmatpush.bf16.msra.mxu0 0
      %334 = vmatpush.bf16.msra.mxu0 0
      %335 = vmatpush.bf16.msra.mxu0 0
      %336 = vmatpush.bf16.msra.mxu0 0
      %337 = vmatpush.bf16.msra.mxu0 0
      %338 = vmatpush.bf16.msra.mxu0 0
      %339 = vmatpush.bf16.msra.mxu0 0
      %340 = vmatpush.bf16.msra.mxu0 %v283
      %341 = vmatmul.bf16.gmra.mxu0 %v270
      %v342 = vpop.f32.mrf.mxu0
      %v343 = vadd.f32 0.0, %v342
      %v344 = vpop.f32.mrf.mxu0
      %345 = vdwg.mxu0
      %346 = vmatpush.bf16.msra.mxu0 0
      %347 = vmatpush.bf16.msra.mxu0 0
      %348 = vmatpush.bf16.msra.mxu0 0
      %349 = vmatpush.bf16.msra.mxu0 0
      %350 = vmatpush.bf16.msra.mxu0 0
      %351 = vmatpush.bf16.msra.mxu0 0
      %352 = vmatpush.bf16.msra.mxu0 0
      %353 = vmatpush.bf16.msra.mxu0 %v286
      %354 = vmatmul.bf16.gmra.mxu0 %v270
      %v355 = vpop.f32.mrf.mxu0
      %v356 = vadd.f32 0.0, %v355
      %v357 = vpop.f32.mrf.mxu0
      %358 = vdwg.mxu0
      %359 = vmatpush.bf16.msra.mxu0 0
      %360 = vmatpush.bf16.msra.mxu0 0
      %361 = vmatpush.bf16.msra.mxu0 0
      %362 = vmatpush.bf16.msra.mxu0 0
      %363 = vmatpush.bf16.msra.mxu0 0
      %364 = vmatpush.bf16.msra.mxu0 0
      %365 = vmatpush.bf16.msra.mxu0 0
      %366 = vmatpush.bf16.msra.mxu0 %v289
      %367 = vmatmul.bf16.gmra.mxu0 %v270
      %v368 = vpop.f32.mrf.mxu0
      %v369 = vadd.f32 0.0, %v368
      %v370 = vpop.f32.mrf.mxu0
      %371 = vdwg.mxu0
      %372 = vmatpush.bf16.msra.mxu0 0
      %373 = vmatpush.bf16.msra.mxu0 0
      %374 = vmatpush.bf16.msra.mxu0 0
      %375 = vmatpush.bf16.msra.mxu0 0
      %376 = vmatpush.bf16.msra.mxu0 0
      %377 = vmatpush.bf16.msra.mxu0 0
      %378 = vmatpush.bf16.msra.mxu0 0
      %379 = vmatpush.bf16.msra.mxu0 %v292
      %380 = vmatmul.bf16.gmra.mxu0 %v270
      %v381 = vpop.f32.mrf.mxu0
      %v382 = vadd.f32 0.0, %v381
      %v383 = vpop.f32.mrf.mxu0
      %384 = vdwg.mxu0
      %385 = vst [vmem:[#allocation1] ss:$4 sm:$0xff] %v220
      %s386 = scalar_lea.vmem [#allocation1], 32
      %387 = vst [vmem:[%s386] ss:$4 sm:$0xff] %v221
      %v388 = vld.sshfl [vmem:[#allocation1] sm:$0xff pattern:$0x73625140]
      %v389 = vld.sshfl [vmem:[#allocation1 + $0x8] sm:$0xff pattern:$0x73625140]
      %v390 = vld.sshfl [vmem:[#allocation1 + $0x10] sm:$0xff pattern:$0x73625140]
      %v391 = vld.sshfl [vmem:[#allocation1 + $0x18] sm:$0xff pattern:$0x73625140]
      %v392 = vld.sshfl [vmem:[#allocation1 + $0x20] sm:$0xff pattern:$0x73625140]
      %v393 = vld.sshfl [vmem:[#allocation1 + $0x28] sm:$0xff pattern:$0x73625140]
      %v394 = vld.sshfl [vmem:[#allocation1 + $0x30] sm:$0xff pattern:$0x73625140]
      %v396 = vsel %vm268, %v222, 0
      %v398 = vsel %vm272, %v388, 0
      %v400 = vsel %vm272, %v389, 0
      %v402 = vsel %vm272, %v390, 0
      %v404 = vsel %vm272, %v391, 0
      %v406 = vsel %vm272, %v392, 0
      %v408 = vsel %vm272, %v393, 0
      %v410 = vsel %vm272, %v394, 0
      %412 = vmatpush.bf16.msra.mxu0 0
      %413 = vmatpush.bf16.msra.mxu0 0
      %414 = vmatpush.bf16.msra.mxu0 0
      %415 = vmatpush.bf16.msra.mxu0 0
      %416 = vmatpush.bf16.msra.mxu0 0
      %417 = vmatpush.bf16.msra.mxu0 0
      %418 = vmatpush.bf16.msra.mxu0 0
      %419 = vmatpush.bf16.msra.mxu0 %v398
      %420 = vmatmul.bf16.gmra.mxu0 %v396
      %v421 = vpop.f32.mrf.mxu0
      %v422 = vadd.f32 %v304, %v421
      %v423 = vpop.f32.mrf.mxu0
      %424 = vdwg.mxu0
      %425 = vmatpush.bf16.msra.mxu0 0
      %426 = vmatpush.bf16.msra.mxu0 0
      %427 = vmatpush.bf16.msra.mxu0 0
      %428 = vmatpush.bf16.msra.mxu0 0
      %429 = vmatpush.bf16.msra.mxu0 0
      %430 = vmatpush.bf16.msra.mxu0 0
      %431 = vmatpush.bf16.msra.mxu0 0
      %432 = vmatpush.bf16.msra.mxu0 %v400
      %433 = vmatmul.bf16.gmra.mxu0 %v396
      %v434 = vpop.f32.mrf.mxu0
      %v435 = vadd.f32 %v317, %v434
      %v436 = vpop.f32.mrf.mxu0
      %437 = vdwg.mxu0
      %438 = vmatpush.bf16.msra.mxu0 0
      %439 = vmatpush.bf16.msra.mxu0 0
      %440 = vmatpush.bf16.msra.mxu0 0
      %441 = vmatpush.bf16.msra.mxu0 0
      %442 = vmatpush.bf16.msra.mxu0 0
      %443 = vmatpush.bf16.msra.mxu0 0
      %444 = vmatpush.bf16.msra.mxu0 0
      %445 = vmatpush.bf16.msra.mxu0 %v402
      %446 = vmatmul.bf16.gmra.mxu0 %v396
      %v447 = vpop.f32.mrf.mxu0
      %v448 = vadd.f32 %v330, %v447
      %v449 = vpop.f32.mrf.mxu0
      %450 = vdwg.mxu0
      %451 = vmatpush.bf16.msra.mxu0 0
      %452 = vmatpush.bf16.msra.mxu0 0
      %453 = vmatpush.bf16.msra.mxu0 0
      %454 = vmatpush.bf16.msra.mxu0 0
      %455 = vmatpush.bf16.msra.mxu0 0
      %456 = vmatpush.bf16.msra.mxu0 0
      %457 = vmatpush.bf16.msra.mxu0 0
      %458 = vmatpush.bf16.msra.mxu0 %v404
      %459 = vmatmul.bf16.gmra.mxu0 %v396
      %v460 = vpop.f32.mrf.mxu0
      %v461 = vadd.f32 %v343, %v460
      %v462 = vpop.f32.mrf.mxu0
      %463 = vdwg.mxu0
      %464 = vmatpush.bf16.msra.mxu0 0
      %465 = vmatpush.bf16.msra.mxu0 0
      %466 = vmatpush.bf16.msra.mxu0 0
      %467 = vmatpush.bf16.msra.mxu0 0
      %468 = vmatpush.bf16.msra.mxu0 0
      %469 = vmatpush.bf16.msra.mxu0 0
      %470 = vmatpush.bf16.msra.mxu0 0
      %471 = vmatpush.bf16.msra.mxu0 %v406
      %472 = vmatmul.bf16.gmra.mxu0 %v396
      %v473 = vpop.f32.mrf.mxu0
      %v474 = vadd.f32 %v356, %v473
      %v475 = vpop.f32.mrf.mxu0
      %476 = vdwg.mxu0
      %477 = vmatpush.bf16.msra.mxu0 0
      %478 = vmatpush.bf16.msra.mxu0 0
      %479 = vmatpush.bf16.msra.mxu0 0
      %480 = vmatpush.bf16.msra.mxu0 0
      %481 = vmatpush.bf16.msra.mxu0 0
      %482 = vmatpush.bf16.msra.mxu0 0
      %483 = vmatpush.bf16.msra.mxu0 0
      %484 = vmatpush.bf16.msra.mxu0 %v408
      %485 = vmatmul.bf16.gmra.mxu0 %v396
      %v486 = vpop.f32.mrf.mxu0
      %v487 = vadd.f32 %v369, %v486
      %v488 = vpop.f32.mrf.mxu0
      %489 = vdwg.mxu0
      %490 = vmatpush.bf16.msra.mxu0 0
      %491 = vmatpush.bf16.msra.mxu0 0
      %492 = vmatpush.bf16.msra.mxu0 0
      %493 = vmatpush.bf16.msra.mxu0 0
      %494 = vmatpush.bf16.msra.mxu0 0
      %495 = vmatpush.bf16.msra.mxu0 0
      %496 = vmatpush.bf16.msra.mxu0 0
      %497 = vmatpush.bf16.msra.mxu0 %v410
      %498 = vmatmul.bf16.gmra.mxu0 %v396
      %v499 = vpop.f32.mrf.mxu0
      %v500 = vadd.f32 %v382, %v499
      %v501 = vpop.f32.mrf.mxu0
      %502 = vdwg.mxu0
      %503 = vrot.lane.b32.xlu0 %v225, 120
      %v504 = vpop.permute.xlu0 %503
      %505 = vst [vmem:[#allocation1] ss:$4 sm:$0xff] %v220
      %s506 = scalar_lea.vmem [#allocation1], 32
      %507 = vst [vmem:[%s506] ss:$4 sm:$0xff] %v221
      %v508 = vld.sshfl [vmem:[#allocation1] sm:$0xff pattern:$0x73625140]
      %v510 = vld.sshfl [vmem:[#allocation1 + $0x8] sm:$0xff pattern:$0x73625140]
      %v512 = vld.sshfl [vmem:[#allocation1 + $0x10] sm:$0xff pattern:$0x73625140]
      %v514 = vld.sshfl [vmem:[#allocation1 + $0x18] sm:$0xff pattern:$0x73625140]
      %v516 = vld.sshfl [vmem:[#allocation1 + $0x20] sm:$0xff pattern:$0x73625140]
      %v518 = vld.sshfl [vmem:[#allocation1 + $0x28] sm:$0xff pattern:$0x73625140]
      %v520 = vld.sshfl [vmem:[#allocation1 + $0x30] sm:$0xff pattern:$0x73625140]
      %522 = vrot.lane.b32.xlu0 %v508, 126
      %v523 = vpop.permute.xlu0 %522
      %524 = vrot.lane.b32.xlu0 %v510, 126
      %v525 = vpop.permute.xlu0 %524
      %526 = vrot.lane.b32.xlu0 %v512, 126
      %v527 = vpop.permute.xlu0 %526
      %528 = vrot.lane.b32.xlu0 %v514, 126
      %v529 = vpop.permute.xlu0 %528
      %530 = vrot.lane.b32.xlu0 %v516, 126
      %v531 = vpop.permute.xlu0 %530
      %532 = vrot.lane.b32.xlu0 %v518, 126
      %v533 = vpop.permute.xlu0 %532
      %534 = vrot.lane.b32.xlu0 %v520, 126
      %v535 = vpop.permute.xlu0 %534
      %vm536 = vcmask 1031168
      %v537 = vsel %vm536, %v523, %v525
      %v538 = vsel %vm536, %v525, %v527
      %v539 = vsel %vm536, %v527, %v529
      %v540 = vsel %vm536, %v529, %v531
      %v541 = vsel %vm536, %v531, %v533
      %v542 = vsel %vm536, %v533, %v535
      %v544 = vsel %vm268, %v504, 0
      %v547 = vsel %vm272, %v537, 0
      %v550 = vsel %vm272, %v538, 0
      %v553 = vsel %vm272, %v539, 0
      %v556 = vsel %vm272, %v540, 0
      %v559 = vsel %vm272, %v541, 0
      %v562 = vsel %vm272, %v542, 0
      %v565 = vsel %vm272, %v535, 0
      %567 = vmatpush.bf16.msra.mxu0 0
      %568 = vmatpush.bf16.msra.mxu0 0
      %569 = vmatpush.bf16.msra.mxu0 0
      %570 = vmatpush.bf16.msra.mxu0 0
      %571 = vmatpush.bf16.msra.mxu0 0
      %572 = vmatpush.bf16.msra.mxu0 0
      %573 = vmatpush.bf16.msra.mxu0 0
      %574 = vmatpush.bf16.msra.mxu0 %v547
      %575 = vmatmul.bf16.gmra.mxu0 %v544
      %v576 = vpop.f32.mrf.mxu0
      %v577 = vadd.f32 0.0, %v576
      %v578 = vpop.f32.mrf.mxu0
      %579 = vdwg.mxu0
      %580 = vmatpush.bf16.msra.mxu0 0
      %581 = vmatpush.bf16.msra.mxu0 0
      %582 = vmatpush.bf16.msra.mxu0 0
      %583 = vmatpush.bf16.msra.mxu0 0
      %584 = vmatpush.bf16.msra.mxu0 0
      %585 = vmatpush.bf16.msra.mxu0 0
      %586 = vmatpush.bf16.msra.mxu0 0
      %587 = vmatpush.bf16.msra.mxu0 %v550
      %588 = vmatmul.bf16.gmra.mxu0 %v544
      %v589 = vpop.f32.mrf.mxu0
      %v590 = vadd.f32 0.0, %v589
      %v591 = vpop.f32.mrf.mxu0
      %592 = vdwg.mxu0
      %593 = vmatpush.bf16.msra.mxu0 0
      %594 = vmatpush.bf16.msra.mxu0 0
      %595 = vmatpush.bf16.msra.mxu0 0
      %596 = vmatpush.bf16.msra.mxu0 0
      %597 = vmatpush.bf16.msra.mxu0 0
      %598 = vmatpush.bf16.msra.mxu0 0
      %599 = vmatpush.bf16.msra.mxu0 0
      %600 = vmatpush.bf16.msra.mxu0 %v553
      %601 = vmatmul.bf16.gmra.mxu0 %v544
      %v602 = vpop.f32.mrf.mxu0
      %v603 = vadd.f32 0.0, %v602
      %v604 = vpop.f32.mrf.mxu0
      %605 = vdwg.mxu0
      %606 = vmatpush.bf16.msra.mxu0 0
      %607 = vmatpush.bf16.msra.mxu0 0
      %608 = vmatpush.bf16.msra.mxu0 0
      %609 = vmatpush.bf16.msra.mxu0 0
      %610 = vmatpush.bf16.msra.mxu0 0
      %611 = vmatpush.bf16.msra.mxu0 0
      %612 = vmatpush.bf16.msra.mxu0 0
      %613 = vmatpush.bf16.msra.mxu0 %v556
      %614 = vmatmul.bf16.gmra.mxu0 %v544
      %v615 = vpop.f32.mrf.mxu0
      %v616 = vadd.f32 0.0, %v615
      %v617 = vpop.f32.mrf.mxu0
      %618 = vdwg.mxu0
      %619 = vmatpush.bf16.msra.mxu0 0
      %620 = vmatpush.bf16.msra.mxu0 0
      %621 = vmatpush.bf16.msra.mxu0 0
      %622 = vmatpush.bf16.msra.mxu0 0
      %623 = vmatpush.bf16.msra.mxu0 0
      %624 = vmatpush.bf16.msra.mxu0 0
      %625 = vmatpush.bf16.msra.mxu0 0
      %626 = vmatpush.bf16.msra.mxu0 %v559
      %627 = vmatmul.bf16.gmra.mxu0 %v544
      %v628 = vpop.f32.mrf.mxu0
      %v629 = vadd.f32 0.0, %v628
      %v630 = vpop.f32.mrf.mxu0
      %631 = vdwg.mxu0
      %632 = vmatpush.bf16.msra.mxu0 0
      %633 = vmatpush.bf16.msra.mxu0 0
      %634 = vmatpush.bf16.msra.mxu0 0
      %635 = vmatpush.bf16.msra.mxu0 0
      %636 = vmatpush.bf16.msra.mxu0 0
      %637 = vmatpush.bf16.msra.mxu0 0
      %638 = vmatpush.bf16.msra.mxu0 0
      %639 = vmatpush.bf16.msra.mxu0 %v562
      %640 = vmatmul.bf16.gmra.mxu0 %v544
      %v641 = vpop.f32.mrf.mxu0
      %v642 = vadd.f32 0.0, %v641
      %v643 = vpop.f32.mrf.mxu0
      %644 = vdwg.mxu0
      %645 = vmatpush.bf16.msra.mxu0 0
      %646 = vmatpush.bf16.msra.mxu0 0
      %647 = vmatpush.bf16.msra.mxu0 0
      %648 = vmatpush.bf16.msra.mxu0 0
      %649 = vmatpush.bf16.msra.mxu0 0
      %650 = vmatpush.bf16.msra.mxu0 0
      %651 = vmatpush.bf16.msra.mxu0 0
      %652 = vmatpush.bf16.msra.mxu0 %v565
      %653 = vmatmul.bf16.gmra.mxu0 %v544
      %v654 = vpop.f32.mrf.mxu0
      %v655 = vadd.f32 0.0, %v654
      %v656 = vpop.f32.mrf.mxu0
      %657 = vdwg.mxu0
      %v658 = vadd.f32 %v422, %v577
      %v659 = vadd.f32 %v435, %v590
      %v660 = vadd.f32 %v448, %v603
      %v661 = vadd.f32 %v461, %v616
      %v662 = vadd.f32 %v474, %v629
      %v663 = vadd.f32 %v487, %v642
      %v664 = vadd.f32 %v500, %v655
      %665 = vrot.lane.b32.xlu0 %v225, 116
      %v666 = vpop.permute.xlu0 %665
      %667 = vst [vmem:[#allocation1] ss:$4 sm:$0xff] %v220
      %s668 = scalar_lea.vmem [#allocation1], 32
      %669 = vst [vmem:[%s668] ss:$4 sm:$0xff] %v221
      %v670 = vld.sshfl [vmem:[#allocation1] sm:$0xff pattern:$0x73625140]
      %v672 = vld.sshfl [vmem:[#allocation1 + $0x8] sm:$0xff pattern:$0x73625140]
      %v674 = vld.sshfl [vmem:[#allocation1 + $0x10] sm:$0xff pattern:$0x73625140]
      %v676 = vld.sshfl [vmem:[#allocation1 + $0x18] sm:$0xff pattern:$0x73625140]
      %v678 = vld.sshfl [vmem:[#allocation1 + $0x20] sm:$0xff pattern:$0x73625140]
      %v680 = vld.sshfl [vmem:[#allocation1 + $0x28] sm:$0xff pattern:$0x73625140]
      %v682 = vld.sshfl [vmem:[#allocation1 + $0x30] sm:$0xff pattern:$0x73625140]
      %684 = vrot.lane.b32.xlu0 %v670, 118
      %v685 = vpop.permute.xlu0 %684
      %686 = vrot.lane.b32.xlu0 %v672, 118
      %v687 = vpop.permute.xlu0 %686
      %688 = vrot.lane.b32.xlu0 %v674, 118
      %v689 = vpop.permute.xlu0 %688
      %690 = vrot.lane.b32.xlu0 %v676, 118
      %v691 = vpop.permute.xlu0 %690
      %692 = vrot.lane.b32.xlu0 %v678, 118
      %v693 = vpop.permute.xlu0 %692
      %694 = vrot.lane.b32.xlu0 %v680, 118
      %v695 = vpop.permute.xlu0 %694
      %696 = vrot.lane.b32.xlu0 %v682, 118
      %v697 = vpop.permute.xlu0 %696
      %vm698 = vcmask 965632
      %v699 = vsel %vm698, %v685, %v687
      %v700 = vsel %vm698, %v687, %v689
      %v701 = vsel %vm698, %v689, %v691
      %v702 = vsel %vm698, %v691, %v693
      %v703 = vsel %vm698, %v693, %v695
      %v704 = vsel %vm698, %v695, %v697
      %v706 = vsel %vm268, %v666, 0
      %v709 = vsel %vm272, %v699, 0
      %v712 = vsel %vm272, %v700, 0
      %v715 = vsel %vm272, %v701, 0
      %v718 = vsel %vm272, %v702, 0
      %v721 = vsel %vm272, %v703, 0
      %v724 = vsel %vm272, %v704, 0
      %v727 = vsel %vm272, %v697, 0
      %729 = vmatpush.bf16.msra.mxu0 0
      %730 = vmatpush.bf16.msra.mxu0 0
      %731 = vmatpush.bf16.msra.mxu0 0
      %732 = vmatpush.bf16.msra.mxu0 0
      %733 = vmatpush.bf16.msra.mxu0 0
      %734 = vmatpush.bf16.msra.mxu0 0
      %735 = vmatpush.bf16.msra.mxu0 0
      %736 = vmatpush.bf16.msra.mxu0 %v709
      %737 = vmatmul.bf16.gmra.mxu0 %v706
      %v738 = vpop.f32.mrf.mxu0
      %v739 = vadd.f32 0.0, %v738
      %v740 = vpop.f32.mrf.mxu0
      %741 = vdwg.mxu0
      %742 = vmatpush.bf16.msra.mxu0 0
      %743 = vmatpush.bf16.msra.mxu0 0
      %744 = vmatpush.bf16.msra.mxu0 0
      %745 = vmatpush.bf16.msra.mxu0 0
      %746 = vmatpush.bf16.msra.mxu0 0
      %747 = vmatpush.bf16.msra.mxu0 0
      %748 = vmatpush.bf16.msra.mxu0 0
      %749 = vmatpush.bf16.msra.mxu0 %v712
      %750 = vmatmul.bf16.gmra.mxu0 %v706
      %v751 = vpop.f32.mrf.mxu0
      %v752 = vadd.f32 0.0, %v751
      %v753 = vpop.f32.mrf.mxu0
      %754 = vdwg.mxu0
      %755 = vmatpush.bf16.msra.mxu0 0
      %756 = vmatpush.bf16.msra.mxu0 0
      %757 = vmatpush.bf16.msra.mxu0 0
      %758 = vmatpush.bf16.msra.mxu0 0
      %759 = vmatpush.bf16.msra.mxu0 0
      %760 = vmatpush.bf16.msra.mxu0 0
      %761 = vmatpush.bf16.msra.mxu0 0
      %762 = vmatpush.bf16.msra.mxu0 %v715
      %763 = vmatmul.bf16.gmra.mxu0 %v706
      %v764 = vpop.f32.mrf.mxu0
      %v765 = vadd.f32 0.0, %v764
      %v766 = vpop.f32.mrf.mxu0
      %767 = vdwg.mxu0
      %768 = vmatpush.bf16.msra.mxu0 0
      %769 = vmatpush.bf16.msra.mxu0 0
      %770 = vmatpush.bf16.msra.mxu0 0
      %771 = vmatpush.bf16.msra.mxu0 0
      %772 = vmatpush.bf16.msra.mxu0 0
      %773 = vmatpush.bf16.msra.mxu0 0
      %774 = vmatpush.bf16.msra.mxu0 0
      %775 = vmatpush.bf16.msra.mxu0 %v718
      %776 = vmatmul.bf16.gmra.mxu0 %v706
      %v777 = vpop.f32.mrf.mxu0
      %v778 = vadd.f32 0.0, %v777
      %v779 = vpop.f32.mrf.mxu0
      %780 = vdwg.mxu0
      %781 = vmatpush.bf16.msra.mxu0 0
      %782 = vmatpush.bf16.msra.mxu0 0
      %783 = vmatpush.bf16.msra.mxu0 0
      %784 = vmatpush.bf16.msra.mxu0 0
      %785 = vmatpush.bf16.msra.mxu0 0
      %786 = vmatpush.bf16.msra.mxu0 0
      %787 = vmatpush.bf16.msra.mxu0 0
      %788 = vmatpush.bf16.msra.mxu0 %v721
      %789 = vmatmul.bf16.gmra.mxu0 %v706
      %v790 = vpop.f32.mrf.mxu0
      %v791 = vadd.f32 0.0, %v790
      %v792 = vpop.f32.mrf.mxu0
      %793 = vdwg.mxu0
      %794 = vmatpush.bf16.msra.mxu0 0
      %795 = vmatpush.bf16.msra.mxu0 0
      %796 = vmatpush.bf16.msra.mxu0 0
      %797 = vmatpush.bf16.msra.mxu0 0
      %798 = vmatpush.bf16.msra.mxu0 0
      %799 = vmatpush.bf16.msra.mxu0 0
      %800 = vmatpush.bf16.msra.mxu0 0
      %801 = vmatpush.bf16.msra.mxu0 %v724
      %802 = vmatmul.bf16.gmra.mxu0 %v706
      %v803 = vpop.f32.mrf.mxu0
      %v804 = vadd.f32 0.0, %v803
      %v805 = vpop.f32.mrf.mxu0
      %806 = vdwg.mxu0
      %807 = vmatpush.bf16.msra.mxu0 0
      %808 = vmatpush.bf16.msra.mxu0 0
      %809 = vmatpush.bf16.msra.mxu0 0
      %810 = vmatpush.bf16.msra.mxu0 0
      %811 = vmatpush.bf16.msra.mxu0 0
      %812 = vmatpush.bf16.msra.mxu0 0
      %813 = vmatpush.bf16.msra.mxu0 0
      %814 = vmatpush.bf16.msra.mxu0 %v727
      %815 = vmatmul.bf16.gmra.mxu0 %v706
      %v816 = vpop.f32.mrf.mxu0
      %v817 = vadd.f32 0.0, %v816
      %v818 = vpop.f32.mrf.mxu0
      %819 = vdwg.mxu0
      %v820 = vadd.f32 %v658, %v739
      %v821 = vadd.f32 %v659, %v752
      %v822 = vadd.f32 %v660, %v765
      %v823 = vadd.f32 %v661, %v778
      %v824 = vadd.f32 %v662, %v791
      %v825 = vadd.f32 %v663, %v804
      %v826 = vadd.f32 %v664, %v817
      %827 = vrot.lane.b32.xlu0 %v225, 112
      %v828 = vpop.permute.xlu0 %827
      %829 = vst [vmem:[#allocation1] ss:$4 sm:$0xff] %v220
      %s830 = scalar_lea.vmem [#allocation1], 32
      %831 = vst [vmem:[%s830] ss:$4 sm:$0xff] %v221
      %v832 = vld.sshfl [vmem:[#allocation1] sm:$0xff pattern:$0x73625140]
      %v834 = vld.sshfl [vmem:[#allocation1 + $0x8] sm:$0xff pattern:$0x73625140]
      %v836 = vld.sshfl [vmem:[#allocation1 + $0x10] sm:$0xff pattern:$0x73625140]
      %v838 = vld.sshfl [vmem:[#allocation1 + $0x18] sm:$0xff pattern:$0x73625140]
      %v840 = vld.sshfl [vmem:[#allocation1 + $0x20] sm:$0xff pattern:$0x73625140]
      %v842 = vld.sshfl [vmem:[#allocation1 + $0x28] sm:$0xff pattern:$0x73625140]
      %v844 = vld.sshfl [vmem:[#allocation1 + $0x30] sm:$0xff pattern:$0x73625140]
      %846 = vrot.lane.b32.xlu0 %v832, 117
      %v847 = vpop.permute.xlu0 %846
      %848 = vrot.lane.b32.xlu0 %v834, 117
      %v849 = vpop.permute.xlu0 %848
      %850 = vrot.lane.b32.xlu0 %v836, 117
      %v851 = vpop.permute.xlu0 %850
      %852 = vrot.lane.b32.xlu0 %v838, 117
      %v853 = vpop.permute.xlu0 %852
      %854 = vrot.lane.b32.xlu0 %v840, 117
      %v855 = vpop.permute.xlu0 %854
      %856 = vrot.lane.b32.xlu0 %v842, 117
      %v857 = vpop.permute.xlu0 %856
      %858 = vrot.lane.b32.xlu0 %v844, 117
      %v859 = vpop.permute.xlu0 %858
      %vm860 = vcmask 957440
      %v861 = vsel %vm860, %v847, %v849
      %v862 = vsel %vm860, %v849, %v851
      %v863 = vsel %vm860, %v851, %v853
      %v864 = vsel %vm860, %v853, %v855
      %v865 = vsel %vm860, %v855, %v857
      %v866 = vsel %vm860, %v857, %v859
      %v868 = vsel %vm268, %v828, 0
      %v871 = vsel %vm272, %v861, 0
      %v874 = vsel %vm272, %v862, 0
      %v877 = vsel %vm272, %v863, 0
      %v880 = vsel %vm272, %v864, 0
      %v883 = vsel %vm272, %v865, 0
      %v886 = vsel %vm272, %v866, 0
      %v889 = vsel %vm272, %v859, 0
      %891 = vmatpush.bf16.msra.mxu0 0
      %892 = vmatpush.bf16.msra.mxu0 0
      %893 = vmatpush.bf16.msra.mxu0 0
      %894 = vmatpush.bf16.msra.mxu0 0
      %895 = vmatpush.bf16.msra.mxu0 0
      %896 = vmatpush.bf16.msra.mxu0 0
      %897 = vmatpush.bf16.msra.mxu0 0
      %898 = vmatpush.bf16.msra.mxu0 %v871
      %899 = vmatmul.bf16.gmra.mxu0 %v868
      %v900 = vpop.f32.mrf.mxu0
      %v901 = vadd.f32 0.0, %v900
      %v902 = vpop.f32.mrf.mxu0
      %903 = vdwg.mxu0
      %904 = vmatpush.bf16.msra.mxu0 0
      %905 = vmatpush.bf16.msra.mxu0 0
      %906 = vmatpush.bf16.msra.mxu0 0
      %907 = vmatpush.bf16.msra.mxu0 0
      %908 = vmatpush.bf16.msra.mxu0 0
      %909 = vmatpush.bf16.msra.mxu0 0
      %910 = vmatpush.bf16.msra.mxu0 0
      %911 = vmatpush.bf16.msra.mxu0 %v874
      %912 = vmatmul.bf16.gmra.mxu0 %v868
      %v913 = vpop.f32.mrf.mxu0
      %v914 = vadd.f32 0.0, %v913
      %v915 = vpop.f32.mrf.mxu0
      %916 = vdwg.mxu0
      %917 = vmatpush.bf16.msra.mxu0 0
      %918 = vmatpush.bf16.msra.mxu0 0
      %919 = vmatpush.bf16.msra.mxu0 0
      %920 = vmatpush.bf16.msra.mxu0 0
      %921 = vmatpush.bf16.msra.mxu0 0
      %922 = vmatpush.bf16.msra.mxu0 0
      %923 = vmatpush.bf16.msra.mxu0 0
      %924 = vmatpush.bf16.msra.mxu0 %v877
      %925 = vmatmul.bf16.gmra.mxu0 %v868
      %v926 = vpop.f32.mrf.mxu0
      %v927 = vadd.f32 0.0, %v926
      %v928 = vpop.f32.mrf.mxu0
      %929 = vdwg.mxu0
      %930 = vmatpush.bf16.msra.mxu0 0
      %931 = vmatpush.bf16.msra.mxu0 0
      %932 = vmatpush.bf16.msra.mxu0 0
      %933 = vmatpush.bf16.msra.mxu0 0
      %934 = vmatpush.bf16.msra.mxu0 0
      %935 = vmatpush.bf16.msra.mxu0 0
      %936 = vmatpush.bf16.msra.mxu0 0
      %937 = vmatpush.bf16.msra.mxu0 %v880
      %938 = vmatmul.bf16.gmra.mxu0 %v868
      %v939 = vpop.f32.mrf.mxu0
      %v940 = vadd.f32 0.0, %v939
      %v941 = vpop.f32.mrf.mxu0
      %942 = vdwg.mxu0
      %943 = vmatpush.bf16.msra.mxu0 0
      %944 = vmatpush.bf16.msra.mxu0 0
      %945 = vmatpush.bf16.msra.mxu0 0
      %946 = vmatpush.bf16.msra.mxu0 0
      %947 = vmatpush.bf16.msra.mxu0 0
      %948 = vmatpush.bf16.msra.mxu0 0
      %949 = vmatpush.bf16.msra.mxu0 0
      %950 = vmatpush.bf16.msra.mxu0 %v883
      %951 = vmatmul.bf16.gmra.mxu0 %v868
      %v952 = vpop.f32.mrf.mxu0
      %v953 = vadd.f32 0.0, %v952
      %v954 = vpop.f32.mrf.mxu0
      %955 = vdwg.mxu0
      %956 = vmatpush.bf16.msra.mxu0 0
      %957 = vmatpush.bf16.msra.mxu0 0
      %958 = vmatpush.bf16.msra.mxu0 0
      %959 = vmatpush.bf16.msra.mxu0 0
      %960 = vmatpush.bf16.msra.mxu0 0
      %961 = vmatpush.bf16.msra.mxu0 0
      %962 = vmatpush.bf16.msra.mxu0 0
      %963 = vmatpush.bf16.msra.mxu0 %v886
      %964 = vmatmul.bf16.gmra.mxu0 %v868
      %v965 = vpop.f32.mrf.mxu0
      %v966 = vadd.f32 0.0, %v965
      %v967 = vpop.f32.mrf.mxu0
      %968 = vdwg.mxu0
      %969 = vmatpush.bf16.msra.mxu0 0
      %970 = vmatpush.bf16.msra.mxu0 0
      %971 = vmatpush.bf16.msra.mxu0 0
      %972 = vmatpush.bf16.msra.mxu0 0
      %973 = vmatpush.bf16.msra.mxu0 0
      %974 = vmatpush.bf16.msra.mxu0 0
      %975 = vmatpush.bf16.msra.mxu0 0
      %976 = vmatpush.bf16.msra.mxu0 %v889
      %977 = vmatmul.bf16.gmra.mxu0 %v868
      %v978 = vpop.f32.mrf.mxu0
      %v979 = vadd.f32 0.0, %v978
      %v980 = vpop.f32.mrf.mxu0
      %981 = vdwg.mxu0
      %v982 = vadd.f32 %v820, %v901
      %v983 = vadd.f32 %v821, %v914
      %v984 = vadd.f32 %v822, %v927
      %v985 = vadd.f32 %v823, %v940
      %v986 = vadd.f32 %v824, %v953
      %v987 = vadd.f32 %v825, %v966
      %v988 = vadd.f32 %v826, %v979
      %989 = vrot.lane.b32.xlu0 %v225, 108
      %v990 = vpop.permute.xlu0 %989
      %991 = vst [vmem:[#allocation1] ss:$4 sm:$0xff] %v220
      %s992 = scalar_lea.vmem [#allocation1], 32
      %993 = vst [vmem:[%s992] ss:$4 sm:$0xff] %v221
      %v994 = vld.sshfl [vmem:[#allocation1] sm:$0xff pattern:$0x73625140]
      %v996 = vld.sshfl [vmem:[#allocation1 + $0x8] sm:$0xff pattern:$0x73625140]
      %v998 = vld.sshfl [vmem:[#allocation1 + $0x10] sm:$0xff pattern:$0x73625140]
      %v1000 = vld.sshfl [vmem:[#allocation1 + $0x18] sm:$0xff pattern:$0x73625140]
      %v1002 = vld.sshfl [vmem:[#allocation1 + $0x20] sm:$0xff pattern:$0x73625140]
      %v1004 = vld.sshfl [vmem:[#allocation1 + $0x28] sm:$0xff pattern:$0x73625140]
      %v1006 = vld.sshfl [vmem:[#allocation1 + $0x30] sm:$0xff pattern:$0x73625140]
      %1008 = vrot.lane.b32.xlu0 %v994, 116
      %v1009 = vpop.permute.xlu0 %1008
      %1010 = vrot.lane.b32.xlu0 %v996, 116
      %v1011 = vpop.permute.xlu0 %1010
      %1012 = vrot.lane.b32.xlu0 %v998, 116
      %v1013 = vpop.permute.xlu0 %1012
      %1014 = vrot.lane.b32.xlu0 %v1000, 116
      %v1015 = vpop.permute.xlu0 %1014
      %1016 = vrot.lane.b32.xlu0 %v1002, 116
      %v1017 = vpop.permute.xlu0 %1016
      %1018 = vrot.lane.b32.xlu0 %v1004, 116
      %v1019 = vpop.permute.xlu0 %1018
      %1020 = vrot.lane.b32.xlu0 %v1006, 116
      %v1021 = vpop.permute.xlu0 %1020
      %vm1022 = vcmask 949248
      %v1023 = vsel %vm1022, %v1009, %v1011
      %v1024 = vsel %vm1022, %v1011, %v1013
      %v1025 = vsel %vm1022, %v1013, %v1015
      %v1026 = vsel %vm1022, %v1015, %v1017
      %v1027 = vsel %vm1022, %v1017, %v1019
      %v1028 = vsel %vm1022, %v1019, %v1021
      %v1030 = vsel %vm268, %v990, 0
      %v1033 = vsel %vm272, %v1023, 0
      %v1036 = vsel %vm272, %v1024, 0
      %v1039 = vsel %vm272, %v1025, 0
      %v1042 = vsel %vm272, %v1026, 0
      %v1045 = vsel %vm272, %v1027, 0
      %v1048 = vsel %vm272, %v1028, 0
      %v1051 = vsel %vm272, %v1021, 0
      %1053 = vmatpush.bf16.msra.mxu0 0
      %1054 = vmatpush.bf16.msra.mxu0 0
      %1055 = vmatpush.bf16.msra.mxu0 0
      %1056 = vmatpush.bf16.msra.mxu0 0
      %1057 = vmatpush.bf16.msra.mxu0 0
      %1058 = vmatpush.bf16.msra.mxu0 0
      %1059 = vmatpush.bf16.msra.mxu0 0
      %1060 = vmatpush.bf16.msra.mxu0 %v1033
      %1061 = vmatmul.bf16.gmra.mxu0 %v1030
      %v1062 = vpop.f32.mrf.mxu0
      %v1063 = vadd.f32 0.0, %v1062
      %v1064 = vpop.f32.mrf.mxu0
      %1065 = vdwg.mxu0
      %1066 = vmatpush.bf16.msra.mxu0 0
      %1067 = vmatpush.bf16.msra.mxu0 0
      %1068 = vmatpush.bf16.msra.mxu0 0
      %1069 = vmatpush.bf16.msra.mxu0 0
      %1070 = vmatpush.bf16.msra.mxu0 0
      %1071 = vmatpush.bf16.msra.mxu0 0
      %1072 = vmatpush.bf16.msra.mxu0 0
      %1073 = vmatpush.bf16.msra.mxu0 %v1036
      %1074 = vmatmul.bf16.gmra.mxu0 %v1030
      %v1075 = vpop.f32.mrf.mxu0
      %v1076 = vadd.f32 0.0, %v1075
      %v1077 = vpop.f32.mrf.mxu0
      %1078 = vdwg.mxu0
      %1079 = vmatpush.bf16.msra.mxu0 0
      %1080 = vmatpush.bf16.msra.mxu0 0
      %1081 = vmatpush.bf16.msra.mxu0 0
      %1082 = vmatpush.bf16.msra.mxu0 0
      %1083 = vmatpush.bf16.msra.mxu0 0
      %1084 = vmatpush.bf16.msra.mxu0 0
      %1085 = vmatpush.bf16.msra.mxu0 0
      %1086 = vmatpush.bf16.msra.mxu0 %v1039
      %1087 = vmatmul.bf16.gmra.mxu0 %v1030
      %v1088 = vpop.f32.mrf.mxu0
      %v1089 = vadd.f32 0.0, %v1088
      %v1090 = vpop.f32.mrf.mxu0
      %1091 = vdwg.mxu0
      %1092 = vmatpush.bf16.msra.mxu0 0
      %1093 = vmatpush.bf16.msra.mxu0 0
      %1094 = vmatpush.bf16.msra.mxu0 0
      %1095 = vmatpush.bf16.msra.mxu0 0
      %1096 = vmatpush.bf16.msra.mxu0 0
      %1097 = vmatpush.bf16.msra.mxu0 0
      %1098 = vmatpush.bf16.msra.mxu0 0
      %1099 = vmatpush.bf16.msra.mxu0 %v1042
      %1100 = vmatmul.bf16.gmra.mxu0 %v1030
      %v1101 = vpop.f32.mrf.mxu0
      %v1102 = vadd.f32 0.0, %v1101
      %v1103 = vpop.f32.mrf.mxu0
      %1104 = vdwg.mxu0
      %1105 = vmatpush.bf16.msra.mxu0 0
      %1106 = vmatpush.bf16.msra.mxu0 0
      %1107 = vmatpush.bf16.msra.mxu0 0
      %1108 = vmatpush.bf16.msra.mxu0 0
      %1109 = vmatpush.bf16.msra.mxu0 0
      %1110 = vmatpush.bf16.msra.mxu0 0
      %1111 = vmatpush.bf16.msra.mxu0 0
      %1112 = vmatpush.bf16.msra.mxu0 %v1045
      %1113 = vmatmul.bf16.gmra.mxu0 %v1030
      %v1114 = vpop.f32.mrf.mxu0
      %v1115 = vadd.f32 0.0, %v1114
      %v1116 = vpop.f32.mrf.mxu0
      %1117 = vdwg.mxu0
      %1118 = vmatpush.bf16.msra.mxu0 0
      %1119 = vmatpush.bf16.msra.mxu0 0
      %1120 = vmatpush.bf16.msra.mxu0 0
      %1121 = vmatpush.bf16.msra.mxu0 0
      %1122 = vmatpush.bf16.msra.mxu0 0
      %1123 = vmatpush.bf16.msra.mxu0 0
      %1124 = vmatpush.bf16.msra.mxu0 0
      %1125 = vmatpush.bf16.msra.mxu0 %v1048
      %1126 = vmatmul.bf16.gmra.mxu0 %v1030
      %v1127 = vpop.f32.mrf.mxu0
      %v1128 = vadd.f32 0.0, %v1127
      %v1129 = vpop.f32.mrf.mxu0
      %1130 = vdwg.mxu0
      %1131 = vmatpush.bf16.msra.mxu0 0
      %1132 = vmatpush.bf16.msra.mxu0 0
      %1133 = vmatpush.bf16.msra.mxu0 0
      %1134 = vmatpush.bf16.msra.mxu0 0
      %1135 = vmatpush.bf16.msra.mxu0 0
      %1136 = vmatpush.bf16.msra.mxu0 0
      %1137 = vmatpush.bf16.msra.mxu0 0
      %1138 = vmatpush.bf16.msra.mxu0 %v1051
      %1139 = vmatmul.bf16.gmra.mxu0 %v1030
      %v1140 = vpop.f32.mrf.mxu0
      %v1141 = vadd.f32 0.0, %v1140
      %v1142 = vpop.f32.mrf.mxu0
      %1143 = vdwg.mxu0
      %v1144 = vadd.f32 %v982, %v1063
      %v1145 = vadd.f32 %v983, %v1076
      %v1146 = vadd.f32 %v984, %v1089
      %v1147 = vadd.f32 %v985, %v1102
      %v1148 = vadd.f32 %v986, %v1115
      %v1149 = vadd.f32 %v987, %v1128
      %v1150 = vadd.f32 %v988, %v1141
      %1151 = vrot.lane.b32.xlu0 %v225, 104
      %v1152 = vpop.permute.xlu0 %1151
      %1153 = vst [vmem:[#allocation1] ss:$4 sm:$0xff] %v220
      %s1154 = scalar_lea.vmem [#allocation1], 32
      %1155 = vst [vmem:[%s1154] ss:$4 sm:$0xff] %v221
      %v1156 = vld.sshfl [vmem:[#allocation1] sm:$0xff pattern:$0x73625140]
      %v1158 = vld.sshfl [vmem:[#allocation1 + $0x8] sm:$0xff pattern:$0x73625140]
      %v1160 = vld.sshfl [vmem:[#allocation1 + $0x10] sm:$0xff pattern:$0x73625140]
      %v1162 = vld.sshfl [vmem:[#allocation1 + $0x18] sm:$0xff pattern:$0x73625140]
      %v1164 = vld.sshfl [vmem:[#allocation1 + $0x20] sm:$0xff pattern:$0x73625140]
      %v1166 = vld.sshfl [vmem:[#allocation1 + $0x28] sm:$0xff pattern:$0x73625140]
      %v1168 = vld.sshfl [vmem:[#allocation1 + $0x30] sm:$0xff pattern:$0x73625140]
      %1170 = vrot.lane.b32.xlu0 %v1156, 108
      %v1171 = vpop.permute.xlu0 %1170
      %1172 = vrot.lane.b32.xlu0 %v1158, 108
      %v1173 = vpop.permute.xlu0 %1172
      %1174 = vrot.lane.b32.xlu0 %v1160, 108
      %v1175 = vpop.permute.xlu0 %1174
      %1176 = vrot.lane.b32.xlu0 %v1162, 108
      %v1177 = vpop.permute.xlu0 %1176
      %1178 = vrot.lane.b32.xlu0 %v1164, 108
      %v1179 = vpop.permute.xlu0 %1178
      %1180 = vrot.lane.b32.xlu0 %v1166, 108
      %v1181 = vpop.permute.xlu0 %1180
      %1182 = vrot.lane.b32.xlu0 %v1168, 108
      %v1183 = vpop.permute.xlu0 %1182
      %vm1184 = vcmask 883712
      %v1185 = vsel %vm1184, %v1171, %v1173
      %v1186 = vsel %vm1184, %v1173, %v1175
      %v1187 = vsel %vm1184, %v1175, %v1177
      %v1188 = vsel %vm1184, %v1177, %v1179
      %v1189 = vsel %vm1184, %v1179, %v1181
      %v1190 = vsel %vm1184, %v1181, %v1183
      %v1192 = vsel %vm268, %v1152, 0
      %v1195 = vsel %vm272, %v1185, 0
      %v1198 = vsel %vm272, %v1186, 0
      %v1201 = vsel %vm272, %v1187, 0
      %v1204 = vsel %vm272, %v1188, 0
      %v1207 = vsel %vm272, %v1189, 0
      %v1210 = vsel %vm272, %v1190, 0
      %v1213 = vsel %vm272, %v1183, 0
      %1215 = vmatpush.bf16.msra.mxu0 0
      %1216 = vmatpush.bf16.msra.mxu0 0
      %1217 = vmatpush.bf16.msra.mxu0 0
      %1218 = vmatpush.bf16.msra.mxu0 0
      %1219 = vmatpush.bf16.msra.mxu0 0
      %1220 = vmatpush.bf16.msra.mxu0 0
      %1221 = vmatpush.bf16.msra.mxu0 0
      %1222 = vmatpush.bf16.msra.mxu0 %v1195
      %1223 = vmatmul.bf16.gmra.mxu0 %v1192
      %v1224 = vpop.f32.mrf.mxu0
      %v1225 = vadd.f32 0.0, %v1224
      %v1226 = vpop.f32.mrf.mxu0
      %1227 = vdwg.mxu0
      %1228 = vmatpush.bf16.msra.mxu0 0
      %1229 = vmatpush.bf16.msra.mxu0 0
      %1230 = vmatpush.bf16.msra.mxu0 0
      %1231 = vmatpush.bf16.msra.mxu0 0
      %1232 = vmatpush.bf16.msra.mxu0 0
      %1233 = vmatpush.bf16.msra.mxu0 0
      %1234 = vmatpush.bf16.msra.mxu0 0
      %1235 = vmatpush.bf16.msra.mxu0 %v1198
      %1236 = vmatmul.bf16.gmra.mxu0 %v1192
      %v1237 = vpop.f32.mrf.mxu0
      %v1238 = vadd.f32 0.0, %v1237
      %v1239 = vpop.f32.mrf.mxu0
      %1240 = vdwg.mxu0
      %1241 = vmatpush.bf16.msra.mxu0 0
      %1242 = vmatpush.bf16.msra.mxu0 0
      %1243 = vmatpush.bf16.msra.mxu0 0
      %1244 = vmatpush.bf16.msra.mxu0 0
      %1245 = vmatpush.bf16.msra.mxu0 0
      %1246 = vmatpush.bf16.msra.mxu0 0
      %1247 = vmatpush.bf16.msra.mxu0 0
      %1248 = vmatpush.bf16.msra.mxu0 %v1201
      %1249 = vmatmul.bf16.gmra.mxu0 %v1192
      %v1250 = vpop.f32.mrf.mxu0
      %v1251 = vadd.f32 0.0, %v1250
      %v1252 = vpop.f32.mrf.mxu0
      %1253 = vdwg.mxu0
      %1254 = vmatpush.bf16.msra.mxu0 0
      %1255 = vmatpush.bf16.msra.mxu0 0
      %1256 = vmatpush.bf16.msra.mxu0 0
      %1257 = vmatpush.bf16.msra.mxu0 0
      %1258 = vmatpush.bf16.msra.mxu0 0
      %1259 = vmatpush.bf16.msra.mxu0 0
      %1260 = vmatpush.bf16.msra.mxu0 0
      %1261 = vmatpush.bf16.msra.mxu0 %v1204
      %1262 = vmatmul.bf16.gmra.mxu0 %v1192
      %v1263 = vpop.f32.mrf.mxu0
      %v1264 = vadd.f32 0.0, %v1263
      %v1265 = vpop.f32.mrf.mxu0
      %1266 = vdwg.mxu0
      %1267 = vmatpush.bf16.msra.mxu0 0
      %1268 = vmatpush.bf16.msra.mxu0 0
      %1269 = vmatpush.bf16.msra.mxu0 0
      %1270 = vmatpush.bf16.msra.mxu0 0
      %1271 = vmatpush.bf16.msra.mxu0 0
      %1272 = vmatpush.bf16.msra.mxu0 0
      %1273 = vmatpush.bf16.msra.mxu0 0
      %1274 = vmatpush.bf16.msra.mxu0 %v1207
      %1275 = vmatmul.bf16.gmra.mxu0 %v1192
      %v1276 = vpop.f32.mrf.mxu0
      %v1277 = vadd.f32 0.0, %v1276
      %v1278 = vpop.f32.mrf.mxu0
      %1279 = vdwg.mxu0
      %1280 = vmatpush.bf16.msra.mxu0 0
      %1281 = vmatpush.bf16.msra.mxu0 0
      %1282 = vmatpush.bf16.msra.mxu0 0
      %1283 = vmatpush.bf16.msra.mxu0 0
      %1284 = vmatpush.bf16.msra.mxu0 0
      %1285 = vmatpush.bf16.msra.mxu0 0
      %1286 = vmatpush.bf16.msra.mxu0 0
      %1287 = vmatpush.bf16.msra.mxu0 %v1210
      %1288 = vmatmul.bf16.gmra.mxu0 %v1192
      %v1289 = vpop.f32.mrf.mxu0
      %v1290 = vadd.f32 0.0, %v1289
      %v1291 = vpop.f32.mrf.mxu0
      %1292 = vdwg.mxu0
      %1293 = vmatpush.bf16.msra.mxu0 0
      %1294 = vmatpush.bf16.msra.mxu0 0
      %1295 = vmatpush.bf16.msra.mxu0 0
      %1296 = vmatpush.bf16.msra.mxu0 0
      %1297 = vmatpush.bf16.msra.mxu0 0
      %1298 = vmatpush.bf16.msra.mxu0 0
      %1299 = vmatpush.bf16.msra.mxu0 0
      %1300 = vmatpush.bf16.msra.mxu0 %v1213
      %1301 = vmatmul.bf16.gmra.mxu0 %v1192
      %v1302 = vpop.f32.mrf.mxu0
      %v1303 = vadd.f32 0.0, %v1302
      %v1304 = vpop.f32.mrf.mxu0
      %1305 = vdwg.mxu0
      %v1306 = vadd.f32 %v1144, %v1225
      %v1307 = vadd.f32 %v1145, %v1238
      %v1308 = vadd.f32 %v1146, %v1251
      %v1309 = vadd.f32 %v1147, %v1264
      %v1310 = vadd.f32 %v1148, %v1277
      %v1311 = vadd.f32 %v1149, %v1290
      %v1312 = vadd.f32 %v1150, %v1303
      %1313 = vrot.lane.b32.xlu0 %v225, 100
      %v1314 = vpop.permute.xlu0 %1313
      %1315 = vst [vmem:[#allocation1] ss:$4 sm:$0xff] %v220
      %s1316 = scalar_lea.vmem [#allocation1], 32
      %1317 = vst [vmem:[%s1316] ss:$4 sm:$0xff] %v221
      %v1318 = vld.sshfl [vmem:[#allocation1] sm:$0xff pattern:$0x73625140]
      %v1320 = vld.sshfl [vmem:[#allocation1 + $0x8] sm:$0xff pattern:$0x73625140]
      %v1322 = vld.sshfl [vmem:[#allocation1 + $0x10] sm:$0xff pattern:$0x73625140]
      %v1324 = vld.sshfl [vmem:[#allocation1 + $0x18] sm:$0xff pattern:$0x73625140]
      %v1326 = vld.sshfl [vmem:[#allocation1 + $0x20] sm:$0xff pattern:$0x73625140]
      %v1328 = vld.sshfl [vmem:[#allocation1 + $0x28] sm:$0xff pattern:$0x73625140]
      %v1330 = vld.sshfl [vmem:[#allocation1 + $0x30] sm:$0xff pattern:$0x73625140]
      %1332 = vrot.lane.b32.xlu0 %v1318, 107
      %v1333 = vpop.permute.xlu0 %1332
      %1334 = vrot.lane.b32.xlu0 %v1320, 107
      %v1335 = vpop.permute.xlu0 %1334
      %1336 = vrot.lane.b32.xlu0 %v1322, 107
      %v1337 = vpop.permute.xlu0 %1336
      %1338 = vrot.lane.b32.xlu0 %v1324, 107
      %v1339 = vpop.permute.xlu0 %1338
      %1340 = vrot.lane.b32.xlu0 %v1326, 107
      %v1341 = vpop.permute.xlu0 %1340
      %1342 = vrot.lane.b32.xlu0 %v1328, 107
      %v1343 = vpop.permute.xlu0 %1342
      %1344 = vrot.lane.b32.xlu0 %v1330, 107
      %v1345 = vpop.permute.xlu0 %1344
      %vm1346 = vcmask 875520
      %v1347 = vsel %vm1346, %v1333, %v1335
      %v1348 = vsel %vm1346, %v1335, %v1337
      %v1349 = vsel %vm1346, %v1337, %v1339
      %v1350 = vsel %vm1346, %v1339, %v1341
      %v1351 = vsel %vm1346, %v1341, %v1343
      %v1352 = vsel %vm1346, %v1343, %v1345
      %v1354 = vsel %vm268, %v1314, 0
      %v1357 = vsel %vm272, %v1347, 0
      %v1360 = vsel %vm272, %v1348, 0
      %v1363 = vsel %vm272, %v1349, 0
      %v1366 = vsel %vm272, %v1350, 0
      %v1369 = vsel %vm272, %v1351, 0
      %v1372 = vsel %vm272, %v1352, 0
      %v1375 = vsel %vm272, %v1345, 0
      %1377 = vmatpush.bf16.msra.mxu0 0
      %1378 = vmatpush.bf16.msra.mxu0 0
      %1379 = vmatpush.bf16.msra.mxu0 0
      %1380 = vmatpush.bf16.msra.mxu0 0
      %1381 = vmatpush.bf16.msra.mxu0 0
      %1382 = vmatpush.bf16.msra.mxu0 0
      %1383 = vmatpush.bf16.msra.mxu0 0
      %1384 = vmatpush.bf16.msra.mxu0 %v1357
      %1385 = vmatmul.bf16.gmra.mxu0 %v1354
      %v1386 = vpop.f32.mrf.mxu0
      %v1387 = vadd.f32 0.0, %v1386
      %v1388 = vpop.f32.mrf.mxu0
      %1389 = vdwg.mxu0
      %1390 = vmatpush.bf16.msra.mxu0 0
      %1391 = vmatpush.bf16.msra.mxu0 0
      %1392 = vmatpush.bf16.msra.mxu0 0
      %1393 = vmatpush.bf16.msra.mxu0 0
      %1394 = vmatpush.bf16.msra.mxu0 0
      %1395 = vmatpush.bf16.msra.mxu0 0
      %1396 = vmatpush.bf16.msra.mxu0 0
      %1397 = vmatpush.bf16.msra.mxu0 %v1360
      %1398 = vmatmul.bf16.gmra.mxu0 %v1354
      %v1399 = vpop.f32.mrf.mxu0
      %v1400 = vadd.f32 0.0, %v1399
      %v1401 = vpop.f32.mrf.mxu0
      %1402 = vdwg.mxu0
      %1403 = vmatpush.bf16.msra.mxu0 0
      %1404 = vmatpush.bf16.msra.mxu0 0
      %1405 = vmatpush.bf16.msra.mxu0 0
      %1406 = vmatpush.bf16.msra.mxu0 0
      %1407 = vmatpush.bf16.msra.mxu0 0
      %1408 = vmatpush.bf16.msra.mxu0 0
      %1409 = vmatpush.bf16.msra.mxu0 0
      %1410 = vmatpush.bf16.msra.mxu0 %v1363
      %1411 = vmatmul.bf16.gmra.mxu0 %v1354
      %v1412 = vpop.f32.mrf.mxu0
      %v1413 = vadd.f32 0.0, %v1412
      %v1414 = vpop.f32.mrf.mxu0
      %1415 = vdwg.mxu0
      %1416 = vmatpush.bf16.msra.mxu0 0
      %1417 = vmatpush.bf16.msra.mxu0 0
      %1418 = vmatpush.bf16.msra.mxu0 0
      %1419 = vmatpush.bf16.msra.mxu0 0
      %1420 = vmatpush.bf16.msra.mxu0 0
      %1421 = vmatpush.bf16.msra.mxu0 0
      %1422 = vmatpush.bf16.msra.mxu0 0
      %1423 = vmatpush.bf16.msra.mxu0 %v1366
      %1424 = vmatmul.bf16.gmra.mxu0 %v1354
      %v1425 = vpop.f32.mrf.mxu0
      %v1426 = vadd.f32 0.0, %v1425
      %v1427 = vpop.f32.mrf.mxu0
      %1428 = vdwg.mxu0
      %1429 = vmatpush.bf16.msra.mxu0 0
      %1430 = vmatpush.bf16.msra.mxu0 0
      %1431 = vmatpush.bf16.msra.mxu0 0
      %1432 = vmatpush.bf16.msra.mxu0 0
      %1433 = vmatpush.bf16.msra.mxu0 0
      %1434 = vmatpush.bf16.msra.mxu0 0
      %1435 = vmatpush.bf16.msra.mxu0 0
      %1436 = vmatpush.bf16.msra.mxu0 %v1369
      %1437 = vmatmul.bf16.gmra.mxu0 %v1354
      %v1438 = vpop.f32.mrf.mxu0
      %v1439 = vadd.f32 0.0, %v1438
      %v1440 = vpop.f32.mrf.mxu0
      %1441 = vdwg.mxu0
      %1442 = vmatpush.bf16.msra.mxu0 0
      %1443 = vmatpush.bf16.msra.mxu0 0
      %1444 = vmatpush.bf16.msra.mxu0 0
      %1445 = vmatpush.bf16.msra.mxu0 0
      %1446 = vmatpush.bf16.msra.mxu0 0
      %1447 = vmatpush.bf16.msra.mxu0 0
      %1448 = vmatpush.bf16.msra.mxu0 0
      %1449 = vmatpush.bf16.msra.mxu0 %v1372
      %1450 = vmatmul.bf16.gmra.mxu0 %v1354
      %v1451 = vpop.f32.mrf.mxu0
      %v1452 = vadd.f32 0.0, %v1451
      %v1453 = vpop.f32.mrf.mxu0
      %1454 = vdwg.mxu0
      %1455 = vmatpush.bf16.msra.mxu0 0
      %1456 = vmatpush.bf16.msra.mxu0 0
      %1457 = vmatpush.bf16.msra.mxu0 0
      %1458 = vmatpush.bf16.msra.mxu0 0
      %1459 = vmatpush.bf16.msra.mxu0 0
      %1460 = vmatpush.bf16.msra.mxu0 0
      %1461 = vmatpush.bf16.msra.mxu0 0
      %1462 = vmatpush.bf16.msra.mxu0 %v1375
      %1463 = vmatmul.bf16.gmra.mxu0 %v1354
      %v1464 = vpop.f32.mrf.mxu0
      %v1465 = vadd.f32 0.0, %v1464
      %v1466 = vpop.f32.mrf.mxu0
      %1467 = vdwg.mxu0
      %v1468 = vadd.f32 %v1306, %v1387
      %v1469 = vadd.f32 %v1307, %v1400
      %v1470 = vadd.f32 %v1308, %v1413
      %v1471 = vadd.f32 %v1309, %v1426
      %v1472 = vadd.f32 %v1310, %v1439
      %v1473 = vadd.f32 %v1311, %v1452
      %v1474 = vadd.f32 %v1312, %v1465
      %1475 = vrot.lane.b32.xlu0 %v225, 96
      %v1476 = vpop.permute.xlu0 %1475
      %1477 = vst [vmem:[#allocation1] ss:$4 sm:$0xff] %v220
      %s1478 = scalar_lea.vmem [#allocation1], 32
      %1479 = vst [vmem:[%s1478] ss:$4 sm:$0xff] %v221
      %v1480 = vld.sshfl [vmem:[#allocation1] sm:$0xff pattern:$0x73625140]
      %v1482 = vld.sshfl [vmem:[#allocation1 + $0x8] sm:$0xff pattern:$0x73625140]
      %v1484 = vld.sshfl [vmem:[#allocation1 + $0x10] sm:$0xff pattern:$0x73625140]
      %v1486 = vld.sshfl [vmem:[#allocation1 + $0x18] sm:$0xff pattern:$0x73625140]
      %v1488 = vld.sshfl [vmem:[#allocation1 + $0x20] sm:$0xff pattern:$0x73625140]
      %v1490 = vld.sshfl [vmem:[#allocation1 + $0x28] sm:$0xff pattern:$0x73625140]
      %v1492 = vld.sshfl [vmem:[#allocation1 + $0x30] sm:$0xff pattern:$0x73625140]
      %1494 = vrot.lane.b32.xlu0 %v1480, 106
      %v1495 = vpop.permute.xlu0 %1494
      %1496 = vrot.lane.b32.xlu0 %v1482, 106
      %v1497 = vpop.permute.xlu0 %1496
      %1498 = vrot.lane.b32.xlu0 %v1484, 106
      %v1499 = vpop.permute.xlu0 %1498
      %1500 = vrot.lane.b32.xlu0 %v1486, 106
      %v1501 = vpop.permute.xlu0 %1500
      %1502 = vrot.lane.b32.xlu0 %v1488, 106
      %v1503 = vpop.permute.xlu0 %1502
      %1504 = vrot.lane.b32.xlu0 %v1490, 106
      %v1505 = vpop.permute.xlu0 %1504
      %1506 = vrot.lane.b32.xlu0 %v1492, 106
      %v1507 = vpop.permute.xlu0 %1506
      %vm1508 = vcmask 867328
      %v1509 = vsel %vm1508, %v1495, %v1497
      %v1510 = vsel %vm1508, %v1497, %v1499
      %v1511 = vsel %vm1508, %v1499, %v1501
      %v1512 = vsel %vm1508, %v1501, %v1503
      %v1513 = vsel %vm1508, %v1503, %v1505
      %v1514 = vsel %vm1508, %v1505, %v1507
      %v1516 = vsel %vm268, %v1476, 0
      %v1519 = vsel %vm272, %v1509, 0
      %v1522 = vsel %vm272, %v1510, 0
      %v1525 = vsel %vm272, %v1511, 0
      %v1528 = vsel %vm272, %v1512, 0
      %v1531 = vsel %vm272, %v1513, 0
      %v1534 = vsel %vm272, %v1514, 0
      %v1537 = vsel %vm272, %v1507, 0
      %1539 = vmatpush.bf16.msra.mxu0 0
      %1540 = vmatpush.bf16.msra.mxu0 0
      %1541 = vmatpush.bf16.msra.mxu0 0
      %1542 = vmatpush.bf16.msra.mxu0 0
      %1543 = vmatpush.bf16.msra.mxu0 0
      %1544 = vmatpush.bf16.msra.mxu0 0
      %1545 = vmatpush.bf16.msra.mxu0 0
      %1546 = vmatpush.bf16.msra.mxu0 %v1519
      %1547 = vmatmul.bf16.gmra.mxu0 %v1516
      %v1548 = vpop.f32.mrf.mxu0
      %v1549 = vadd.f32 0.0, %v1548
      %v1550 = vpop.f32.mrf.mxu0
      %1551 = vdwg.mxu0
      %1552 = vmatpush.bf16.msra.mxu0 0
      %1553 = vmatpush.bf16.msra.mxu0 0
      %1554 = vmatpush.bf16.msra.mxu0 0
      %1555 = vmatpush.bf16.msra.mxu0 0
      %1556 = vmatpush.bf16.msra.mxu0 0
      %1557 = vmatpush.bf16.msra.mxu0 0
      %1558 = vmatpush.bf16.msra.mxu0 0
      %1559 = vmatpush.bf16.msra.mxu0 %v1522
      %1560 = vmatmul.bf16.gmra.mxu0 %v1516
      %v1561 = vpop.f32.mrf.mxu0
      %v1562 = vadd.f32 0.0, %v1561
      %v1563 = vpop.f32.mrf.mxu0
      %1564 = vdwg.mxu0
      %1565 = vmatpush.bf16.msra.mxu0 0
      %1566 = vmatpush.bf16.msra.mxu0 0
      %1567 = vmatpush.bf16.msra.mxu0 0
      %1568 = vmatpush.bf16.msra.mxu0 0
      %1569 = vmatpush.bf16.msra.mxu0 0
      %1570 = vmatpush.bf16.msra.mxu0 0
      %1571 = vmatpush.bf16.msra.mxu0 0
      %1572 = vmatpush.bf16.msra.mxu0 %v1525
      %1573 = vmatmul.bf16.gmra.mxu0 %v1516
      %v1574 = vpop.f32.mrf.mxu0
      %v1575 = vadd.f32 0.0, %v1574
      %v1576 = vpop.f32.mrf.mxu0
      %1577 = vdwg.mxu0
      %1578 = vmatpush.bf16.msra.mxu0 0
      %1579 = vmatpush.bf16.msra.mxu0 0
      %1580 = vmatpush.bf16.msra.mxu0 0
      %1581 = vmatpush.bf16.msra.mxu0 0
      %1582 = vmatpush.bf16.msra.mxu0 0
      %1583 = vmatpush.bf16.msra.mxu0 0
      %1584 = vmatpush.bf16.msra.mxu0 0
      %1585 = vmatpush.bf16.msra.mxu0 %v1528
      %1586 = vmatmul.bf16.gmra.mxu0 %v1516
      %v1587 = vpop.f32.mrf.mxu0
      %v1588 = vadd.f32 0.0, %v1587
      %v1589 = vpop.f32.mrf.mxu0
      %1590 = vdwg.mxu0
      %1591 = vmatpush.bf16.msra.mxu0 0
      %1592 = vmatpush.bf16.msra.mxu0 0
      %1593 = vmatpush.bf16.msra.mxu0 0
      %1594 = vmatpush.bf16.msra.mxu0 0
      %1595 = vmatpush.bf16.msra.mxu0 0
      %1596 = vmatpush.bf16.msra.mxu0 0
      %1597 = vmatpush.bf16.msra.mxu0 0
      %1598 = vmatpush.bf16.msra.mxu0 %v1531
      %1599 = vmatmul.bf16.gmra.mxu0 %v1516
      %v1600 = vpop.f32.mrf.mxu0
      %v1601 = vadd.f32 0.0, %v1600
      %v1602 = vpop.f32.mrf.mxu0
      %1603 = vdwg.mxu0
      %1604 = vmatpush.bf16.msra.mxu0 0
      %1605 = vmatpush.bf16.msra.mxu0 0
      %1606 = vmatpush.bf16.msra.mxu0 0
      %1607 = vmatpush.bf16.msra.mxu0 0
      %1608 = vmatpush.bf16.msra.mxu0 0
      %1609 = vmatpush.bf16.msra.mxu0 0
      %1610 = vmatpush.bf16.msra.mxu0 0
      %1611 = vmatpush.bf16.msra.mxu0 %v1534
      %1612 = vmatmul.bf16.gmra.mxu0 %v1516
      %v1613 = vpop.f32.mrf.mxu0
      %v1614 = vadd.f32 0.0, %v1613
      %v1615 = vpop.f32.mrf.mxu0
      %1616 = vdwg.mxu0
      %1617 = vmatpush.bf16.msra.mxu0 0
      %1618 = vmatpush.bf16.msra.mxu0 0
      %1619 = vmatpush.bf16.msra.mxu0 0
      %1620 = vmatpush.bf16.msra.mxu0 0
      %1621 = vmatpush.bf16.msra.mxu0 0
      %1622 = vmatpush.bf16.msra.mxu0 0
      %1623 = vmatpush.bf16.msra.mxu0 0
      %1624 = vmatpush.bf16.msra.mxu0 %v1537
      %1625 = vmatmul.bf16.gmra.mxu0 %v1516
      %v1626 = vpop.f32.mrf.mxu0
      %v1627 = vadd.f32 0.0, %v1626
      %v1628 = vpop.f32.mrf.mxu0
      %1629 = vdwg.mxu0
      %v1630 = vadd.f32 %v1468, %v1549
      %v1631 = vadd.f32 %v1469, %v1562
      %v1632 = vadd.f32 %v1470, %v1575
      %v1633 = vadd.f32 %v1471, %v1588
      %v1634 = vadd.f32 %v1472, %v1601
      %v1635 = vadd.f32 %v1473, %v1614
      %v1636 = vadd.f32 %v1474, %v1627
      %1637 = vrot.lane.b32.xlu0 %v225, 92
      %v1638 = vpop.permute.xlu0 %1637
      %1639 = vst [vmem:[#allocation1] ss:$4 sm:$0xff] %v220
      %s1640 = scalar_lea.vmem [#allocation1], 32
      %1641 = vst [vmem:[%s1640] ss:$4 sm:$0xff] %v221
      %v1642 = vld.sshfl [vmem:[#allocation1] sm:$0xff pattern:$0x73625140]
      %v1644 = vld.sshfl [vmem:[#allocation1 + $0x8] sm:$0xff pattern:$0x73625140]
      %v1646 = vld.sshfl [vmem:[#allocation1 + $0x10] sm:$0xff pattern:$0x73625140]
      %v1648 = vld.sshfl [vmem:[#allocation1 + $0x18] sm:$0xff pattern:$0x73625140]
      %v1650 = vld.sshfl [vmem:[#allocation1 + $0x20] sm:$0xff pattern:$0x73625140]
      %v1652 = vld.sshfl [vmem:[#allocation1 + $0x28] sm:$0xff pattern:$0x73625140]
      %v1654 = vld.sshfl [vmem:[#allocation1 + $0x30] sm:$0xff pattern:$0x73625140]
      %v1656 = vld.sshfl [vmem:[#allocation1 + $0x38] sm:$0xff pattern:$0x73625140]
      %1658 = vrot.lane.b32.xlu0 %v1642, 28
      %v1659 = vpop.permute.xlu0 %1658
      %1660 = vrot.lane.b32.xlu0 %v1644, 28
      %v1661 = vpop.permute.xlu0 %1660
      %1662 = vrot.lane.b32.xlu0 %v1646, 28
      %v1663 = vpop.permute.xlu0 %1662
      %1664 = vrot.lane.b32.xlu0 %v1648, 28
      %v1665 = vpop.permute.xlu0 %1664
      %1666 = vrot.lane.b32.xlu0 %v1650, 28
      %v1667 = vpop.permute.xlu0 %1666
      %1668 = vrot.lane.b32.xlu0 %v1652, 28
      %v1669 = vpop.permute.xlu0 %1668
      %1670 = vrot.lane.b32.xlu0 %v1654, 28
      %v1671 = vpop.permute.xlu0 %1670
      %1672 = vrot.lane.b32.xlu0 %v1656, 28
      %v1673 = vpop.permute.xlu0 %1672
      %vm1674 = vcmask 228352
      %v1675 = vsel %vm1674, %v1659, %v1661
      %v1676 = vsel %vm1674, %v1661, %v1663
      %v1677 = vsel %vm1674, %v1663, %v1665
      %v1678 = vsel %vm1674, %v1665, %v1667
      %v1679 = vsel %vm1674, %v1667, %v1669
      %v1680 = vsel %vm1674, %v1669, %v1671
      %v1681 = vsel %vm1674, %v1671, %v1673
      %v1683 = vsel %vm268, %v1638, 0
      %v1686 = vsel %vm272, %v1675, 0
      %v1689 = vsel %vm272, %v1676, 0
      %v1692 = vsel %vm272, %v1677, 0
      %v1695 = vsel %vm272, %v1678, 0
      %v1698 = vsel %vm272, %v1679, 0
      %v1701 = vsel %vm272, %v1680, 0
      %v1704 = vsel %vm272, %v1681, 0
      %1706 = vmatpush.bf16.msra.mxu0 0
      %1707 = vmatpush.bf16.msra.mxu0 0
      %1708 = vmatpush.bf16.msra.mxu0 0
      %1709 = vmatpush.bf16.msra.mxu0 0
      %1710 = vmatpush.bf16.msra.mxu0 0
      %1711 = vmatpush.bf16.msra.mxu0 0
      %1712 = vmatpush.bf16.msra.mxu0 0
      %1713 = vmatpush.bf16.msra.mxu0 %v1686
      %1714 = vmatmul.bf16.gmra.mxu0 %v1683
      %v1715 = vpop.f32.mrf.mxu0
      %v1716 = vadd.f32 0.0, %v1715
      %v1717 = vpop.f32.mrf.mxu0
      %1718 = vdwg.mxu0
      %1719 = vmatpush.bf16.msra.mxu0 0
      %1720 = vmatpush.bf16.msra.mxu0 0
      %1721 = vmatpush.bf16.msra.mxu0 0
      %1722 = vmatpush.bf16.msra.mxu0 0
      %1723 = vmatpush.bf16.msra.mxu0 0
      %1724 = vmatpush.bf16.msra.mxu0 0
      %1725 = vmatpush.bf16.msra.mxu0 0
      %1726 = vmatpush.bf16.msra.mxu0 %v1689
      %1727 = vmatmul.bf16.gmra.mxu0 %v1683
      %v1728 = vpop.f32.mrf.mxu0
      %v1729 = vadd.f32 0.0, %v1728
      %v1730 = vpop.f32.mrf.mxu0
      %1731 = vdwg.mxu0
      %1732 = vmatpush.bf16.msra.mxu0 0
      %1733 = vmatpush.bf16.msra.mxu0 0
      %1734 = vmatpush.bf16.msra.mxu0 0
      %1735 = vmatpush.bf16.msra.mxu0 0
      %1736 = vmatpush.bf16.msra.mxu0 0
      %1737 = vmatpush.bf16.msra.mxu0 0
      %1738 = vmatpush.bf16.msra.mxu0 0
      %1739 = vmatpush.bf16.msra.mxu0 %v1692
      %1740 = vmatmul.bf16.gmra.mxu0 %v1683
      %v1741 = vpop.f32.mrf.mxu0
      %v1742 = vadd.f32 0.0, %v1741
      %v1743 = vpop.f32.mrf.mxu0
      %1744 = vdwg.mxu0
      %1745 = vmatpush.bf16.msra.mxu0 0
      %1746 = vmatpush.bf16.msra.mxu0 0
      %1747 = vmatpush.bf16.msra.mxu0 0
      %1748 = vmatpush.bf16.msra.mxu0 0
      %1749 = vmatpush.bf16.msra.mxu0 0
      %1750 = vmatpush.bf16.msra.mxu0 0
      %1751 = vmatpush.bf16.msra.mxu0 0
      %1752 = vmatpush.bf16.msra.mxu0 %v1695
      %1753 = vmatmul.bf16.gmra.mxu0 %v1683
      %v1754 = vpop.f32.mrf.mxu0
      %v1755 = vadd.f32 0.0, %v1754
      %v1756 = vpop.f32.mrf.mxu0
      %1757 = vdwg.mxu0
      %1758 = vmatpush.bf16.msra.mxu0 0
      %1759 = vmatpush.bf16.msra.mxu0 0
      %1760 = vmatpush.bf16.msra.mxu0 0
      %1761 = vmatpush.bf16.msra.mxu0 0
      %1762 = vmatpush.bf16.msra.mxu0 0
      %1763 = vmatpush.bf16.msra.mxu0 0
      %1764 = vmatpush.bf16.msra.mxu0 0
      %1765 = vmatpush.bf16.msra.mxu0 %v1698
      %1766 = vmatmul.bf16.gmra.mxu0 %v1683
      %v1767 = vpop.f32.mrf.mxu0
      %v1768 = vadd.f32 0.0, %v1767
      %v1769 = vpop.f32.mrf.mxu0
      %1770 = vdwg.mxu0
      %1771 = vmatpush.bf16.msra.mxu0 0
      %1772 = vmatpush.bf16.msra.mxu0 0
      %1773 = vmatpush.bf16.msra.mxu0 0
      %1774 = vmatpush.bf16.msra.mxu0 0
      %1775 = vmatpush.bf16.msra.mxu0 0
      %1776 = vmatpush.bf16.msra.mxu0 0
      %1777 = vmatpush.bf16.msra.mxu0 0
      %1778 = vmatpush.bf16.msra.mxu0 %v1701
      %1779 = vmatmul.bf16.gmra.mxu0 %v1683
      %v1780 = vpop.f32.mrf.mxu0
      %v1781 = vadd.f32 0.0, %v1780
      %v1782 = vpop.f32.mrf.mxu0
      %1783 = vdwg.mxu0
      %1784 = vmatpush.bf16.msra.mxu0 0
      %1785 = vmatpush.bf16.msra.mxu0 0
      %1786 = vmatpush.bf16.msra.mxu0 0
      %1787 = vmatpush.bf16.msra.mxu0 0
      %1788 = vmatpush.bf16.msra.mxu0 0
      %1789 = vmatpush.bf16.msra.mxu0 0
      %1790 = vmatpush.bf16.msra.mxu0 0
      %1791 = vmatpush.bf16.msra.mxu0 %v1704
      %1792 = vmatmul.bf16.gmra.mxu0 %v1683
      %v1793 = vpop.f32.mrf.mxu0
      %v1794 = vadd.f32 0.0, %v1793
      %v1795 = vpop.f32.mrf.mxu0
      %1796 = vdwg.mxu0
      %v1797 = vadd.f32 %v1630, %v1716
      %v1798 = vadd.f32 %v1631, %v1729
      %v1799 = vadd.f32 %v1632, %v1742
      %v1800 = vadd.f32 %v1633, %v1755
      %v1801 = vadd.f32 %v1634, %v1768
      %v1802 = vadd.f32 %v1635, %v1781
      %v1803 = vadd.f32 %v1636, %v1794
      %1804 = vrot.lane.b32.xlu0 %v225, 88
      %v1805 = vpop.permute.xlu0 %1804
      %1806 = vst [vmem:[#allocation1] ss:$4 sm:$0xff] %v220
      %s1807 = scalar_lea.vmem [#allocation1], 32
      %1808 = vst [vmem:[%s1807] ss:$4 sm:$0xff] %v221
      %v1809 = vld.sshfl [vmem:[#allocation1] sm:$0xff pattern:$0x73625140]
      %v1811 = vld.sshfl [vmem:[#allocation1 + $0x8] sm:$0xff pattern:$0x73625140]
      %v1813 = vld.sshfl [vmem:[#allocation1 + $0x10] sm:$0xff pattern:$0x73625140]
      %v1815 = vld.sshfl [vmem:[#allocation1 + $0x18] sm:$0xff pattern:$0x73625140]
      %v1817 = vld.sshfl [vmem:[#allocation1 + $0x20] sm:$0xff pattern:$0x73625140]
      %v1819 = vld.sshfl [vmem:[#allocation1 + $0x28] sm:$0xff pattern:$0x73625140]
      %v1821 = vld.sshfl [vmem:[#allocation1 + $0x30] sm:$0xff pattern:$0x73625140]
      %v1823 = vld.sshfl [vmem:[#allocation1 + $0x38] sm:$0xff pattern:$0x73625140]
      %1825 = vrot.lane.b32.xlu0 %v1809, 27
      %v1826 = vpop.permute.xlu0 %1825
      %1827 = vrot.lane.b32.xlu0 %v1811, 27
      %v1828 = vpop.permute.xlu0 %1827
      %1829 = vrot.lane.b32.xlu0 %v1813, 27
      %v1830 = vpop.permute.xlu0 %1829
      %1831 = vrot.lane.b32.xlu0 %v1815, 27
      %v1832 = vpop.permute.xlu0 %1831
      %1833 = vrot.lane.b32.xlu0 %v1817, 27
      %v1834 = vpop.permute.xlu0 %1833
      %1835 = vrot.lane.b32.xlu0 %v1819, 27
      %v1836 = vpop.permute.xlu0 %1835
      %1837 = vrot.lane.b32.xlu0 %v1821, 27
      %v1838 = vpop.permute.xlu0 %1837
      %1839 = vrot.lane.b32.xlu0 %v1823, 27
      %v1840 = vpop.permute.xlu0 %1839
      %vm1841 = vcmask 220160
      %v1842 = vsel %vm1841, %v1826, %v1828
      %v1843 = vsel %vm1841, %v1828, %v1830
      %v1844 = vsel %vm1841, %v1830, %v1832
      %v1845 = vsel %vm1841, %v1832, %v1834
      %v1846 = vsel %vm1841, %v1834, %v1836
      %v1847 = vsel %vm1841, %v1836, %v1838
      %v1848 = vsel %vm1841, %v1838, %v1840
      %v1850 = vsel %vm268, %v1805, 0
      %v1853 = vsel %vm272, %v1842, 0
      %v1856 = vsel %vm272, %v1843, 0
      %v1859 = vsel %vm272, %v1844, 0
      %v1862 = vsel %vm272, %v1845, 0
      %v1865 = vsel %vm272, %v1846, 0
      %v1868 = vsel %vm272, %v1847, 0
      %v1871 = vsel %vm272, %v1848, 0
      %1873 = vmatpush.bf16.msra.mxu0 0
      %1874 = vmatpush.bf16.msra.mxu0 0
      %1875 = vmatpush.bf16.msra.mxu0 0
      %1876 = vmatpush.bf16.msra.mxu0 0
      %1877 = vmatpush.bf16.msra.mxu0 0
      %1878 = vmatpush.bf16.msra.mxu0 0
      %1879 = vmatpush.bf16.msra.mxu0 0
      %1880 = vmatpush.bf16.msra.mxu0 %v1853
      %1881 = vmatmul.bf16.gmra.mxu0 %v1850
      %v1882 = vpop.f32.mrf.mxu0
      %v1883 = vadd.f32 0.0, %v1882
      %v1884 = vpop.f32.mrf.mxu0
      %1885 = vdwg.mxu0
      %1886 = vmatpush.bf16.msra.mxu0 0
      %1887 = vmatpush.bf16.msra.mxu0 0
      %1888 = vmatpush.bf16.msra.mxu0 0
      %1889 = vmatpush.bf16.msra.mxu0 0
      %1890 = vmatpush.bf16.msra.mxu0 0
      %1891 = vmatpush.bf16.msra.mxu0 0
      %1892 = vmatpush.bf16.msra.mxu0 0
      %1893 = vmatpush.bf16.msra.mxu0 %v1856
      %1894 = vmatmul.bf16.gmra.mxu0 %v1850
      %v1895 = vpop.f32.mrf.mxu0
      %v1896 = vadd.f32 0.0, %v1895
      %v1897 = vpop.f32.mrf.mxu0
      %1898 = vdwg.mxu0
      %1899 = vmatpush.bf16.msra.mxu0 0
      %1900 = vmatpush.bf16.msra.mxu0 0
      %1901 = vmatpush.bf16.msra.mxu0 0
      %1902 = vmatpush.bf16.msra.mxu0 0
      %1903 = vmatpush.bf16.msra.mxu0 0
      %1904 = vmatpush.bf16.msra.mxu0 0
      %1905 = vmatpush.bf16.msra.mxu0 0
      %1906 = vmatpush.bf16.msra.mxu0 %v1859
      %1907 = vmatmul.bf16.gmra.mxu0 %v1850
      %v1908 = vpop.f32.mrf.mxu0
      %v1909 = vadd.f32 0.0, %v1908
      %v1910 = vpop.f32.mrf.mxu0
      %1911 = vdwg.mxu0
      %1912 = vmatpush.bf16.msra.mxu0 0
      %1913 = vmatpush.bf16.msra.mxu0 0
      %1914 = vmatpush.bf16.msra.mxu0 0
      %1915 = vmatpush.bf16.msra.mxu0 0
      %1916 = vmatpush.bf16.msra.mxu0 0
      %1917 = vmatpush.bf16.msra.mxu0 0
      %1918 = vmatpush.bf16.msra.mxu0 0
      %1919 = vmatpush.bf16.msra.mxu0 %v1862
      %1920 = vmatmul.bf16.gmra.mxu0 %v1850
      %v1921 = vpop.f32.mrf.mxu0
      %v1922 = vadd.f32 0.0, %v1921
      %v1923 = vpop.f32.mrf.mxu0
      %1924 = vdwg.mxu0
      %1925 = vmatpush.bf16.msra.mxu0 0
      %1926 = vmatpush.bf16.msra.mxu0 0
      %1927 = vmatpush.bf16.msra.mxu0 0
      %1928 = vmatpush.bf16.msra.mxu0 0
      %1929 = vmatpush.bf16.msra.mxu0 0
      %1930 = vmatpush.bf16.msra.mxu0 0
      %1931 = vmatpush.bf16.msra.mxu0 0
      %1932 = vmatpush.bf16.msra.mxu0 %v1865
      %1933 = vmatmul.bf16.gmra.mxu0 %v1850
      %v1934 = vpop.f32.mrf.mxu0
      %v1935 = vadd.f32 0.0, %v1934
      %v1936 = vpop.f32.mrf.mxu0
      %1937 = vdwg.mxu0
      %1938 = vmatpush.bf16.msra.mxu0 0
      %1939 = vmatpush.bf16.msra.mxu0 0
      %1940 = vmatpush.bf16.msra.mxu0 0
      %1941 = vmatpush.bf16.msra.mxu0 0
      %1942 = vmatpush.bf16.msra.mxu0 0
      %1943 = vmatpush.bf16.msra.mxu0 0
      %1944 = vmatpush.bf16.msra.mxu0 0
      %1945 = vmatpush.bf16.msra.mxu0 %v1868
      %1946 = vmatmul.bf16.gmra.mxu0 %v1850
      %v1947 = vpop.f32.mrf.mxu0
      %v1948 = vadd.f32 0.0, %v1947
      %v1949 = vpop.f32.mrf.mxu0
      %1950 = vdwg.mxu0
      %1951 = vmatpush.bf16.msra.mxu0 0
      %1952 = vmatpush.bf16.msra.mxu0 0
      %1953 = vmatpush.bf16.msra.mxu0 0
      %1954 = vmatpush.bf16.msra.mxu0 0
      %1955 = vmatpush.bf16.msra.mxu0 0
      %1956 = vmatpush.bf16.msra.mxu0 0
      %1957 = vmatpush.bf16.msra.mxu0 0
      %1958 = vmatpush.bf16.msra.mxu0 %v1871
      %1959 = vmatmul.bf16.gmra.mxu0 %v1850
      %v1960 = vpop.f32.mrf.mxu0
      %v1961 = vadd.f32 0.0, %v1960
      %v1962 = vpop.f32.mrf.mxu0
      %1963 = vdwg.mxu0
      %v1964 = vadd.f32 %v1797, %v1883
      %v1965 = vadd.f32 %v1798, %v1896
      %v1966 = vadd.f32 %v1799, %v1909
      %v1967 = vadd.f32 %v1800, %v1922
      %v1968 = vadd.f32 %v1801, %v1935
      %v1969 = vadd.f32 %v1802, %v1948
      %v1970 = vadd.f32 %v1803, %v1961
      %1971 = vrot.lane.b32.xlu0 %v225, 84
      %v1972 = vpop.permute.xlu0 %1971
      %1973 = vst [vmem:[#allocation1] ss:$4 sm:$0xff] %v220
      %s1974 = scalar_lea.vmem [#allocation1], 32
      %1975 = vst [vmem:[%s1974] ss:$4 sm:$0xff] %v221
      %v1976 = vld.sshfl [vmem:[#allocation1] sm:$0xff pattern:$0x73625140]
      %v1978 = vld.sshfl [vmem:[#allocation1 + $0x8] sm:$0xff pattern:$0x73625140]
      %v1980 = vld.sshfl [vmem:[#allocation1 + $0x10] sm:$0xff pattern:$0x73625140]
      %v1982 = vld.sshfl [vmem:[#allocation1 + $0x18] sm:$0xff pattern:$0x73625140]
      %v1984 = vld.sshfl [vmem:[#allocation1 + $0x20] sm:$0xff pattern:$0x73625140]
      %v1986 = vld.sshfl [vmem:[#allocation1 + $0x28] sm:$0xff pattern:$0x73625140]
      %v1988 = vld.sshfl [vmem:[#allocation1 + $0x30] sm:$0xff pattern:$0x73625140]
      %v1990 = vld.sshfl [vmem:[#allocation1 + $0x38] sm:$0xff pattern:$0x73625140]
      %1992 = vrot.lane.b32.xlu0 %v1976, 26
      %v1993 = vpop.permute.xlu0 %1992
      %1994 = vrot.lane.b32.xlu0 %v1978, 26
      %v1995 = vpop.permute.xlu0 %1994
      %1996 = vrot.lane.b32.xlu0 %v1980, 26
      %v1997 = vpop.permute.xlu0 %1996
      %1998 = vrot.lane.b32.xlu0 %v1982, 26
      %v1999 = vpop.permute.xlu0 %1998
      %2000 = vrot.lane.b32.xlu0 %v1984, 26
      %v2001 = vpop.permute.xlu0 %2000
      %2002 = vrot.lane.b32.xlu0 %v1986, 26
      %v2003 = vpop.permute.xlu0 %2002
      %2004 = vrot.lane.b32.xlu0 %v1988, 26
      %v2005 = vpop.permute.xlu0 %2004
      %2006 = vrot.lane.b32.xlu0 %v1990, 26
      %v2007 = vpop.permute.xlu0 %2006
      %vm2008 = vcmask 211968
      %v2009 = vsel %vm2008, %v1993, %v1995
      %v2010 = vsel %vm2008, %v1995, %v1997
      %v2011 = vsel %vm2008, %v1997, %v1999
      %v2012 = vsel %vm2008, %v1999, %v2001
      %v2013 = vsel %vm2008, %v2001, %v2003
      %v2014 = vsel %vm2008, %v2003, %v2005
      %v2015 = vsel %vm2008, %v2005, %v2007
      %v2017 = vsel %vm268, %v1972, 0
      %v2020 = vsel %vm272, %v2009, 0
      %v2023 = vsel %vm272, %v2010, 0
      %v2026 = vsel %vm272, %v2011, 0
      %v2029 = vsel %vm272, %v2012, 0
      %v2032 = vsel %vm272, %v2013, 0
      %v2035 = vsel %vm272, %v2014, 0
      %v2038 = vsel %vm272, %v2015, 0
      %2040 = vmatpush.bf16.msra.mxu0 0
      %2041 = vmatpush.bf16.msra.mxu0 0
      %2042 = vmatpush.bf16.msra.mxu0 0
      %2043 = vmatpush.bf16.msra.mxu0 0
      %2044 = vmatpush.bf16.msra.mxu0 0
      %2045 = vmatpush.bf16.msra.mxu0 0
      %2046 = vmatpush.bf16.msra.mxu0 0
      %2047 = vmatpush.bf16.msra.mxu0 %v2020
      %2048 = vmatmul.bf16.gmra.mxu0 %v2017
      %v2049 = vpop.f32.mrf.mxu0
      %v2050 = vadd.f32 0.0, %v2049
      %v2051 = vpop.f32.mrf.mxu0
      %2052 = vdwg.mxu0
      %2053 = vmatpush.bf16.msra.mxu0 0
      %2054 = vmatpush.bf16.msra.mxu0 0
      %2055 = vmatpush.bf16.msra.mxu0 0
      %2056 = vmatpush.bf16.msra.mxu0 0
      %2057 = vmatpush.bf16.msra.mxu0 0
      %2058 = vmatpush.bf16.msra.mxu0 0
      %2059 = vmatpush.bf16.msra.mxu0 0
      %2060 = vmatpush.bf16.msra.mxu0 %v2023
      %2061 = vmatmul.bf16.gmra.mxu0 %v2017
      %v2062 = vpop.f32.mrf.mxu0
      %v2063 = vadd.f32 0.0, %v2062
      %v2064 = vpop.f32.mrf.mxu0
      %2065 = vdwg.mxu0
      %2066 = vmatpush.bf16.msra.mxu0 0
      %2067 = vmatpush.bf16.msra.mxu0 0
      %2068 = vmatpush.bf16.msra.mxu0 0
      %2069 = vmatpush.bf16.msra.mxu0 0
      %2070 = vmatpush.bf16.msra.mxu0 0
      %2071 = vmatpush.bf16.msra.mxu0 0
      %2072 = vmatpush.bf16.msra.mxu0 0
      %2073 = vmatpush.bf16.msra.mxu0 %v2026
      %2074 = vmatmul.bf16.gmra.mxu0 %v2017
      %v2075 = vpop.f32.mrf.mxu0
      %v2076 = vadd.f32 0.0, %v2075
      %v2077 = vpop.f32.mrf.mxu0
      %2078 = vdwg.mxu0
      %2079 = vmatpush.bf16.msra.mxu0 0
      %2080 = vmatpush.bf16.msra.mxu0 0
      %2081 = vmatpush.bf16.msra.mxu0 0
      %2082 = vmatpush.bf16.msra.mxu0 0
      %2083 = vmatpush.bf16.msra.mxu0 0
      %2084 = vmatpush.bf16.msra.mxu0 0
      %2085 = vmatpush.bf16.msra.mxu0 0
      %2086 = vmatpush.bf16.msra.mxu0 %v2029
      %2087 = vmatmul.bf16.gmra.mxu0 %v2017
      %v2088 = vpop.f32.mrf.mxu0
      %v2089 = vadd.f32 0.0, %v2088
      %v2090 = vpop.f32.mrf.mxu0
      %2091 = vdwg.mxu0
      %2092 = vmatpush.bf16.msra.mxu0 0
      %2093 = vmatpush.bf16.msra.mxu0 0
      %2094 = vmatpush.bf16.msra.mxu0 0
      %2095 = vmatpush.bf16.msra.mxu0 0
      %2096 = vmatpush.bf16.msra.mxu0 0
      %2097 = vmatpush.bf16.msra.mxu0 0
      %2098 = vmatpush.bf16.msra.mxu0 0
      %2099 = vmatpush.bf16.msra.mxu0 %v2032
      %2100 = vmatmul.bf16.gmra.mxu0 %v2017
      %v2101 = vpop.f32.mrf.mxu0
      %v2102 = vadd.f32 0.0, %v2101
      %v2103 = vpop.f32.mrf.mxu0
      %2104 = vdwg.mxu0
      %2105 = vmatpush.bf16.msra.mxu0 0
      %2106 = vmatpush.bf16.msra.mxu0 0
      %2107 = vmatpush.bf16.msra.mxu0 0
      %2108 = vmatpush.bf16.msra.mxu0 0
      %2109 = vmatpush.bf16.msra.mxu0 0
      %2110 = vmatpush.bf16.msra.mxu0 0
      %2111 = vmatpush.bf16.msra.mxu0 0
      %2112 = vmatpush.bf16.msra.mxu0 %v2035
      %2113 = vmatmul.bf16.gmra.mxu0 %v2017
      %v2114 = vpop.f32.mrf.mxu0
      %v2115 = vadd.f32 0.0, %v2114
      %v2116 = vpop.f32.mrf.mxu0
      %2117 = vdwg.mxu0
      %2118 = vmatpush.bf16.msra.mxu0 0
      %2119 = vmatpush.bf16.msra.mxu0 0
      %2120 = vmatpush.bf16.msra.mxu0 0
      %2121 = vmatpush.bf16.msra.mxu0 0
      %2122 = vmatpush.bf16.msra.mxu0 0
      %2123 = vmatpush.bf16.msra.mxu0 0
      %2124 = vmatpush.bf16.msra.mxu0 0
      %2125 = vmatpush.bf16.msra.mxu0 %v2038
      %2126 = vmatmul.bf16.gmra.mxu0 %v2017
      %v2127 = vpop.f32.mrf.mxu0
      %v2128 = vadd.f32 0.0, %v2127
      %v2129 = vpop.f32.mrf.mxu0
      %2130 = vdwg.mxu0
      %v2131 = vadd.f32 %v1964, %v2050
      %v2132 = vadd.f32 %v1965, %v2063
      %v2133 = vadd.f32 %v1966, %v2076
      %v2134 = vadd.f32 %v1967, %v2089
      %v2135 = vadd.f32 %v1968, %v2102
      %v2136 = vadd.f32 %v1969, %v2115
      %v2137 = vadd.f32 %v1970, %v2128
      %2138 = vrot.lane.b32.xlu0 %v225, 80
      %v2139 = vpop.permute.xlu0 %2138
      %2140 = vst [vmem:[#allocation1] ss:$4 sm:$0xff] %v220
      %s2141 = scalar_lea.vmem [#allocation1], 32
      %2142 = vst [vmem:[%s2141] ss:$4 sm:$0xff] %v221
      %v2143 = vld.sshfl [vmem:[#allocation1] sm:$0xff pattern:$0x73625140]
      %v2145 = vld.sshfl [vmem:[#allocation1 + $0x8] sm:$0xff pattern:$0x73625140]
      %v2147 = vld.sshfl [vmem:[#allocation1 + $0x10] sm:$0xff pattern:$0x73625140]
      %v2149 = vld.sshfl [vmem:[#allocation1 + $0x18] sm:$0xff pattern:$0x73625140]
      %v2151 = vld.sshfl [vmem:[#allocation1 + $0x20] sm:$0xff pattern:$0x73625140]
      %v2153 = vld.sshfl [vmem:[#allocation1 + $0x28] sm:$0xff pattern:$0x73625140]
      %v2155 = vld.sshfl [vmem:[#allocation1 + $0x30] sm:$0xff pattern:$0x73625140]
      %v2157 = vld.sshfl [vmem:[#allocation1 + $0x38] sm:$0xff pattern:$0x73625140]
      %2159 = vrot.lane.b32.xlu0 %v2143, 18
      %v2160 = vpop.permute.xlu0 %2159
      %2161 = vrot.lane.b32.xlu0 %v2145, 18
      %v2162 = vpop.permute.xlu0 %2161
      %2163 = vrot.lane.b32.xlu0 %v2147, 18
      %v2164 = vpop.permute.xlu0 %2163
      %2165 = vrot.lane.b32.xlu0 %v2149, 18
      %v2166 = vpop.permute.xlu0 %2165
      %2167 = vrot.lane.b32.xlu0 %v2151, 18
      %v2168 = vpop.permute.xlu0 %2167
      %2169 = vrot.lane.b32.xlu0 %v2153, 18
      %v2170 = vpop.permute.xlu0 %2169
      %2171 = vrot.lane.b32.xlu0 %v2155, 18
      %v2172 = vpop.permute.xlu0 %2171
      %2173 = vrot.lane.b32.xlu0 %v2157, 18
      %v2174 = vpop.permute.xlu0 %2173
      %vm2175 = vcmask 146432
      %v2176 = vsel %vm2175, %v2160, %v2162
      %v2177 = vsel %vm2175, %v2162, %v2164
      %v2178 = vsel %vm2175, %v2164, %v2166
      %v2179 = vsel %vm2175, %v2166, %v2168
      %v2180 = vsel %vm2175, %v2168, %v2170
      %v2181 = vsel %vm2175, %v2170, %v2172
      %v2182 = vsel %vm2175, %v2172, %v2174
      %v2184 = vsel %vm268, %v2139, 0
      %v2187 = vsel %vm272, %v2176, 0
      %v2190 = vsel %vm272, %v2177, 0
      %v2193 = vsel %vm272, %v2178, 0
      %v2196 = vsel %vm272, %v2179, 0
      %v2199 = vsel %vm272, %v2180, 0
      %v2202 = vsel %vm272, %v2181, 0
      %v2205 = vsel %vm272, %v2182, 0
      %2207 = vmatpush.bf16.msra.mxu0 0
      %2208 = vmatpush.bf16.msra.mxu0 0
      %2209 = vmatpush.bf16.msra.mxu0 0
      %2210 = vmatpush.bf16.msra.mxu0 0
      %2211 = vmatpush.bf16.msra.mxu0 0
      %2212 = vmatpush.bf16.msra.mxu0 0
      %2213 = vmatpush.bf16.msra.mxu0 0
      %2214 = vmatpush.bf16.msra.mxu0 %v2187
      %2215 = vmatmul.bf16.gmra.mxu0 %v2184
      %v2216 = vpop.f32.mrf.mxu0
      %v2217 = vadd.f32 0.0, %v2216
      %v2218 = vpop.f32.mrf.mxu0
      %2219 = vdwg.mxu0
      %2220 = vmatpush.bf16.msra.mxu0 0
      %2221 = vmatpush.bf16.msra.mxu0 0
      %2222 = vmatpush.bf16.msra.mxu0 0
      %2223 = vmatpush.bf16.msra.mxu0 0
      %2224 = vmatpush.bf16.msra.mxu0 0
      %2225 = vmatpush.bf16.msra.mxu0 0
      %2226 = vmatpush.bf16.msra.mxu0 0
      %2227 = vmatpush.bf16.msra.mxu0 %v2190
      %2228 = vmatmul.bf16.gmra.mxu0 %v2184
      %v2229 = vpop.f32.mrf.mxu0
      %v2230 = vadd.f32 0.0, %v2229
      %v2231 = vpop.f32.mrf.mxu0
      %2232 = vdwg.mxu0
      %2233 = vmatpush.bf16.msra.mxu0 0
      %2234 = vmatpush.bf16.msra.mxu0 0
      %2235 = vmatpush.bf16.msra.mxu0 0
      %2236 = vmatpush.bf16.msra.mxu0 0
      %2237 = vmatpush.bf16.msra.mxu0 0
      %2238 = vmatpush.bf16.msra.mxu0 0
      %2239 = vmatpush.bf16.msra.mxu0 0
      %2240 = vmatpush.bf16.msra.mxu0 %v2193
      %2241 = vmatmul.bf16.gmra.mxu0 %v2184
      %v2242 = vpop.f32.mrf.mxu0
      %v2243 = vadd.f32 0.0, %v2242
      %v2244 = vpop.f32.mrf.mxu0
      %2245 = vdwg.mxu0
      %2246 = vmatpush.bf16.msra.mxu0 0
      %2247 = vmatpush.bf16.msra.mxu0 0
      %2248 = vmatpush.bf16.msra.mxu0 0
      %2249 = vmatpush.bf16.msra.mxu0 0
      %2250 = vmatpush.bf16.msra.mxu0 0
      %2251 = vmatpush.bf16.msra.mxu0 0
      %2252 = vmatpush.bf16.msra.mxu0 0
      %2253 = vmatpush.bf16.msra.mxu0 %v2196
      %2254 = vmatmul.bf16.gmra.mxu0 %v2184
      %v2255 = vpop.f32.mrf.mxu0
      %v2256 = vadd.f32 0.0, %v2255
      %v2257 = vpop.f32.mrf.mxu0
      %2258 = vdwg.mxu0
      %2259 = vmatpush.bf16.msra.mxu0 0
      %2260 = vmatpush.bf16.msra.mxu0 0
      %2261 = vmatpush.bf16.msra.mxu0 0
      %2262 = vmatpush.bf16.msra.mxu0 0
      %2263 = vmatpush.bf16.msra.mxu0 0
      %2264 = vmatpush.bf16.msra.mxu0 0
      %2265 = vmatpush.bf16.msra.mxu0 0
      %2266 = vmatpush.bf16.msra.mxu0 %v2199
      %2267 = vmatmul.bf16.gmra.mxu0 %v2184
      %v2268 = vpop.f32.mrf.mxu0
      %v2269 = vadd.f32 0.0, %v2268
      %v2270 = vpop.f32.mrf.mxu0
      %2271 = vdwg.mxu0
      %2272 = vmatpush.bf16.msra.mxu0 0
      %2273 = vmatpush.bf16.msra.mxu0 0
      %2274 = vmatpush.bf16.msra.mxu0 0
      %2275 = vmatpush.bf16.msra.mxu0 0
      %2276 = vmatpush.bf16.msra.mxu0 0
      %2277 = vmatpush.bf16.msra.mxu0 0
      %2278 = vmatpush.bf16.msra.mxu0 0
      %2279 = vmatpush.bf16.msra.mxu0 %v2202
      %2280 = vmatmul.bf16.gmra.mxu0 %v2184
      %v2281 = vpop.f32.mrf.mxu0
      %v2282 = vadd.f32 0.0, %v2281
      %v2283 = vpop.f32.mrf.mxu0
      %2284 = vdwg.mxu0
      %2285 = vmatpush.bf16.msra.mxu0 0
      %2286 = vmatpush.bf16.msra.mxu0 0
      %2287 = vmatpush.bf16.msra.mxu0 0
      %2288 = vmatpush.bf16.msra.mxu0 0
      %2289 = vmatpush.bf16.msra.mxu0 0
      %2290 = vmatpush.bf16.msra.mxu0 0
      %2291 = vmatpush.bf16.msra.mxu0 0
      %2292 = vmatpush.bf16.msra.mxu0 %v2205
      %2293 = vmatmul.bf16.gmra.mxu0 %v2184
      %v2294 = vpop.f32.mrf.mxu0
      %v2295 = vadd.f32 0.0, %v2294
      %v2296 = vpop.f32.mrf.mxu0
      %2297 = vdwg.mxu0
      %v2298 = vadd.f32 %v2131, %v2217
      %v2299 = vadd.f32 %v2132, %v2230
      %v2300 = vadd.f32 %v2133, %v2243
      %v2301 = vadd.f32 %v2134, %v2256
      %v2302 = vadd.f32 %v2135, %v2269
      %v2303 = vadd.f32 %v2136, %v2282
      %v2304 = vadd.f32 %v2137, %v2295
      %2305 = vrot.lane.b32.xlu0 %v225, 76
      %v2306 = vpop.permute.xlu0 %2305
      %2307 = vst [vmem:[#allocation1] ss:$4 sm:$0xff] %v220
      %s2308 = scalar_lea.vmem [#allocation1], 32
      %2309 = vst [vmem:[%s2308] ss:$4 sm:$0xff] %v221
      %v2310 = vld.sshfl [vmem:[#allocation1] sm:$0xff pattern:$0x73625140]
      %v2312 = vld.sshfl [vmem:[#allocation1 + $0x8] sm:$0xff pattern:$0x73625140]
      %v2314 = vld.sshfl [vmem:[#allocation1 + $0x10] sm:$0xff pattern:$0x73625140]
      %v2316 = vld.sshfl [vmem:[#allocation1 + $0x18] sm:$0xff pattern:$0x73625140]
      %v2318 = vld.sshfl [vmem:[#allocation1 + $0x20] sm:$0xff pattern:$0x73625140]
      %v2320 = vld.sshfl [vmem:[#allocation1 + $0x28] sm:$0xff pattern:$0x73625140]
      %v2322 = vld.sshfl [vmem:[#allocation1 + $0x30] sm:$0xff pattern:$0x73625140]
      %v2324 = vld.sshfl [vmem:[#allocation1 + $0x38] sm:$0xff pattern:$0x73625140]
      %2326 = vrot.lane.b32.xlu0 %v2310, 17
      %v2327 = vpop.permute.xlu0 %2326
      %2328 = vrot.lane.b32.xlu0 %v2312, 17
      %v2329 = vpop.permute.xlu0 %2328
      %2330 = vrot.lane.b32.xlu0 %v2314, 17
      %v2331 = vpop.permute.xlu0 %2330
      %2332 = vrot.lane.b32.xlu0 %v2316, 17
      %v2333 = vpop.permute.xlu0 %2332
      %2334 = vrot.lane.b32.xlu0 %v2318, 17
      %v2335 = vpop.permute.xlu0 %2334
      %2336 = vrot.lane.b32.xlu0 %v2320, 17
      %v2337 = vpop.permute.xlu0 %2336
      %2338 = vrot.lane.b32.xlu0 %v2322, 17
      %v2339 = vpop.permute.xlu0 %2338
      %2340 = vrot.lane.b32.xlu0 %v2324, 17
      %v2341 = vpop.permute.xlu0 %2340
      %vm2342 = vcmask 138240
      %v2343 = vsel %vm2342, %v2327, %v2329
      %v2344 = vsel %vm2342, %v2329, %v2331
      %v2345 = vsel %vm2342, %v2331, %v2333
      %v2346 = vsel %vm2342, %v2333, %v2335
      %v2347 = vsel %vm2342, %v2335, %v2337
      %v2348 = vsel %vm2342, %v2337, %v2339
      %v2349 = vsel %vm2342, %v2339, %v2341
      %v2351 = vsel %vm268, %v2306, 0
      %v2354 = vsel %vm272, %v2343, 0
      %v2357 = vsel %vm272, %v2344, 0
      %v2360 = vsel %vm272, %v2345, 0
      %v2363 = vsel %vm272, %v2346, 0
      %v2366 = vsel %vm272, %v2347, 0
      %v2369 = vsel %vm272, %v2348, 0
      %v2372 = vsel %vm272, %v2349, 0
      %2374 = vmatpush.bf16.msra.mxu0 0
      %2375 = vmatpush.bf16.msra.mxu0 0
      %2376 = vmatpush.bf16.msra.mxu0 0
      %2377 = vmatpush.bf16.msra.mxu0 0
      %2378 = vmatpush.bf16.msra.mxu0 0
      %2379 = vmatpush.bf16.msra.mxu0 0
      %2380 = vmatpush.bf16.msra.mxu0 0
      %2381 = vmatpush.bf16.msra.mxu0 %v2354
      %2382 = vmatmul.bf16.gmra.mxu0 %v2351
      %v2383 = vpop.f32.mrf.mxu0
      %v2384 = vadd.f32 0.0, %v2383
      %v2385 = vpop.f32.mrf.mxu0
      %2386 = vdwg.mxu0
      %2387 = vmatpush.bf16.msra.mxu0 0
      %2388 = vmatpush.bf16.msra.mxu0 0
      %2389 = vmatpush.bf16.msra.mxu0 0
      %2390 = vmatpush.bf16.msra.mxu0 0
      %2391 = vmatpush.bf16.msra.mxu0 0
      %2392 = vmatpush.bf16.msra.mxu0 0
      %2393 = vmatpush.bf16.msra.mxu0 0
      %2394 = vmatpush.bf16.msra.mxu0 %v2357
      %2395 = vmatmul.bf16.gmra.mxu0 %v2351
      %v2396 = vpop.f32.mrf.mxu0
      %v2397 = vadd.f32 0.0, %v2396
      %v2398 = vpop.f32.mrf.mxu0
      %2399 = vdwg.mxu0
      %2400 = vmatpush.bf16.msra.mxu0 0
      %2401 = vmatpush.bf16.msra.mxu0 0
      %2402 = vmatpush.bf16.msra.mxu0 0
      %2403 = vmatpush.bf16.msra.mxu0 0
      %2404 = vmatpush.bf16.msra.mxu0 0
      %2405 = vmatpush.bf16.msra.mxu0 0
      %2406 = vmatpush.bf16.msra.mxu0 0
      %2407 = vmatpush.bf16.msra.mxu0 %v2360
      %2408 = vmatmul.bf16.gmra.mxu0 %v2351
      %v2409 = vpop.f32.mrf.mxu0
      %v2410 = vadd.f32 0.0, %v2409
      %v2411 = vpop.f32.mrf.mxu0
      %2412 = vdwg.mxu0
      %2413 = vmatpush.bf16.msra.mxu0 0
      %2414 = vmatpush.bf16.msra.mxu0 0
      %2415 = vmatpush.bf16.msra.mxu0 0
      %2416 = vmatpush.bf16.msra.mxu0 0
      %2417 = vmatpush.bf16.msra.mxu0 0
      %2418 = vmatpush.bf16.msra.mxu0 0
      %2419 = vmatpush.bf16.msra.mxu0 0
      %2420 = vmatpush.bf16.msra.mxu0 %v2363
      %2421 = vmatmul.bf16.gmra.mxu0 %v2351
      %v2422 = vpop.f32.mrf.mxu0
      %v2423 = vadd.f32 0.0, %v2422
      %v2424 = vpop.f32.mrf.mxu0
      %2425 = vdwg.mxu0
      %2426 = vmatpush.bf16.msra.mxu0 0
      %2427 = vmatpush.bf16.msra.mxu0 0
      %2428 = vmatpush.bf16.msra.mxu0 0
      %2429 = vmatpush.bf16.msra.mxu0 0
      %2430 = vmatpush.bf16.msra.mxu0 0
      %2431 = vmatpush.bf16.msra.mxu0 0
      %2432 = vmatpush.bf16.msra.mxu0 0
      %2433 = vmatpush.bf16.msra.mxu0 %v2366
      %2434 = vmatmul.bf16.gmra.mxu0 %v2351
      %v2435 = vpop.f32.mrf.mxu0
      %v2436 = vadd.f32 0.0, %v2435
      %v2437 = vpop.f32.mrf.mxu0
      %2438 = vdwg.mxu0
      %2439 = vmatpush.bf16.msra.mxu0 0
      %2440 = vmatpush.bf16.msra.mxu0 0
      %2441 = vmatpush.bf16.msra.mxu0 0
      %2442 = vmatpush.bf16.msra.mxu0 0
      %2443 = vmatpush.bf16.msra.mxu0 0
      %2444 = vmatpush.bf16.msra.mxu0 0
      %2445 = vmatpush.bf16.msra.mxu0 0
      %2446 = vmatpush.bf16.msra.mxu0 %v2369
      %2447 = vmatmul.bf16.gmra.mxu0 %v2351
      %v2448 = vpop.f32.mrf.mxu0
      %v2449 = vadd.f32 0.0, %v2448
      %v2450 = vpop.f32.mrf.mxu0
      %2451 = vdwg.mxu0
      %2452 = vmatpush.bf16.msra.mxu0 0
      %2453 = vmatpush.bf16.msra.mxu0 0
      %2454 = vmatpush.bf16.msra.mxu0 0
      %2455 = vmatpush.bf16.msra.mxu0 0
      %2456 = vmatpush.bf16.msra.mxu0 0
      %2457 = vmatpush.bf16.msra.mxu0 0
      %2458 = vmatpush.bf16.msra.mxu0 0
      %2459 = vmatpush.bf16.msra.mxu0 %v2372
      %2460 = vmatmul.bf16.gmra.mxu0 %v2351
      %v2461 = vpop.f32.mrf.mxu0
      %v2462 = vadd.f32 0.0, %v2461
      %v2463 = vpop.f32.mrf.mxu0
      %2464 = vdwg.mxu0
      %v2465 = vadd.f32 %v2298, %v2384
      %v2466 = vadd.f32 %v2299, %v2397
      %v2467 = vadd.f32 %v2300, %v2410
      %v2468 = vadd.f32 %v2301, %v2423
      %v2469 = vadd.f32 %v2302, %v2436
      %v2470 = vadd.f32 %v2303, %v2449
      %v2471 = vadd.f32 %v2304, %v2462
      %2472 = vrot.lane.b32.xlu0 %v225, 72
      %v2473 = vpop.permute.xlu0 %2472
      %2474 = vst [vmem:[#allocation1] ss:$4 sm:$0xff] %v220
      %s2475 = scalar_lea.vmem [#allocation1], 32
      %2476 = vst [vmem:[%s2475] ss:$4 sm:$0xff] %v221
      %v2477 = vld.sshfl [vmem:[#allocation1] sm:$0xff pattern:$0x73625140]
      %v2479 = vld.sshfl [vmem:[#allocation1 + $0x8] sm:$0xff pattern:$0x73625140]
      %v2481 = vld.sshfl [vmem:[#allocation1 + $0x10] sm:$0xff pattern:$0x73625140]
      %v2483 = vld.sshfl [vmem:[#allocation1 + $0x18] sm:$0xff pattern:$0x73625140]
      %v2485 = vld.sshfl [vmem:[#allocation1 + $0x20] sm:$0xff pattern:$0x73625140]
      %v2487 = vld.sshfl [vmem:[#allocation1 + $0x28] sm:$0xff pattern:$0x73625140]
      %v2489 = vld.sshfl [vmem:[#allocation1 + $0x30] sm:$0xff pattern:$0x73625140]
      %v2491 = vld.sshfl [vmem:[#allocation1 + $0x38] sm:$0xff pattern:$0x73625140]
      %2493 = vrot.lane.b32.xlu0 %v2477, 16
      %v2494 = vpop.permute.xlu0 %2493
      %2495 = vrot.lane.b32.xlu0 %v2479, 16
      %v2496 = vpop.permute.xlu0 %2495
      %2497 = vrot.lane.b32.xlu0 %v2481, 16
      %v2498 = vpop.permute.xlu0 %2497
      %2499 = vrot.lane.b32.xlu0 %v2483, 16
      %v2500 = vpop.permute.xlu0 %2499
      %2501 = vrot.lane.b32.xlu0 %v2485, 16
      %v2502 = vpop.permute.xlu0 %2501
      %2503 = vrot.lane.b32.xlu0 %v2487, 16
      %v2504 = vpop.permute.xlu0 %2503
      %2505 = vrot.lane.b32.xlu0 %v2489, 16
      %v2506 = vpop.permute.xlu0 %2505
      %2507 = vrot.lane.b32.xlu0 %v2491, 16
      %v2508 = vpop.permute.xlu0 %2507
      %vm2509 = vcmask 130048
      %v2510 = vsel %vm2509, %v2494, %v2496
      %v2511 = vsel %vm2509, %v2496, %v2498
      %v2512 = vsel %vm2509, %v2498, %v2500
      %v2513 = vsel %vm2509, %v2500, %v2502
      %v2514 = vsel %vm2509, %v2502, %v2504
      %v2515 = vsel %vm2509, %v2504, %v2506
      %v2516 = vsel %vm2509, %v2506, %v2508
      %v2518 = vsel %vm268, %v2473, 0
      %v2521 = vsel %vm272, %v2510, 0
      %v2524 = vsel %vm272, %v2511, 0
      %v2527 = vsel %vm272, %v2512, 0
      %v2530 = vsel %vm272, %v2513, 0
      %v2533 = vsel %vm272, %v2514, 0
      %v2536 = vsel %vm272, %v2515, 0
      %v2539 = vsel %vm272, %v2516, 0
      %2541 = vmatpush.bf16.msra.mxu0 0
      %2542 = vmatpush.bf16.msra.mxu0 0
      %2543 = vmatpush.bf16.msra.mxu0 0
      %2544 = vmatpush.bf16.msra.mxu0 0
      %2545 = vmatpush.bf16.msra.mxu0 0
      %2546 = vmatpush.bf16.msra.mxu0 0
      %2547 = vmatpush.bf16.msra.mxu0 0
      %2548 = vmatpush.bf16.msra.mxu0 %v2521
      %2549 = vmatmul.bf16.gmra.mxu0 %v2518
      %v2550 = vpop.f32.mrf.mxu0
      %v2551 = vadd.f32 0.0, %v2550
      %v2552 = vpop.f32.mrf.mxu0
      %2553 = vdwg.mxu0
      %2554 = vmatpush.bf16.msra.mxu0 0
      %2555 = vmatpush.bf16.msra.mxu0 0
      %2556 = vmatpush.bf16.msra.mxu0 0
      %2557 = vmatpush.bf16.msra.mxu0 0
      %2558 = vmatpush.bf16.msra.mxu0 0
      %2559 = vmatpush.bf16.msra.mxu0 0
      %2560 = vmatpush.bf16.msra.mxu0 0
      %2561 = vmatpush.bf16.msra.mxu0 %v2524
      %2562 = vmatmul.bf16.gmra.mxu0 %v2518
      %v2563 = vpop.f32.mrf.mxu0
      %v2564 = vadd.f32 0.0, %v2563
      %v2565 = vpop.f32.mrf.mxu0
      %2566 = vdwg.mxu0
      %2567 = vmatpush.bf16.msra.mxu0 0
      %2568 = vmatpush.bf16.msra.mxu0 0
      %2569 = vmatpush.bf16.msra.mxu0 0
      %2570 = vmatpush.bf16.msra.mxu0 0
      %2571 = vmatpush.bf16.msra.mxu0 0
      %2572 = vmatpush.bf16.msra.mxu0 0
      %2573 = vmatpush.bf16.msra.mxu0 0
      %2574 = vmatpush.bf16.msra.mxu0 %v2527
      %2575 = vmatmul.bf16.gmra.mxu0 %v2518
      %v2576 = vpop.f32.mrf.mxu0
      %v2577 = vadd.f32 0.0, %v2576
      %v2578 = vpop.f32.mrf.mxu0
      %2579 = vdwg.mxu0
      %2580 = vmatpush.bf16.msra.mxu0 0
      %2581 = vmatpush.bf16.msra.mxu0 0
      %2582 = vmatpush.bf16.msra.mxu0 0
      %2583 = vmatpush.bf16.msra.mxu0 0
      %2584 = vmatpush.bf16.msra.mxu0 0
      %2585 = vmatpush.bf16.msra.mxu0 0
      %2586 = vmatpush.bf16.msra.mxu0 0
      %2587 = vmatpush.bf16.msra.mxu0 %v2530
      %2588 = vmatmul.bf16.gmra.mxu0 %v2518
      %v2589 = vpop.f32.mrf.mxu0
      %v2590 = vadd.f32 0.0, %v2589
      %v2591 = vpop.f32.mrf.mxu0
      %2592 = vdwg.mxu0
      %2593 = vmatpush.bf16.msra.mxu0 0
      %2594 = vmatpush.bf16.msra.mxu0 0
      %2595 = vmatpush.bf16.msra.mxu0 0
      %2596 = vmatpush.bf16.msra.mxu0 0
      %2597 = vmatpush.bf16.msra.mxu0 0
      %2598 = vmatpush.bf16.msra.mxu0 0
      %2599 = vmatpush.bf16.msra.mxu0 0
      %2600 = vmatpush.bf16.msra.mxu0 %v2533
      %2601 = vmatmul.bf16.gmra.mxu0 %v2518
      %v2602 = vpop.f32.mrf.mxu0
      %v2603 = vadd.f32 0.0, %v2602
      %v2604 = vpop.f32.mrf.mxu0
      %2605 = vdwg.mxu0
      %2606 = vmatpush.bf16.msra.mxu0 0
      %2607 = vmatpush.bf16.msra.mxu0 0
      %2608 = vmatpush.bf16.msra.mxu0 0
      %2609 = vmatpush.bf16.msra.mxu0 0
      %2610 = vmatpush.bf16.msra.mxu0 0
      %2611 = vmatpush.bf16.msra.mxu0 0
      %2612 = vmatpush.bf16.msra.mxu0 0
      %2613 = vmatpush.bf16.msra.mxu0 %v2536
      %2614 = vmatmul.bf16.gmra.mxu0 %v2518
      %v2615 = vpop.f32.mrf.mxu0
      %v2616 = vadd.f32 0.0, %v2615
      %v2617 = vpop.f32.mrf.mxu0
      %2618 = vdwg.mxu0
      %2619 = vmatpush.bf16.msra.mxu0 0
      %2620 = vmatpush.bf16.msra.mxu0 0
      %2621 = vmatpush.bf16.msra.mxu0 0
      %2622 = vmatpush.bf16.msra.mxu0 0
      %2623 = vmatpush.bf16.msra.mxu0 0
      %2624 = vmatpush.bf16.msra.mxu0 0
      %2625 = vmatpush.bf16.msra.mxu0 0
      %2626 = vmatpush.bf16.msra.mxu0 %v2539
      %2627 = vmatmul.bf16.gmra.mxu0 %v2518
      %v2628 = vpop.f32.mrf.mxu0
      %v2629 = vadd.f32 0.0, %v2628
      %v2630 = vpop.f32.mrf.mxu0
      %2631 = vdwg.mxu0
      %v2632 = vadd.f32 %v2465, %v2551
      %v2633 = vadd.f32 %v2466, %v2564
      %v2634 = vadd.f32 %v2467, %v2577
      %v2635 = vadd.f32 %v2468, %v2590
      %v2636 = vadd.f32 %v2469, %v2603
      %v2637 = vadd.f32 %v2470, %v2616
      %v2638 = vadd.f32 %v2471, %v2629
      %2639 = vrot.lane.b32.xlu0 %v225, 68
      %v2640 = vpop.permute.xlu0 %2639
      %2641 = vst [vmem:[#allocation1] ss:$4 sm:$0xff] %v220
      %s2642 = scalar_lea.vmem [#allocation1], 32
      %2643 = vst [vmem:[%s2642] ss:$4 sm:$0xff] %v221
      %v2644 = vld.sshfl [vmem:[#allocation1] sm:$0xff pattern:$0x73625140]
      %v2646 = vld.sshfl [vmem:[#allocation1 + $0x8] sm:$0xff pattern:$0x73625140]
      %v2648 = vld.sshfl [vmem:[#allocation1 + $0x10] sm:$0xff pattern:$0x73625140]
      %v2650 = vld.sshfl [vmem:[#allocation1 + $0x18] sm:$0xff pattern:$0x73625140]
      %v2652 = vld.sshfl [vmem:[#allocation1 + $0x20] sm:$0xff pattern:$0x73625140]
      %v2654 = vld.sshfl [vmem:[#allocation1 + $0x28] sm:$0xff pattern:$0x73625140]
      %v2656 = vld.sshfl [vmem:[#allocation1 + $0x30] sm:$0xff pattern:$0x73625140]
      %v2658 = vld.sshfl [vmem:[#allocation1 + $0x38] sm:$0xff pattern:$0x73625140]
      %2660 = vrot.lane.b32.xlu0 %v2644, 8
      %v2661 = vpop.permute.xlu0 %2660
      %2662 = vrot.lane.b32.xlu0 %v2646, 8
      %v2663 = vpop.permute.xlu0 %2662
      %2664 = vrot.lane.b32.xlu0 %v2648, 8
      %v2665 = vpop.permute.xlu0 %2664
      %2666 = vrot.lane.b32.xlu0 %v2650, 8
      %v2667 = vpop.permute.xlu0 %2666
      %2668 = vrot.lane.b32.xlu0 %v2652, 8
      %v2669 = vpop.permute.xlu0 %2668
      %2670 = vrot.lane.b32.xlu0 %v2654, 8
      %v2671 = vpop.permute.xlu0 %2670
      %2672 = vrot.lane.b32.xlu0 %v2656, 8
      %v2673 = vpop.permute.xlu0 %2672
      %2674 = vrot.lane.b32.xlu0 %v2658, 8
      %v2675 = vpop.permute.xlu0 %2674
      %vm2676 = vcmask 64512
      %v2677 = vsel %vm2676, %v2661, %v2663
      %v2678 = vsel %vm2676, %v2663, %v2665
      %v2679 = vsel %vm2676, %v2665, %v2667
      %v2680 = vsel %vm2676, %v2667, %v2669
      %v2681 = vsel %vm2676, %v2669, %v2671
      %v2682 = vsel %vm2676, %v2671, %v2673
      %v2683 = vsel %vm2676, %v2673, %v2675
      %v2685 = vsel %vm268, %v2640, 0
      %v2688 = vsel %vm272, %v2677, 0
      %v2691 = vsel %vm272, %v2678, 0
      %v2694 = vsel %vm272, %v2679, 0
      %v2697 = vsel %vm272, %v2680, 0
      %v2700 = vsel %vm272, %v2681, 0
      %v2703 = vsel %vm272, %v2682, 0
      %v2706 = vsel %vm272, %v2683, 0
      %2708 = vmatpush.bf16.msra.mxu0 0
      %2709 = vmatpush.bf16.msra.mxu0 0
      %2710 = vmatpush.bf16.msra.mxu0 0
      %2711 = vmatpush.bf16.msra.mxu0 0
      %2712 = vmatpush.bf16.msra.mxu0 0
      %2713 = vmatpush.bf16.msra.mxu0 0
      %2714 = vmatpush.bf16.msra.mxu0 0
      %2715 = vmatpush.bf16.msra.mxu0 %v2688
      %2716 = vmatmul.bf16.gmra.mxu0 %v2685
      %v2717 = vpop.f32.mrf.mxu0
      %v2718 = vadd.f32 0.0, %v2717
      %v2719 = vpop.f32.mrf.mxu0
      %2720 = vdwg.mxu0
      %2721 = vmatpush.bf16.msra.mxu0 0
      %2722 = vmatpush.bf16.msra.mxu0 0
      %2723 = vmatpush.bf16.msra.mxu0 0
      %2724 = vmatpush.bf16.msra.mxu0 0
      %2725 = vmatpush.bf16.msra.mxu0 0
      %2726 = vmatpush.bf16.msra.mxu0 0
      %2727 = vmatpush.bf16.msra.mxu0 0
      %2728 = vmatpush.bf16.msra.mxu0 %v2691
      %2729 = vmatmul.bf16.gmra.mxu0 %v2685
      %v2730 = vpop.f32.mrf.mxu0
      %v2731 = vadd.f32 0.0, %v2730
      %v2732 = vpop.f32.mrf.mxu0
      %2733 = vdwg.mxu0
      %2734 = vmatpush.bf16.msra.mxu0 0
      %2735 = vmatpush.bf16.msra.mxu0 0
      %2736 = vmatpush.bf16.msra.mxu0 0
      %2737 = vmatpush.bf16.msra.mxu0 0
      %2738 = vmatpush.bf16.msra.mxu0 0
      %2739 = vmatpush.bf16.msra.mxu0 0
      %2740 = vmatpush.bf16.msra.mxu0 0
      %2741 = vmatpush.bf16.msra.mxu0 %v2694
      %2742 = vmatmul.bf16.gmra.mxu0 %v2685
      %v2743 = vpop.f32.mrf.mxu0
      %v2744 = vadd.f32 0.0, %v2743
      %v2745 = vpop.f32.mrf.mxu0
      %2746 = vdwg.mxu0
      %2747 = vmatpush.bf16.msra.mxu0 0
      %2748 = vmatpush.bf16.msra.mxu0 0
      %2749 = vmatpush.bf16.msra.mxu0 0
      %2750 = vmatpush.bf16.msra.mxu0 0
      %2751 = vmatpush.bf16.msra.mxu0 0
      %2752 = vmatpush.bf16.msra.mxu0 0
      %2753 = vmatpush.bf16.msra.mxu0 0
      %2754 = vmatpush.bf16.msra.mxu0 %v2697
      %2755 = vmatmul.bf16.gmra.mxu0 %v2685
      %v2756 = vpop.f32.mrf.mxu0
      %v2757 = vadd.f32 0.0, %v2756
      %v2758 = vpop.f32.mrf.mxu0
      %2759 = vdwg.mxu0
      %2760 = vmatpush.bf16.msra.mxu0 0
      %2761 = vmatpush.bf16.msra.mxu0 0
      %2762 = vmatpush.bf16.msra.mxu0 0
      %2763 = vmatpush.bf16.msra.mxu0 0
      %2764 = vmatpush.bf16.msra.mxu0 0
      %2765 = vmatpush.bf16.msra.mxu0 0
      %2766 = vmatpush.bf16.msra.mxu0 0
      %2767 = vmatpush.bf16.msra.mxu0 %v2700
      %2768 = vmatmul.bf16.gmra.mxu0 %v2685
      %v2769 = vpop.f32.mrf.mxu0
      %v2770 = vadd.f32 0.0, %v2769
      %v2771 = vpop.f32.mrf.mxu0
      %2772 = vdwg.mxu0
      %2773 = vmatpush.bf16.msra.mxu0 0
      %2774 = vmatpush.bf16.msra.mxu0 0
      %2775 = vmatpush.bf16.msra.mxu0 0
      %2776 = vmatpush.bf16.msra.mxu0 0
      %2777 = vmatpush.bf16.msra.mxu0 0
      %2778 = vmatpush.bf16.msra.mxu0 0
      %2779 = vmatpush.bf16.msra.mxu0 0
      %2780 = vmatpush.bf16.msra.mxu0 %v2703
      %2781 = vmatmul.bf16.gmra.mxu0 %v2685
      %v2782 = vpop.f32.mrf.mxu0
      %v2783 = vadd.f32 0.0, %v2782
      %v2784 = vpop.f32.mrf.mxu0
      %2785 = vdwg.mxu0
      %2786 = vmatpush.bf16.msra.mxu0 0
      %2787 = vmatpush.bf16.msra.mxu0 0
      %2788 = vmatpush.bf16.msra.mxu0 0
      %2789 = vmatpush.bf16.msra.mxu0 0
      %2790 = vmatpush.bf16.msra.mxu0 0
      %2791 = vmatpush.bf16.msra.mxu0 0
      %2792 = vmatpush.bf16.msra.mxu0 0
      %2793 = vmatpush.bf16.msra.mxu0 %v2706
      %2794 = vmatmul.bf16.gmra.mxu0 %v2685
      %v2795 = vpop.f32.mrf.mxu0
      %v2796 = vadd.f32 0.0, %v2795
      %v2797 = vpop.f32.mrf.mxu0
      %2798 = vdwg.mxu0
      %v2799 = vadd.f32 %v2632, %v2718
      %v2800 = vadd.f32 %v2633, %v2731
      %v2801 = vadd.f32 %v2634, %v2744
      %v2802 = vadd.f32 %v2635, %v2757
      %v2803 = vadd.f32 %v2636, %v2770
      %v2804 = vadd.f32 %v2637, %v2783
      %v2805 = vadd.f32 %v2638, %v2796
      %2806 = vrot.lane.b32.xlu0 %v225, 64
      %v2807 = vpop.permute.xlu0 %2806
      %2808 = vst [vmem:[#allocation1] ss:$4 sm:$0xff] %v220
      %s2809 = scalar_lea.vmem [#allocation1], 32
      %2810 = vst [vmem:[%s2809] ss:$4 sm:$0xff] %v221
      %v2811 = vld.sshfl [vmem:[#allocation1] sm:$0xff pattern:$0x73625140]
      %v2813 = vld.sshfl [vmem:[#allocation1 + $0x8] sm:$0xff pattern:$0x73625140]
      %v2815 = vld.sshfl [vmem:[#allocation1 + $0x10] sm:$0xff pattern:$0x73625140]
      %v2817 = vld.sshfl [vmem:[#allocation1 + $0x18] sm:$0xff pattern:$0x73625140]
      %v2819 = vld.sshfl [vmem:[#allocation1 + $0x20] sm:$0xff pattern:$0x73625140]
      %v2821 = vld.sshfl [vmem:[#allocation1 + $0x28] sm:$0xff pattern:$0x73625140]
      %v2823 = vld.sshfl [vmem:[#allocation1 + $0x30] sm:$0xff pattern:$0x73625140]
      %v2825 = vld.sshfl [vmem:[#allocation1 + $0x38] sm:$0xff pattern:$0x73625140]
      %2827 = vrot.lane.b32.xlu0 %v2811, 7
      %v2828 = vpop.permute.xlu0 %2827
      %2829 = vrot.lane.b32.xlu0 %v2813, 7
      %v2830 = vpop.permute.xlu0 %2829
      %2831 = vrot.lane.b32.xlu0 %v2815, 7
      %v2832 = vpop.permute.xlu0 %2831
      %2833 = vrot.lane.b32.xlu0 %v2817, 7
      %v2834 = vpop.permute.xlu0 %2833
      %2835 = vrot.lane.b32.xlu0 %v2819, 7
      %v2836 = vpop.permute.xlu0 %2835
      %2837 = vrot.lane.b32.xlu0 %v2821, 7
      %v2838 = vpop.permute.xlu0 %2837
      %2839 = vrot.lane.b32.xlu0 %v2823, 7
      %v2840 = vpop.permute.xlu0 %2839
      %2841 = vrot.lane.b32.xlu0 %v2825, 7
      %v2842 = vpop.permute.xlu0 %2841
      %vm2843 = vcmask 56320
      %v2844 = vsel %vm2843, %v2828, %v2830
      %v2845 = vsel %vm2843, %v2830, %v2832
      %v2846 = vsel %vm2843, %v2832, %v2834
      %v2847 = vsel %vm2843, %v2834, %v2836
      %v2848 = vsel %vm2843, %v2836, %v2838
      %v2849 = vsel %vm2843, %v2838, %v2840
      %v2850 = vsel %vm2843, %v2840, %v2842
      %v2852 = vsel %vm268, %v2807, 0
      %v2855 = vsel %vm272, %v2844, 0
      %v2858 = vsel %vm272, %v2845, 0
      %v2861 = vsel %vm272, %v2846, 0
      %v2864 = vsel %vm272, %v2847, 0
      %v2867 = vsel %vm272, %v2848, 0
      %v2870 = vsel %vm272, %v2849, 0
      %v2873 = vsel %vm272, %v2850, 0
      %2875 = vmatpush.bf16.msra.mxu0 0
      %2876 = vmatpush.bf16.msra.mxu0 0
      %2877 = vmatpush.bf16.msra.mxu0 0
      %2878 = vmatpush.bf16.msra.mxu0 0
      %2879 = vmatpush.bf16.msra.mxu0 0
      %2880 = vmatpush.bf16.msra.mxu0 0
      %2881 = vmatpush.bf16.msra.mxu0 0
      %2882 = vmatpush.bf16.msra.mxu0 %v2855
      %2883 = vmatmul.bf16.gmra.mxu0 %v2852
      %v2884 = vpop.f32.mrf.mxu0
      %v2885 = vadd.f32 0.0, %v2884
      %v2886 = vpop.f32.mrf.mxu0
      %2887 = vdwg.mxu0
      %2888 = vmatpush.bf16.msra.mxu0 0
      %2889 = vmatpush.bf16.msra.mxu0 0
      %2890 = vmatpush.bf16.msra.mxu0 0
      %2891 = vmatpush.bf16.msra.mxu0 0
      %2892 = vmatpush.bf16.msra.mxu0 0
      %2893 = vmatpush.bf16.msra.mxu0 0
      %2894 = vmatpush.bf16.msra.mxu0 0
      %2895 = vmatpush.bf16.msra.mxu0 %v2858
      %2896 = vmatmul.bf16.gmra.mxu0 %v2852
      %v2897 = vpop.f32.mrf.mxu0
      %v2898 = vadd.f32 0.0, %v2897
      %v2899 = vpop.f32.mrf.mxu0
      %2900 = vdwg.mxu0
      %2901 = vmatpush.bf16.msra.mxu0 0
      %2902 = vmatpush.bf16.msra.mxu0 0
      %2903 = vmatpush.bf16.msra.mxu0 0
      %2904 = vmatpush.bf16.msra.mxu0 0
      %2905 = vmatpush.bf16.msra.mxu0 0
      %2906 = vmatpush.bf16.msra.mxu0 0
      %2907 = vmatpush.bf16.msra.mxu0 0
      %2908 = vmatpush.bf16.msra.mxu0 %v2861
      %2909 = vmatmul.bf16.gmra.mxu0 %v2852
      %v2910 = vpop.f32.mrf.mxu0
      %v2911 = vadd.f32 0.0, %v2910
      %v2912 = vpop.f32.mrf.mxu0
      %2913 = vdwg.mxu0
      %2914 = vmatpush.bf16.msra.mxu0 0
      %2915 = vmatpush.bf16.msra.mxu0 0
      %2916 = vmatpush.bf16.msra.mxu0 0
      %2917 = vmatpush.bf16.msra.mxu0 0
      %2918 = vmatpush.bf16.msra.mxu0 0
      %2919 = vmatpush.bf16.msra.mxu0 0
      %2920 = vmatpush.bf16.msra.mxu0 0
      %2921 = vmatpush.bf16.msra.mxu0 %v2864
      %2922 = vmatmul.bf16.gmra.mxu0 %v2852
      %v2923 = vpop.f32.mrf.mxu0
      %v2924 = vadd.f32 0.0, %v2923
      %v2925 = vpop.f32.mrf.mxu0
      %2926 = vdwg.mxu0
      %2927 = vmatpush.bf16.msra.mxu0 0
      %2928 = vmatpush.bf16.msra.mxu0 0
      %2929 = vmatpush.bf16.msra.mxu0 0
      %2930 = vmatpush.bf16.msra.mxu0 0
      %2931 = vmatpush.bf16.msra.mxu0 0
      %2932 = vmatpush.bf16.msra.mxu0 0
      %2933 = vmatpush.bf16.msra.mxu0 0
      %2934 = vmatpush.bf16.msra.mxu0 %v2867
      %2935 = vmatmul.bf16.gmra.mxu0 %v2852
      %v2936 = vpop.f32.mrf.mxu0
      %v2937 = vadd.f32 0.0, %v2936
      %v2938 = vpop.f32.mrf.mxu0
      %2939 = vdwg.mxu0
      %2940 = vmatpush.bf16.msra.mxu0 0
      %2941 = vmatpush.bf16.msra.mxu0 0
      %2942 = vmatpush.bf16.msra.mxu0 0
      %2943 = vmatpush.bf16.msra.mxu0 0
      %2944 = vmatpush.bf16.msra.mxu0 0
      %2945 = vmatpush.bf16.msra.mxu0 0
      %2946 = vmatpush.bf16.msra.mxu0 0
      %2947 = vmatpush.bf16.msra.mxu0 %v2870
      %2948 = vmatmul.bf16.gmra.mxu0 %v2852
      %v2949 = vpop.f32.mrf.mxu0
      %v2950 = vadd.f32 0.0, %v2949
      %v2951 = vpop.f32.mrf.mxu0
      %2952 = vdwg.mxu0
      %2953 = vmatpush.bf16.msra.mxu0 0
      %2954 = vmatpush.bf16.msra.mxu0 0
      %2955 = vmatpush.bf16.msra.mxu0 0
      %2956 = vmatpush.bf16.msra.mxu0 0
      %2957 = vmatpush.bf16.msra.mxu0 0
      %2958 = vmatpush.bf16.msra.mxu0 0
      %2959 = vmatpush.bf16.msra.mxu0 0
      %2960 = vmatpush.bf16.msra.mxu0 %v2873
      %2961 = vmatmul.bf16.gmra.mxu0 %v2852
      %v2962 = vpop.f32.mrf.mxu0
      %v2963 = vadd.f32 0.0, %v2962
      %v2964 = vpop.f32.mrf.mxu0
      %2965 = vdwg.mxu0
      %v2966 = vadd.f32 %v2799, %v2885
      %v2967 = vadd.f32 %v2800, %v2898
      %v2968 = vadd.f32 %v2801, %v2911
      %v2969 = vadd.f32 %v2802, %v2924
      %v2970 = vadd.f32 %v2803, %v2937
      %v2971 = vadd.f32 %v2804, %v2950
      %v2972 = vadd.f32 %v2805, %v2963
      %2973 = vrot.lane.b32.xlu0 %v225, 60
      %v2974 = vpop.permute.xlu0 %2973
      %2975 = vst [vmem:[#allocation1] ss:$4 sm:$0xff] %v220
      %s2976 = scalar_lea.vmem [#allocation1], 32
      %2977 = vst [vmem:[%s2976] ss:$4 sm:$0xff] %v221
      %v2978 = vld.sshfl [vmem:[#allocation1] sm:$0xff pattern:$0x73625140]
      %v2980 = vld.sshfl [vmem:[#allocation1 + $0x8] sm:$0xff pattern:$0x73625140]
      %v2982 = vld.sshfl [vmem:[#allocation1 + $0x10] sm:$0xff pattern:$0x73625140]
      %v2984 = vld.sshfl [vmem:[#allocation1 + $0x18] sm:$0xff pattern:$0x73625140]
      %v2986 = vld.sshfl [vmem:[#allocation1 + $0x20] sm:$0xff pattern:$0x73625140]
      %v2988 = vld.sshfl [vmem:[#allocation1 + $0x28] sm:$0xff pattern:$0x73625140]
      %v2990 = vld.sshfl [vmem:[#allocation1 + $0x30] sm:$0xff pattern:$0x73625140]
      %v2992 = vld.sshfl [vmem:[#allocation1 + $0x38] sm:$0xff pattern:$0x73625140]
      %2994 = vrot.lane.b32.xlu0 %v2978, 6
      %v2995 = vpop.permute.xlu0 %2994
      %2996 = vrot.lane.b32.xlu0 %v2980, 6
      %v2997 = vpop.permute.xlu0 %2996
      %2998 = vrot.lane.b32.xlu0 %v2982, 6
      %v2999 = vpop.permute.xlu0 %2998
      %3000 = vrot.lane.b32.xlu0 %v2984, 6
      %v3001 = vpop.permute.xlu0 %3000
      %3002 = vrot.lane.b32.xlu0 %v2986, 6
      %v3003 = vpop.permute.xlu0 %3002
      %3004 = vrot.lane.b32.xlu0 %v2988, 6
      %v3005 = vpop.permute.xlu0 %3004
      %3006 = vrot.lane.b32.xlu0 %v2990, 6
      %v3007 = vpop.permute.xlu0 %3006
      %3008 = vrot.lane.b32.xlu0 %v2992, 6
      %v3009 = vpop.permute.xlu0 %3008
      %vm3010 = vcmask 48128
      %v3011 = vsel %vm3010, %v2995, %v2997
      %v3012 = vsel %vm3010, %v2997, %v2999
      %v3013 = vsel %vm3010, %v2999, %v3001
      %v3014 = vsel %vm3010, %v3001, %v3003
      %v3015 = vsel %vm3010, %v3003, %v3005
      %v3016 = vsel %vm3010, %v3005, %v3007
      %v3017 = vsel %vm3010, %v3007, %v3009
      %v3019 = vsel %vm268, %v2974, 0
      %v3022 = vsel %vm272, %v3011, 0
      %v3025 = vsel %vm272, %v3012, 0
      %v3028 = vsel %vm272, %v3013, 0
      %v3031 = vsel %vm272, %v3014, 0
      %v3034 = vsel %vm272, %v3015, 0
      %v3037 = vsel %vm272, %v3016, 0
      %v3040 = vsel %vm272, %v3017, 0
      %3042 = vmatpush.bf16.msra.mxu0 0
      %3043 = vmatpush.bf16.msra.mxu0 0
      %3044 = vmatpush.bf16.msra.mxu0 0
      %3045 = vmatpush.bf16.msra.mxu0 0
      %3046 = vmatpush.bf16.msra.mxu0 0
      %3047 = vmatpush.bf16.msra.mxu0 0
      %3048 = vmatpush.bf16.msra.mxu0 0
      %3049 = vmatpush.bf16.msra.mxu0 %v3022
      %3050 = vmatmul.bf16.gmra.mxu0 %v3019
      %v3051 = vpop.f32.mrf.mxu0
      %v3052 = vadd.f32 0.0, %v3051
      %v3053 = vpop.f32.mrf.mxu0
      %3054 = vdwg.mxu0
      %3055 = vmatpush.bf16.msra.mxu0 0
      %3056 = vmatpush.bf16.msra.mxu0 0
      %3057 = vmatpush.bf16.msra.mxu0 0
      %3058 = vmatpush.bf16.msra.mxu0 0
      %3059 = vmatpush.bf16.msra.mxu0 0
      %3060 = vmatpush.bf16.msra.mxu0 0
      %3061 = vmatpush.bf16.msra.mxu0 0
      %3062 = vmatpush.bf16.msra.mxu0 %v3025
      %3063 = vmatmul.bf16.gmra.mxu0 %v3019
      %v3064 = vpop.f32.mrf.mxu0
      %v3065 = vadd.f32 0.0, %v3064
      %v3066 = vpop.f32.mrf.mxu0
      %3067 = vdwg.mxu0
      %3068 = vmatpush.bf16.msra.mxu0 0
      %3069 = vmatpush.bf16.msra.mxu0 0
      %3070 = vmatpush.bf16.msra.mxu0 0
      %3071 = vmatpush.bf16.msra.mxu0 0
      %3072 = vmatpush.bf16.msra.mxu0 0
      %3073 = vmatpush.bf16.msra.mxu0 0
      %3074 = vmatpush.bf16.msra.mxu0 0
      %3075 = vmatpush.bf16.msra.mxu0 %v3028
      %3076 = vmatmul.bf16.gmra.mxu0 %v3019
      %v3077 = vpop.f32.mrf.mxu0
      %v3078 = vadd.f32 0.0, %v3077
      %v3079 = vpop.f32.mrf.mxu0
      %3080 = vdwg.mxu0
      %3081 = vmatpush.bf16.msra.mxu0 0
      %3082 = vmatpush.bf16.msra.mxu0 0
      %3083 = vmatpush.bf16.msra.mxu0 0
      %3084 = vmatpush.bf16.msra.mxu0 0
      %3085 = vmatpush.bf16.msra.mxu0 0
      %3086 = vmatpush.bf16.msra.mxu0 0
      %3087 = vmatpush.bf16.msra.mxu0 0
      %3088 = vmatpush.bf16.msra.mxu0 %v3031
      %3089 = vmatmul.bf16.gmra.mxu0 %v3019
      %v3090 = vpop.f32.mrf.mxu0
      %v3091 = vadd.f32 0.0, %v3090
      %v3092 = vpop.f32.mrf.mxu0
      %3093 = vdwg.mxu0
      %3094 = vmatpush.bf16.msra.mxu0 0
      %3095 = vmatpush.bf16.msra.mxu0 0
      %3096 = vmatpush.bf16.msra.mxu0 0
      %3097 = vmatpush.bf16.msra.mxu0 0
      %3098 = vmatpush.bf16.msra.mxu0 0
      %3099 = vmatpush.bf16.msra.mxu0 0
      %3100 = vmatpush.bf16.msra.mxu0 0
      %3101 = vmatpush.bf16.msra.mxu0 %v3034
      %3102 = vmatmul.bf16.gmra.mxu0 %v3019
      %v3103 = vpop.f32.mrf.mxu0
      %v3104 = vadd.f32 0.0, %v3103
      %v3105 = vpop.f32.mrf.mxu0
      %3106 = vdwg.mxu0
      %3107 = vmatpush.bf16.msra.mxu0 0
      %3108 = vmatpush.bf16.msra.mxu0 0
      %3109 = vmatpush.bf16.msra.mxu0 0
      %3110 = vmatpush.bf16.msra.mxu0 0
      %3111 = vmatpush.bf16.msra.mxu0 0
      %3112 = vmatpush.bf16.msra.mxu0 0
      %3113 = vmatpush.bf16.msra.mxu0 0
      %3114 = vmatpush.bf16.msra.mxu0 %v3037
      %3115 = vmatmul.bf16.gmra.mxu0 %v3019
      %v3116 = vpop.f32.mrf.mxu0
      %v3117 = vadd.f32 0.0, %v3116
      %v3118 = vpop.f32.mrf.mxu0
      %3119 = vdwg.mxu0
      %3120 = vmatpush.bf16.msra.mxu0 0
      %3121 = vmatpush.bf16.msra.mxu0 0
      %3122 = vmatpush.bf16.msra.mxu0 0
      %3123 = vmatpush.bf16.msra.mxu0 0
      %3124 = vmatpush.bf16.msra.mxu0 0
      %3125 = vmatpush.bf16.msra.mxu0 0
      %3126 = vmatpush.bf16.msra.mxu0 0
      %3127 = vmatpush.bf16.msra.mxu0 %v3040
      %3128 = vmatmul.bf16.gmra.mxu0 %v3019
      %v3129 = vpop.f32.mrf.mxu0
      %v3130 = vadd.f32 0.0, %v3129
      %v3131 = vpop.f32.mrf.mxu0
      %3132 = vdwg.mxu0
      %v3133 = vadd.f32 %v2966, %v3052
      %v3134 = vadd.f32 %v2967, %v3065
      %v3135 = vadd.f32 %v2968, %v3078
      %v3136 = vadd.f32 %v2969, %v3091
      %v3137 = vadd.f32 %v2970, %v3104
      %v3138 = vadd.f32 %v2971, %v3117
      %v3139 = vadd.f32 %v2972, %v3130
      %3140 = vrot.lane.b32.xlu0 %v225, 56
      %v3141 = vpop.permute.xlu0 %3140
      %3142 = vst [vmem:[#allocation1] ss:$4 sm:$0xff] %v220
      %s3143 = scalar_lea.vmem [#allocation1], 32
      %3144 = vst [vmem:[%s3143] ss:$4 sm:$0xff] %v221
      %v3145 = vld.sshfl [vmem:[#allocation1 + $0x8] sm:$0xff pattern:$0x73625140]
      %v3147 = vld.sshfl [vmem:[#allocation1 + $0x10] sm:$0xff pattern:$0x73625140]
      %v3149 = vld.sshfl [vmem:[#allocation1 + $0x18] sm:$0xff pattern:$0x73625140]
      %v3151 = vld.sshfl [vmem:[#allocation1 + $0x20] sm:$0xff pattern:$0x73625140]
      %v3153 = vld.sshfl [vmem:[#allocation1 + $0x28] sm:$0xff pattern:$0x73625140]
      %v3155 = vld.sshfl [vmem:[#allocation1 + $0x30] sm:$0xff pattern:$0x73625140]
      %v3157 = vld.sshfl [vmem:[#allocation1 + $0x38] sm:$0xff pattern:$0x73625140]
      %3159 = vrot.lane.b32.xlu0 %v3145, 56
      %v3160 = vpop.permute.xlu0 %3159
      %3161 = vrot.lane.b32.xlu0 %v3147, 56
      %v3162 = vpop.permute.xlu0 %3161
      %3163 = vrot.lane.b32.xlu0 %v3149, 56
      %v3164 = vpop.permute.xlu0 %3163
      %3165 = vrot.lane.b32.xlu0 %v3151, 56
      %v3166 = vpop.permute.xlu0 %3165
      %3167 = vrot.lane.b32.xlu0 %v3153, 56
      %v3168 = vpop.permute.xlu0 %3167
      %3169 = vrot.lane.b32.xlu0 %v3155, 56
      %v3170 = vpop.permute.xlu0 %3169
      %3171 = vrot.lane.b32.xlu0 %v3157, 56
      %v3172 = vpop.permute.xlu0 %3171
      %vm3173 = vcmask 457728
      %v3174 = vsel %vm3173, %v3160, %v3162
      %v3175 = vsel %vm3173, %v3162, %v3164
      %v3176 = vsel %vm3173, %v3164, %v3166
      %v3177 = vsel %vm3173, %v3166, %v3168
      %v3178 = vsel %vm3173, %v3168, %v3170
      %v3179 = vsel %vm3173, %v3170, %v3172
      %v3181 = vsel %vm268, %v3141, 0
      %v3184 = vsel %vm272, %v3174, 0
      %v3187 = vsel %vm272, %v3175, 0
      %v3190 = vsel %vm272, %v3176, 0
      %v3193 = vsel %vm272, %v3177, 0
      %v3196 = vsel %vm272, %v3178, 0
      %v3199 = vsel %vm272, %v3179, 0
      %v3202 = vsel %vm272, %v3172, 0
      %3204 = vmatpush.bf16.msra.mxu0 0
      %3205 = vmatpush.bf16.msra.mxu0 0
      %3206 = vmatpush.bf16.msra.mxu0 0
      %3207 = vmatpush.bf16.msra.mxu0 0
      %3208 = vmatpush.bf16.msra.mxu0 0
      %3209 = vmatpush.bf16.msra.mxu0 0
      %3210 = vmatpush.bf16.msra.mxu0 0
      %3211 = vmatpush.bf16.msra.mxu0 %v3184
      %3212 = vmatmul.bf16.gmra.mxu0 %v3181
      %v3213 = vpop.f32.mrf.mxu0
      %v3214 = vadd.f32 0.0, %v3213
      %v3215 = vpop.f32.mrf.mxu0
      %3216 = vdwg.mxu0
      %3217 = vmatpush.bf16.msra.mxu0 0
      %3218 = vmatpush.bf16.msra.mxu0 0
      %3219 = vmatpush.bf16.msra.mxu0 0
      %3220 = vmatpush.bf16.msra.mxu0 0
      %3221 = vmatpush.bf16.msra.mxu0 0
      %3222 = vmatpush.bf16.msra.mxu0 0
      %3223 = vmatpush.bf16.msra.mxu0 0
      %3224 = vmatpush.bf16.msra.mxu0 %v3187
      %3225 = vmatmul.bf16.gmra.mxu0 %v3181
      %v3226 = vpop.f32.mrf.mxu0
      %v3227 = vadd.f32 0.0, %v3226
      %v3228 = vpop.f32.mrf.mxu0
      %3229 = vdwg.mxu0
      %3230 = vmatpush.bf16.msra.mxu0 0
      %3231 = vmatpush.bf16.msra.mxu0 0
      %3232 = vmatpush.bf16.msra.mxu0 0
      %3233 = vmatpush.bf16.msra.mxu0 0
      %3234 = vmatpush.bf16.msra.mxu0 0
      %3235 = vmatpush.bf16.msra.mxu0 0
      %3236 = vmatpush.bf16.msra.mxu0 0
      %3237 = vmatpush.bf16.msra.mxu0 %v3190
      %3238 = vmatmul.bf16.gmra.mxu0 %v3181
      %v3239 = vpop.f32.mrf.mxu0
      %v3240 = vadd.f32 0.0, %v3239
      %v3241 = vpop.f32.mrf.mxu0
      %3242 = vdwg.mxu0
      %3243 = vmatpush.bf16.msra.mxu0 0
      %3244 = vmatpush.bf16.msra.mxu0 0
      %3245 = vmatpush.bf16.msra.mxu0 0
      %3246 = vmatpush.bf16.msra.mxu0 0
      %3247 = vmatpush.bf16.msra.mxu0 0
      %3248 = vmatpush.bf16.msra.mxu0 0
      %3249 = vmatpush.bf16.msra.mxu0 0
      %3250 = vmatpush.bf16.msra.mxu0 %v3193
      %3251 = vmatmul.bf16.gmra.mxu0 %v3181
      %v3252 = vpop.f32.mrf.mxu0
      %v3253 = vadd.f32 0.0, %v3252
      %v3254 = vpop.f32.mrf.mxu0
      %3255 = vdwg.mxu0
      %3256 = vmatpush.bf16.msra.mxu0 0
      %3257 = vmatpush.bf16.msra.mxu0 0
      %3258 = vmatpush.bf16.msra.mxu0 0
      %3259 = vmatpush.bf16.msra.mxu0 0
      %3260 = vmatpush.bf16.msra.mxu0 0
      %3261 = vmatpush.bf16.msra.mxu0 0
      %3262 = vmatpush.bf16.msra.mxu0 0
      %3263 = vmatpush.bf16.msra.mxu0 %v3196
      %3264 = vmatmul.bf16.gmra.mxu0 %v3181
      %v3265 = vpop.f32.mrf.mxu0
      %v3266 = vadd.f32 0.0, %v3265
      %v3267 = vpop.f32.mrf.mxu0
      %3268 = vdwg.mxu0
      %3269 = vmatpush.bf16.msra.mxu0 0
      %3270 = vmatpush.bf16.msra.mxu0 0
      %3271 = vmatpush.bf16.msra.mxu0 0
      %3272 = vmatpush.bf16.msra.mxu0 0
      %3273 = vmatpush.bf16.msra.mxu0 0
      %3274 = vmatpush.bf16.msra.mxu0 0
      %3275 = vmatpush.bf16.msra.mxu0 0
      %3276 = vmatpush.bf16.msra.mxu0 %v3199
      %3277 = vmatmul.bf16.gmra.mxu0 %v3181
      %v3278 = vpop.f32.mrf.mxu0
      %v3279 = vadd.f32 0.0, %v3278
      %v3280 = vpop.f32.mrf.mxu0
      %3281 = vdwg.mxu0
      %3282 = vmatpush.bf16.msra.mxu0 0
      %3283 = vmatpush.bf16.msra.mxu0 0
      %3284 = vmatpush.bf16.msra.mxu0 0
      %3285 = vmatpush.bf16.msra.mxu0 0
      %3286 = vmatpush.bf16.msra.mxu0 0
      %3287 = vmatpush.bf16.msra.mxu0 0
      %3288 = vmatpush.bf16.msra.mxu0 0
      %3289 = vmatpush.bf16.msra.mxu0 %v3202
      %3290 = vmatmul.bf16.gmra.mxu0 %v3181
      %v3291 = vpop.f32.mrf.mxu0
      %v3292 = vadd.f32 0.0, %v3291
      %v3293 = vpop.f32.mrf.mxu0
      %3294 = vdwg.mxu0
      %v3295 = vadd.f32 %v3133, %v3214
      %v3296 = vadd.f32 %v3134, %v3227
      %v3297 = vadd.f32 %v3135, %v3240
      %v3298 = vadd.f32 %v3136, %v3253
      %v3299 = vadd.f32 %v3137, %v3266
      %v3300 = vadd.f32 %v3138, %v3279
      %v3301 = vadd.f32 %v3139, %v3292
      %3302 = vrot.lane.b32.xlu0 %v225, 52
      %v3303 = vpop.permute.xlu0 %3302
      %3304 = vst [vmem:[#allocation1] ss:$4 sm:$0xff] %v220
      %s3305 = scalar_lea.vmem [#allocation1], 32
      %3306 = vst [vmem:[%s3305] ss:$4 sm:$0xff] %v221
      %v3307 = vld.sshfl [vmem:[#allocation1 + $0x8] sm:$0xff pattern:$0x73625140]
      %v3309 = vld.sshfl [vmem:[#allocation1 + $0x10] sm:$0xff pattern:$0x73625140]
      %v3311 = vld.sshfl [vmem:[#allocation1 + $0x18] sm:$0xff pattern:$0x73625140]
      %v3313 = vld.sshfl [vmem:[#allocation1 + $0x20] sm:$0xff pattern:$0x73625140]
      %v3315 = vld.sshfl [vmem:[#allocation1 + $0x28] sm:$0xff pattern:$0x73625140]
      %v3317 = vld.sshfl [vmem:[#allocation1 + $0x30] sm:$0xff pattern:$0x73625140]
      %v3319 = vld.sshfl [vmem:[#allocation1 + $0x38] sm:$0xff pattern:$0x73625140]
      %3321 = vrot.lane.b32.xlu0 %v3307, 55
      %v3322 = vpop.permute.xlu0 %3321
      %3323 = vrot.lane.b32.xlu0 %v3309, 55
      %v3324 = vpop.permute.xlu0 %3323
      %3325 = vrot.lane.b32.xlu0 %v3311, 55
      %v3326 = vpop.permute.xlu0 %3325
      %3327 = vrot.lane.b32.xlu0 %v3313, 55
      %v3328 = vpop.permute.xlu0 %3327
      %3329 = vrot.lane.b32.xlu0 %v3315, 55
      %v3330 = vpop.permute.xlu0 %3329
      %3331 = vrot.lane.b32.xlu0 %v3317, 55
      %v3332 = vpop.permute.xlu0 %3331
      %3333 = vrot.lane.b32.xlu0 %v3319, 55
      %v3334 = vpop.permute.xlu0 %3333
      %vm3335 = vcmask 449536
      %v3336 = vsel %vm3335, %v3322, %v3324
      %v3337 = vsel %vm3335, %v3324, %v3326
      %v3338 = vsel %vm3335, %v3326, %v3328
      %v3339 = vsel %vm3335, %v3328, %v3330
      %v3340 = vsel %vm3335, %v3330, %v3332
      %v3341 = vsel %vm3335, %v3332, %v3334
      %v3343 = vsel %vm268, %v3303, 0
      %v3346 = vsel %vm272, %v3336, 0
      %v3349 = vsel %vm272, %v3337, 0
      %v3352 = vsel %vm272, %v3338, 0
      %v3355 = vsel %vm272, %v3339, 0
      %v3358 = vsel %vm272, %v3340, 0
      %v3361 = vsel %vm272, %v3341, 0
      %v3364 = vsel %vm272, %v3334, 0
      %3366 = vmatpush.bf16.msra.mxu0 0
      %3367 = vmatpush.bf16.msra.mxu0 0
      %3368 = vmatpush.bf16.msra.mxu0 0
      %3369 = vmatpush.bf16.msra.mxu0 0
      %3370 = vmatpush.bf16.msra.mxu0 0
      %3371 = vmatpush.bf16.msra.mxu0 0
      %3372 = vmatpush.bf16.msra.mxu0 0
      %3373 = vmatpush.bf16.msra.mxu0 %v3346
      %3374 = vmatmul.bf16.gmra.mxu0 %v3343
      %v3375 = vpop.f32.mrf.mxu0
      %v3376 = vadd.f32 0.0, %v3375
      %v3377 = vpop.f32.mrf.mxu0
      %3378 = vdwg.mxu0
      %3379 = vmatpush.bf16.msra.mxu0 0
      %3380 = vmatpush.bf16.msra.mxu0 0
      %3381 = vmatpush.bf16.msra.mxu0 0
      %3382 = vmatpush.bf16.msra.mxu0 0
      %3383 = vmatpush.bf16.msra.mxu0 0
      %3384 = vmatpush.bf16.msra.mxu0 0
      %3385 = vmatpush.bf16.msra.mxu0 0
      %3386 = vmatpush.bf16.msra.mxu0 %v3349
      %3387 = vmatmul.bf16.gmra.mxu0 %v3343
      %v3388 = vpop.f32.mrf.mxu0
      %v3389 = vadd.f32 0.0, %v3388
      %v3390 = vpop.f32.mrf.mxu0
      %3391 = vdwg.mxu0
      %3392 = vmatpush.bf16.msra.mxu0 0
      %3393 = vmatpush.bf16.msra.mxu0 0
      %3394 = vmatpush.bf16.msra.mxu0 0
      %3395 = vmatpush.bf16.msra.mxu0 0
      %3396 = vmatpush.bf16.msra.mxu0 0
      %3397 = vmatpush.bf16.msra.mxu0 0
      %3398 = vmatpush.bf16.msra.mxu0 0
      %3399 = vmatpush.bf16.msra.mxu0 %v3352
      %3400 = vmatmul.bf16.gmra.mxu0 %v3343
      %v3401 = vpop.f32.mrf.mxu0
      %v3402 = vadd.f32 0.0, %v3401
      %v3403 = vpop.f32.mrf.mxu0
      %3404 = vdwg.mxu0
      %3405 = vmatpush.bf16.msra.mxu0 0
      %3406 = vmatpush.bf16.msra.mxu0 0
      %3407 = vmatpush.bf16.msra.mxu0 0
      %3408 = vmatpush.bf16.msra.mxu0 0
      %3409 = vmatpush.bf16.msra.mxu0 0
      %3410 = vmatpush.bf16.msra.mxu0 0
      %3411 = vmatpush.bf16.msra.mxu0 0
      %3412 = vmatpush.bf16.msra.mxu0 %v3355
      %3413 = vmatmul.bf16.gmra.mxu0 %v3343
      %v3414 = vpop.f32.mrf.mxu0
      %v3415 = vadd.f32 0.0, %v3414
      %v3416 = vpop.f32.mrf.mxu0
      %3417 = vdwg.mxu0
      %3418 = vmatpush.bf16.msra.mxu0 0
      %3419 = vmatpush.bf16.msra.mxu0 0
      %3420 = vmatpush.bf16.msra.mxu0 0
      %3421 = vmatpush.bf16.msra.mxu0 0
      %3422 = vmatpush.bf16.msra.mxu0 0
      %3423 = vmatpush.bf16.msra.mxu0 0
      %3424 = vmatpush.bf16.msra.mxu0 0
      %3425 = vmatpush.bf16.msra.mxu0 %v3358
      %3426 = vmatmul.bf16.gmra.mxu0 %v3343
      %v3427 = vpop.f32.mrf.mxu0
      %v3428 = vadd.f32 0.0, %v3427
      %v3429 = vpop.f32.mrf.mxu0
      %3430 = vdwg.mxu0
      %3431 = vmatpush.bf16.msra.mxu0 0
      %3432 = vmatpush.bf16.msra.mxu0 0
      %3433 = vmatpush.bf16.msra.mxu0 0
      %3434 = vmatpush.bf16.msra.mxu0 0
      %3435 = vmatpush.bf16.msra.mxu0 0
      %3436 = vmatpush.bf16.msra.mxu0 0
      %3437 = vmatpush.bf16.msra.mxu0 0
      %3438 = vmatpush.bf16.msra.mxu0 %v3361
      %3439 = vmatmul.bf16.gmra.mxu0 %v3343
      %v3440 = vpop.f32.mrf.mxu0
      %v3441 = vadd.f32 0.0, %v3440
      %v3442 = vpop.f32.mrf.mxu0
      %3443 = vdwg.mxu0
      %3444 = vmatpush.bf16.msra.mxu0 0
      %3445 = vmatpush.bf16.msra.mxu0 0
      %3446 = vmatpush.bf16.msra.mxu0 0
      %3447 = vmatpush.bf16.msra.mxu0 0
      %3448 = vmatpush.bf16.msra.mxu0 0
      %3449 = vmatpush.bf16.msra.mxu0 0
      %3450 = vmatpush.bf16.msra.mxu0 0
      %3451 = vmatpush.bf16.msra.mxu0 %v3364
      %3452 = vmatmul.bf16.gmra.mxu0 %v3343
      %v3453 = vpop.f32.mrf.mxu0
      %v3454 = vadd.f32 0.0, %v3453
      %v3455 = vpop.f32.mrf.mxu0
      %3456 = vdwg.mxu0
      %v3457 = vadd.f32 %v3295, %v3376
      %v3458 = vadd.f32 %v3296, %v3389
      %v3459 = vadd.f32 %v3297, %v3402
      %v3460 = vadd.f32 %v3298, %v3415
      %v3461 = vadd.f32 %v3299, %v3428
      %v3462 = vadd.f32 %v3300, %v3441
      %v3463 = vadd.f32 %v3301, %v3454
      %3464 = vrot.lane.b32.xlu0 %v225, 48
      %v3465 = vpop.permute.xlu0 %3464
      %3466 = vst [vmem:[#allocation1] ss:$4 sm:$0xff] %v220
      %s3467 = scalar_lea.vmem [#allocation1], 32
      %3468 = vst [vmem:[%s3467] ss:$4 sm:$0xff] %v221
      %v3469 = vld.sshfl [vmem:[#allocation1 + $0x8] sm:$0xff pattern:$0x73625140]
      %v3471 = vld.sshfl [vmem:[#allocation1 + $0x10] sm:$0xff pattern:$0x73625140]
      %v3473 = vld.sshfl [vmem:[#allocation1 + $0x18] sm:$0xff pattern:$0x73625140]
      %v3475 = vld.sshfl [vmem:[#allocation1 + $0x20] sm:$0xff pattern:$0x73625140]
      %v3477 = vld.sshfl [vmem:[#allocation1 + $0x28] sm:$0xff pattern:$0x73625140]
      %v3479 = vld.sshfl [vmem:[#allocation1 + $0x30] sm:$0xff pattern:$0x73625140]
      %v3481 = vld.sshfl [vmem:[#allocation1 + $0x38] sm:$0xff pattern:$0x73625140]
      %3483 = vrot.lane.b32.xlu0 %v3469, 54
      %v3484 = vpop.permute.xlu0 %3483
      %3485 = vrot.lane.b32.xlu0 %v3471, 54
      %v3486 = vpop.permute.xlu0 %3485
      %3487 = vrot.lane.b32.xlu0 %v3473, 54
      %v3488 = vpop.permute.xlu0 %3487
      %3489 = vrot.lane.b32.xlu0 %v3475, 54
      %v3490 = vpop.permute.xlu0 %3489
      %3491 = vrot.lane.b32.xlu0 %v3477, 54
      %v3492 = vpop.permute.xlu0 %3491
      %3493 = vrot.lane.b32.xlu0 %v3479, 54
      %v3494 = vpop.permute.xlu0 %3493
      %3495 = vrot.lane.b32.xlu0 %v3481, 54
      %v3496 = vpop.permute.xlu0 %3495
      %vm3497 = vcmask 441344
      %v3498 = vsel %vm3497, %v3484, %v3486
      %v3499 = vsel %vm3497, %v3486, %v3488
      %v3500 = vsel %vm3497, %v3488, %v3490
      %v3501 = vsel %vm3497, %v3490, %v3492
      %v3502 = vsel %vm3497, %v3492, %v3494
      %v3503 = vsel %vm3497, %v3494, %v3496
      %v3505 = vsel %vm268, %v3465, 0
      %v3508 = vsel %vm272, %v3498, 0
      %v3511 = vsel %vm272, %v3499, 0
      %v3514 = vsel %vm272, %v3500, 0
      %v3517 = vsel %vm272, %v3501, 0
      %v3520 = vsel %vm272, %v3502, 0
      %v3523 = vsel %vm272, %v3503, 0
      %v3526 = vsel %vm272, %v3496, 0
      %3528 = vmatpush.bf16.msra.mxu0 0
      %3529 = vmatpush.bf16.msra.mxu0 0
      %3530 = vmatpush.bf16.msra.mxu0 0
      %3531 = vmatpush.bf16.msra.mxu0 0
      %3532 = vmatpush.bf16.msra.mxu0 0
      %3533 = vmatpush.bf16.msra.mxu0 0
      %3534 = vmatpush.bf16.msra.mxu0 0
      %3535 = vmatpush.bf16.msra.mxu0 %v3508
      %3536 = vmatmul.bf16.gmra.mxu0 %v3505
      %v3537 = vpop.f32.mrf.mxu0
      %v3538 = vadd.f32 0.0, %v3537
      %v3539 = vpop.f32.mrf.mxu0
      %3540 = vdwg.mxu0
      %3541 = vmatpush.bf16.msra.mxu0 0
      %3542 = vmatpush.bf16.msra.mxu0 0
      %3543 = vmatpush.bf16.msra.mxu0 0
      %3544 = vmatpush.bf16.msra.mxu0 0
      %3545 = vmatpush.bf16.msra.mxu0 0
      %3546 = vmatpush.bf16.msra.mxu0 0
      %3547 = vmatpush.bf16.msra.mxu0 0
      %3548 = vmatpush.bf16.msra.mxu0 %v3511
      %3549 = vmatmul.bf16.gmra.mxu0 %v3505
      %v3550 = vpop.f32.mrf.mxu0
      %v3551 = vadd.f32 0.0, %v3550
      %v3552 = vpop.f32.mrf.mxu0
      %3553 = vdwg.mxu0
      %3554 = vmatpush.bf16.msra.mxu0 0
      %3555 = vmatpush.bf16.msra.mxu0 0
      %3556 = vmatpush.bf16.msra.mxu0 0
      %3557 = vmatpush.bf16.msra.mxu0 0
      %3558 = vmatpush.bf16.msra.mxu0 0
      %3559 = vmatpush.bf16.msra.mxu0 0
      %3560 = vmatpush.bf16.msra.mxu0 0
      %3561 = vmatpush.bf16.msra.mxu0 %v3514
      %3562 = vmatmul.bf16.gmra.mxu0 %v3505
      %v3563 = vpop.f32.mrf.mxu0
      %v3564 = vadd.f32 0.0, %v3563
      %v3565 = vpop.f32.mrf.mxu0
      %3566 = vdwg.mxu0
      %3567 = vmatpush.bf16.msra.mxu0 0
      %3568 = vmatpush.bf16.msra.mxu0 0
      %3569 = vmatpush.bf16.msra.mxu0 0
      %3570 = vmatpush.bf16.msra.mxu0 0
      %3571 = vmatpush.bf16.msra.mxu0 0
      %3572 = vmatpush.bf16.msra.mxu0 0
      %3573 = vmatpush.bf16.msra.mxu0 0
      %3574 = vmatpush.bf16.msra.mxu0 %v3517
      %3575 = vmatmul.bf16.gmra.mxu0 %v3505
      %v3576 = vpop.f32.mrf.mxu0
      %v3577 = vadd.f32 0.0, %v3576
      %v3578 = vpop.f32.mrf.mxu0
      %3579 = vdwg.mxu0
      %3580 = vmatpush.bf16.msra.mxu0 0
      %3581 = vmatpush.bf16.msra.mxu0 0
      %3582 = vmatpush.bf16.msra.mxu0 0
      %3583 = vmatpush.bf16.msra.mxu0 0
      %3584 = vmatpush.bf16.msra.mxu0 0
      %3585 = vmatpush.bf16.msra.mxu0 0
      %3586 = vmatpush.bf16.msra.mxu0 0
      %3587 = vmatpush.bf16.msra.mxu0 %v3520
      %3588 = vmatmul.bf16.gmra.mxu0 %v3505
      %v3589 = vpop.f32.mrf.mxu0
      %v3590 = vadd.f32 0.0, %v3589
      %v3591 = vpop.f32.mrf.mxu0
      %3592 = vdwg.mxu0
      %3593 = vmatpush.bf16.msra.mxu0 0
      %3594 = vmatpush.bf16.msra.mxu0 0
      %3595 = vmatpush.bf16.msra.mxu0 0
      %3596 = vmatpush.bf16.msra.mxu0 0
      %3597 = vmatpush.bf16.msra.mxu0 0
      %3598 = vmatpush.bf16.msra.mxu0 0
      %3599 = vmatpush.bf16.msra.mxu0 0
      %3600 = vmatpush.bf16.msra.mxu0 %v3523
      %3601 = vmatmul.bf16.gmra.mxu0 %v3505
      %v3602 = vpop.f32.mrf.mxu0
      %v3603 = vadd.f32 0.0, %v3602
      %v3604 = vpop.f32.mrf.mxu0
      %3605 = vdwg.mxu0
      %3606 = vmatpush.bf16.msra.mxu0 0
      %3607 = vmatpush.bf16.msra.mxu0 0
      %3608 = vmatpush.bf16.msra.mxu0 0
      %3609 = vmatpush.bf16.msra.mxu0 0
      %3610 = vmatpush.bf16.msra.mxu0 0
      %3611 = vmatpush.bf16.msra.mxu0 0
      %3612 = vmatpush.bf16.msra.mxu0 0
      %3613 = vmatpush.bf16.msra.mxu0 %v3526
      %3614 = vmatmul.bf16.gmra.mxu0 %v3505
      %v3615 = vpop.f32.mrf.mxu0
      %v3616 = vadd.f32 0.0, %v3615
      %v3617 = vpop.f32.mrf.mxu0
      %3618 = vdwg.mxu0
      %v3619 = vadd.f32 %v3457, %v3538
      %v3620 = vadd.f32 %v3458, %v3551
      %v3621 = vadd.f32 %v3459, %v3564
      %v3622 = vadd.f32 %v3460, %v3577
      %v3623 = vadd.f32 %v3461, %v3590
      %v3624 = vadd.f32 %v3462, %v3603
      %v3625 = vadd.f32 %v3463, %v3616
      %3626 = vrot.lane.b32.xlu0 %v225, 44
      %v3627 = vpop.permute.xlu0 %3626
      %3628 = vst [vmem:[#allocation1] ss:$4 sm:$0xff] %v220
      %s3629 = scalar_lea.vmem [#allocation1], 32
      %3630 = vst [vmem:[%s3629] ss:$4 sm:$0xff] %v221
      %v3631 = vld.sshfl [vmem:[#allocation1 + $0x8] sm:$0xff pattern:$0x73625140]
      %v3633 = vld.sshfl [vmem:[#allocation1 + $0x10] sm:$0xff pattern:$0x73625140]
      %v3635 = vld.sshfl [vmem:[#allocation1 + $0x18] sm:$0xff pattern:$0x73625140]
      %v3637 = vld.sshfl [vmem:[#allocation1 + $0x20] sm:$0xff pattern:$0x73625140]
      %v3639 = vld.sshfl [vmem:[#allocation1 + $0x28] sm:$0xff pattern:$0x73625140]
      %v3641 = vld.sshfl [vmem:[#allocation1 + $0x30] sm:$0xff pattern:$0x73625140]
      %v3643 = vld.sshfl [vmem:[#allocation1 + $0x38] sm:$0xff pattern:$0x73625140]
      %3645 = vrot.lane.b32.xlu0 %v3631, 46
      %v3646 = vpop.permute.xlu0 %3645
      %3647 = vrot.lane.b32.xlu0 %v3633, 46
      %v3648 = vpop.permute.xlu0 %3647
      %3649 = vrot.lane.b32.xlu0 %v3635, 46
      %v3650 = vpop.permute.xlu0 %3649
      %3651 = vrot.lane.b32.xlu0 %v3637, 46
      %v3652 = vpop.permute.xlu0 %3651
      %3653 = vrot.lane.b32.xlu0 %v3639, 46
      %v3654 = vpop.permute.xlu0 %3653
      %3655 = vrot.lane.b32.xlu0 %v3641, 46
      %v3656 = vpop.permute.xlu0 %3655
      %3657 = vrot.lane.b32.xlu0 %v3643, 46
      %v3658 = vpop.permute.xlu0 %3657
      %vm3659 = vcmask 375808
      %v3660 = vsel %vm3659, %v3646, %v3648
      %v3661 = vsel %vm3659, %v3648, %v3650
      %v3662 = vsel %vm3659, %v3650, %v3652
      %v3663 = vsel %vm3659, %v3652, %v3654
      %v3664 = vsel %vm3659, %v3654, %v3656
      %v3665 = vsel %vm3659, %v3656, %v3658
      %v3667 = vsel %vm268, %v3627, 0
      %v3670 = vsel %vm272, %v3660, 0
      %v3673 = vsel %vm272, %v3661, 0
      %v3676 = vsel %vm272, %v3662, 0
      %v3679 = vsel %vm272, %v3663, 0
      %v3682 = vsel %vm272, %v3664, 0
      %v3685 = vsel %vm272, %v3665, 0
      %v3688 = vsel %vm272, %v3658, 0
      %3690 = vmatpush.bf16.msra.mxu0 0
      %3691 = vmatpush.bf16.msra.mxu0 0
      %3692 = vmatpush.bf16.msra.mxu0 0
      %3693 = vmatpush.bf16.msra.mxu0 0
      %3694 = vmatpush.bf16.msra.mxu0 0
      %3695 = vmatpush.bf16.msra.mxu0 0
      %3696 = vmatpush.bf16.msra.mxu0 0
      %3697 = vmatpush.bf16.msra.mxu0 %v3670
      %3698 = vmatmul.bf16.gmra.mxu0 %v3667
      %v3699 = vpop.f32.mrf.mxu0
      %v3700 = vadd.f32 0.0, %v3699
      %v3701 = vpop.f32.mrf.mxu0
      %3702 = vdwg.mxu0
      %3703 = vmatpush.bf16.msra.mxu0 0
      %3704 = vmatpush.bf16.msra.mxu0 0
      %3705 = vmatpush.bf16.msra.mxu0 0
      %3706 = vmatpush.bf16.msra.mxu0 0
      %3707 = vmatpush.bf16.msra.mxu0 0
      %3708 = vmatpush.bf16.msra.mxu0 0
      %3709 = vmatpush.bf16.msra.mxu0 0
      %3710 = vmatpush.bf16.msra.mxu0 %v3673
      %3711 = vmatmul.bf16.gmra.mxu0 %v3667
      %v3712 = vpop.f32.mrf.mxu0
      %v3713 = vadd.f32 0.0, %v3712
      %v3714 = vpop.f32.mrf.mxu0
      %3715 = vdwg.mxu0
      %3716 = vmatpush.bf16.msra.mxu0 0
      %3717 = vmatpush.bf16.msra.mxu0 0
      %3718 = vmatpush.bf16.msra.mxu0 0
      %3719 = vmatpush.bf16.msra.mxu0 0
      %3720 = vmatpush.bf16.msra.mxu0 0
      %3721 = vmatpush.bf16.msra.mxu0 0
      %3722 = vmatpush.bf16.msra.mxu0 0
      %3723 = vmatpush.bf16.msra.mxu0 %v3676
      %3724 = vmatmul.bf16.gmra.mxu0 %v3667
      %v3725 = vpop.f32.mrf.mxu0
      %v3726 = vadd.f32 0.0, %v3725
      %v3727 = vpop.f32.mrf.mxu0
      %3728 = vdwg.mxu0
      %3729 = vmatpush.bf16.msra.mxu0 0
      %3730 = vmatpush.bf16.msra.mxu0 0
      %3731 = vmatpush.bf16.msra.mxu0 0
      %3732 = vmatpush.bf16.msra.mxu0 0
      %3733 = vmatpush.bf16.msra.mxu0 0
      %3734 = vmatpush.bf16.msra.mxu0 0
      %3735 = vmatpush.bf16.msra.mxu0 0
      %3736 = vmatpush.bf16.msra.mxu0 %v3679
      %3737 = vmatmul.bf16.gmra.mxu0 %v3667
      %v3738 = vpop.f32.mrf.mxu0
      %v3739 = vadd.f32 0.0, %v3738
      %v3740 = vpop.f32.mrf.mxu0
      %3741 = vdwg.mxu0
      %3742 = vmatpush.bf16.msra.mxu0 0
      %3743 = vmatpush.bf16.msra.mxu0 0
      %3744 = vmatpush.bf16.msra.mxu0 0
      %3745 = vmatpush.bf16.msra.mxu0 0
      %3746 = vmatpush.bf16.msra.mxu0 0
      %3747 = vmatpush.bf16.msra.mxu0 0
      %3748 = vmatpush.bf16.msra.mxu0 0
      %3749 = vmatpush.bf16.msra.mxu0 %v3682
      %3750 = vmatmul.bf16.gmra.mxu0 %v3667
      %v3751 = vpop.f32.mrf.mxu0
      %v3752 = vadd.f32 0.0, %v3751
      %v3753 = vpop.f32.mrf.mxu0
      %3754 = vdwg.mxu0
      %3755 = vmatpush.bf16.msra.mxu0 0
      %3756 = vmatpush.bf16.msra.mxu0 0
      %3757 = vmatpush.bf16.msra.mxu0 0
      %3758 = vmatpush.bf16.msra.mxu0 0
      %3759 = vmatpush.bf16.msra.mxu0 0
      %3760 = vmatpush.bf16.msra.mxu0 0
      %3761 = vmatpush.bf16.msra.mxu0 0
      %3762 = vmatpush.bf16.msra.mxu0 %v3685
      %3763 = vmatmul.bf16.gmra.mxu0 %v3667
      %v3764 = vpop.f32.mrf.mxu0
      %v3765 = vadd.f32 0.0, %v3764
      %v3766 = vpop.f32.mrf.mxu0
      %3767 = vdwg.mxu0
      %3768 = vmatpush.bf16.msra.mxu0 0
      %3769 = vmatpush.bf16.msra.mxu0 0
      %3770 = vmatpush.bf16.msra.mxu0 0
      %3771 = vmatpush.bf16.msra.mxu0 0
      %3772 = vmatpush.bf16.msra.mxu0 0
      %3773 = vmatpush.bf16.msra.mxu0 0
      %3774 = vmatpush.bf16.msra.mxu0 0
      %3775 = vmatpush.bf16.msra.mxu0 %v3688
      %3776 = vmatmul.bf16.gmra.mxu0 %v3667
      %v3777 = vpop.f32.mrf.mxu0
      %v3778 = vadd.f32 0.0, %v3777
      %v3779 = vpop.f32.mrf.mxu0
      %3780 = vdwg.mxu0
      %v3781 = vadd.f32 %v3619, %v3700
      %v3782 = vadd.f32 %v3620, %v3713
      %v3783 = vadd.f32 %v3621, %v3726
      %v3784 = vadd.f32 %v3622, %v3739
      %v3785 = vadd.f32 %v3623, %v3752
      %v3786 = vadd.f32 %v3624, %v3765
      %v3787 = vadd.f32 %v3625, %v3778
      %3788 = vrot.lane.b32.xlu0 %v225, 40
      %v3789 = vpop.permute.xlu0 %3788
      %3790 = vst [vmem:[#allocation1] ss:$4 sm:$0xff] %v220
      %s3791 = scalar_lea.vmem [#allocation1], 32
      %3792 = vst [vmem:[%s3791] ss:$4 sm:$0xff] %v221
      %v3793 = vld.sshfl [vmem:[#allocation1 + $0x8] sm:$0xff pattern:$0x73625140]
      %v3795 = vld.sshfl [vmem:[#allocation1 + $0x10] sm:$0xff pattern:$0x73625140]
      %v3797 = vld.sshfl [vmem:[#allocation1 + $0x18] sm:$0xff pattern:$0x73625140]
      %v3799 = vld.sshfl [vmem:[#allocation1 + $0x20] sm:$0xff pattern:$0x73625140]
      %v3801 = vld.sshfl [vmem:[#allocation1 + $0x28] sm:$0xff pattern:$0x73625140]
      %v3803 = vld.sshfl [vmem:[#allocation1 + $0x30] sm:$0xff pattern:$0x73625140]
      %v3805 = vld.sshfl [vmem:[#allocation1 + $0x38] sm:$0xff pattern:$0x73625140]
      %3807 = vrot.lane.b32.xlu0 %v3793, 45
      %v3808 = vpop.permute.xlu0 %3807
      %3809 = vrot.lane.b32.xlu0 %v3795, 45
      %v3810 = vpop.permute.xlu0 %3809
      %3811 = vrot.lane.b32.xlu0 %v3797, 45
      %v3812 = vpop.permute.xlu0 %3811
      %3813 = vrot.lane.b32.xlu0 %v3799, 45
      %v3814 = vpop.permute.xlu0 %3813
      %3815 = vrot.lane.b32.xlu0 %v3801, 45
      %v3816 = vpop.permute.xlu0 %3815
      %3817 = vrot.lane.b32.xlu0 %v3803, 45
      %v3818 = vpop.permute.xlu0 %3817
      %3819 = vrot.lane.b32.xlu0 %v3805, 45
      %v3820 = vpop.permute.xlu0 %3819
      %vm3821 = vcmask 367616
      %v3822 = vsel %vm3821, %v3808, %v3810
      %v3823 = vsel %vm3821, %v3810, %v3812
      %v3824 = vsel %vm3821, %v3812, %v3814
      %v3825 = vsel %vm3821, %v3814, %v3816
      %v3826 = vsel %vm3821, %v3816, %v3818
      %v3827 = vsel %vm3821, %v3818, %v3820
      %v3829 = vsel %vm268, %v3789, 0
      %v3832 = vsel %vm272, %v3822, 0
      %v3835 = vsel %vm272, %v3823, 0
      %v3838 = vsel %vm272, %v3824, 0
      %v3841 = vsel %vm272, %v3825, 0
      %v3844 = vsel %vm272, %v3826, 0
      %v3847 = vsel %vm272, %v3827, 0
      %v3850 = vsel %vm272, %v3820, 0
      %3852 = vmatpush.bf16.msra.mxu0 0
      %3853 = vmatpush.bf16.msra.mxu0 0
      %3854 = vmatpush.bf16.msra.mxu0 0
      %3855 = vmatpush.bf16.msra.mxu0 0
      %3856 = vmatpush.bf16.msra.mxu0 0
      %3857 = vmatpush.bf16.msra.mxu0 0
      %3858 = vmatpush.bf16.msra.mxu0 0
      %3859 = vmatpush.bf16.msra.mxu0 %v3832
      %3860 = vmatmul.bf16.gmra.mxu0 %v3829
      %v3861 = vpop.f32.mrf.mxu0
      %v3862 = vadd.f32 0.0, %v3861
      %v3863 = vpop.f32.mrf.mxu0
      %3864 = vdwg.mxu0
      %3865 = vmatpush.bf16.msra.mxu0 0
      %3866 = vmatpush.bf16.msra.mxu0 0
      %3867 = vmatpush.bf16.msra.mxu0 0
      %3868 = vmatpush.bf16.msra.mxu0 0
      %3869 = vmatpush.bf16.msra.mxu0 0
      %3870 = vmatpush.bf16.msra.mxu0 0
      %3871 = vmatpush.bf16.msra.mxu0 0
      %3872 = vmatpush.bf16.msra.mxu0 %v3835
      %3873 = vmatmul.bf16.gmra.mxu0 %v3829
      %v3874 = vpop.f32.mrf.mxu0
      %v3875 = vadd.f32 0.0, %v3874
      %v3876 = vpop.f32.mrf.mxu0
      %3877 = vdwg.mxu0
      %3878 = vmatpush.bf16.msra.mxu0 0
      %3879 = vmatpush.bf16.msra.mxu0 0
      %3880 = vmatpush.bf16.msra.mxu0 0
      %3881 = vmatpush.bf16.msra.mxu0 0
      %3882 = vmatpush.bf16.msra.mxu0 0
      %3883 = vmatpush.bf16.msra.mxu0 0
      %3884 = vmatpush.bf16.msra.mxu0 0
      %3885 = vmatpush.bf16.msra.mxu0 %v3838
      %3886 = vmatmul.bf16.gmra.mxu0 %v3829
      %v3887 = vpop.f32.mrf.mxu0
      %v3888 = vadd.f32 0.0, %v3887
      %v3889 = vpop.f32.mrf.mxu0
      %3890 = vdwg.mxu0
      %3891 = vmatpush.bf16.msra.mxu0 0
      %3892 = vmatpush.bf16.msra.mxu0 0
      %3893 = vmatpush.bf16.msra.mxu0 0
      %3894 = vmatpush.bf16.msra.mxu0 0
      %3895 = vmatpush.bf16.msra.mxu0 0
      %3896 = vmatpush.bf16.msra.mxu0 0
      %3897 = vmatpush.bf16.msra.mxu0 0
      %3898 = vmatpush.bf16.msra.mxu0 %v3841
      %3899 = vmatmul.bf16.gmra.mxu0 %v3829
      %v3900 = vpop.f32.mrf.mxu0
      %v3901 = vadd.f32 0.0, %v3900
      %v3902 = vpop.f32.mrf.mxu0
      %3903 = vdwg.mxu0
      %3904 = vmatpush.bf16.msra.mxu0 0
      %3905 = vmatpush.bf16.msra.mxu0 0
      %3906 = vmatpush.bf16.msra.mxu0 0
      %3907 = vmatpush.bf16.msra.mxu0 0
      %3908 = vmatpush.bf16.msra.mxu0 0
      %3909 = vmatpush.bf16.msra.mxu0 0
      %3910 = vmatpush.bf16.msra.mxu0 0
      %3911 = vmatpush.bf16.msra.mxu0 %v3844
      %3912 = vmatmul.bf16.gmra.mxu0 %v3829
      %v3913 = vpop.f32.mrf.mxu0
      %v3914 = vadd.f32 0.0, %v3913
      %v3915 = vpop.f32.mrf.mxu0
      %3916 = vdwg.mxu0
      %3917 = vmatpush.bf16.msra.mxu0 0
      %3918 = vmatpush.bf16.msra.mxu0 0
      %3919 = vmatpush.bf16.msra.mxu0 0
      %3920 = vmatpush.bf16.msra.mxu0 0
      %3921 = vmatpush.bf16.msra.mxu0 0
      %3922 = vmatpush.bf16.msra.mxu0 0
      %3923 = vmatpush.bf16.msra.mxu0 0
      %3924 = vmatpush.bf16.msra.mxu0 %v3847
      %3925 = vmatmul.bf16.gmra.mxu0 %v3829
      %v3926 = vpop.f32.mrf.mxu0
      %v3927 = vadd.f32 0.0, %v3926
      %v3928 = vpop.f32.mrf.mxu0
      %3929 = vdwg.mxu0
      %3930 = vmatpush.bf16.msra.mxu0 0
      %3931 = vmatpush.bf16.msra.mxu0 0
      %3932 = vmatpush.bf16.msra.mxu0 0
      %3933 = vmatpush.bf16.msra.mxu0 0
      %3934 = vmatpush.bf16.msra.mxu0 0
      %3935 = vmatpush.bf16.msra.mxu0 0
      %3936 = vmatpush.bf16.msra.mxu0 0
      %3937 = vmatpush.bf16.msra.mxu0 %v3850
      %3938 = vmatmul.bf16.gmra.mxu0 %v3829
      %v3939 = vpop.f32.mrf.mxu0
      %v3940 = vadd.f32 0.0, %v3939
      %v3941 = vpop.f32.mrf.mxu0
      %3942 = vdwg.mxu0
      %v3943 = vadd.f32 %v3781, %v3862
      %v3944 = vadd.f32 %v3782, %v3875
      %v3945 = vadd.f32 %v3783, %v3888
      %v3946 = vadd.f32 %v3784, %v3901
      %v3947 = vadd.f32 %v3785, %v3914
      %v3948 = vadd.f32 %v3786, %v3927
      %v3949 = vadd.f32 %v3787, %v3940
      %3950 = vrot.lane.b32.xlu0 %v225, 36
      %v3951 = vpop.permute.xlu0 %3950
      %3952 = vst [vmem:[#allocation1] ss:$4 sm:$0xff] %v220
      %s3953 = scalar_lea.vmem [#allocation1], 32
      %3954 = vst [vmem:[%s3953] ss:$4 sm:$0xff] %v221
      %v3955 = vld.sshfl [vmem:[#allocation1 + $0x8] sm:$0xff pattern:$0x73625140]
      %v3957 = vld.sshfl [vmem:[#allocation1 + $0x10] sm:$0xff pattern:$0x73625140]
      %v3959 = vld.sshfl [vmem:[#allocation1 + $0x18] sm:$0xff pattern:$0x73625140]
      %v3961 = vld.sshfl [vmem:[#allocation1 + $0x20] sm:$0xff pattern:$0x73625140]
      %v3963 = vld.sshfl [vmem:[#allocation1 + $0x28] sm:$0xff pattern:$0x73625140]
      %v3965 = vld.sshfl [vmem:[#allocation1 + $0x30] sm:$0xff pattern:$0x73625140]
      %v3967 = vld.sshfl [vmem:[#allocation1 + $0x38] sm:$0xff pattern:$0x73625140]
      %3969 = vrot.lane.b32.xlu0 %v3955, 44
      %v3970 = vpop.permute.xlu0 %3969
      %3971 = vrot.lane.b32.xlu0 %v3957, 44
      %v3972 = vpop.permute.xlu0 %3971
      %3973 = vrot.lane.b32.xlu0 %v3959, 44
      %v3974 = vpop.permute.xlu0 %3973
      %3975 = vrot.lane.b32.xlu0 %v3961, 44
      %v3976 = vpop.permute.xlu0 %3975
      %3977 = vrot.lane.b32.xlu0 %v3963, 44
      %v3978 = vpop.permute.xlu0 %3977
      %3979 = vrot.lane.b32.xlu0 %v3965, 44
      %v3980 = vpop.permute.xlu0 %3979
      %3981 = vrot.lane.b32.xlu0 %v3967, 44
      %v3982 = vpop.permute.xlu0 %3981
      %vm3983 = vcmask 359424
      %v3984 = vsel %vm3983, %v3970, %v3972
      %v3985 = vsel %vm3983, %v3972, %v3974
      %v3986 = vsel %vm3983, %v3974, %v3976
      %v3987 = vsel %vm3983, %v3976, %v3978
      %v3988 = vsel %vm3983, %v3978, %v3980
      %v3989 = vsel %vm3983, %v3980, %v3982
      %v3991 = vsel %vm268, %v3951, 0
      %v3994 = vsel %vm272, %v3984, 0
      %v3997 = vsel %vm272, %v3985, 0
      %v4000 = vsel %vm272, %v3986, 0
      %v4003 = vsel %vm272, %v3987, 0
      %v4006 = vsel %vm272, %v3988, 0
      %v4009 = vsel %vm272, %v3989, 0
      %v4012 = vsel %vm272, %v3982, 0
      %4014 = vmatpush.bf16.msra.mxu0 0
      %4015 = vmatpush.bf16.msra.mxu0 0
      %4016 = vmatpush.bf16.msra.mxu0 0
      %4017 = vmatpush.bf16.msra.mxu0 0
      %4018 = vmatpush.bf16.msra.mxu0 0
      %4019 = vmatpush.bf16.msra.mxu0 0
      %4020 = vmatpush.bf16.msra.mxu0 0
      %4021 = vmatpush.bf16.msra.mxu0 %v3994
      %4022 = vmatmul.bf16.gmra.mxu0 %v3991
      %v4023 = vpop.f32.mrf.mxu0
      %v4024 = vadd.f32 0.0, %v4023
      %v4025 = vpop.f32.mrf.mxu0
      %4026 = vdwg.mxu0
      %4027 = vmatpush.bf16.msra.mxu0 0
      %4028 = vmatpush.bf16.msra.mxu0 0
      %4029 = vmatpush.bf16.msra.mxu0 0
      %4030 = vmatpush.bf16.msra.mxu0 0
      %4031 = vmatpush.bf16.msra.mxu0 0
      %4032 = vmatpush.bf16.msra.mxu0 0
      %4033 = vmatpush.bf16.msra.mxu0 0
      %4034 = vmatpush.bf16.msra.mxu0 %v3997
      %4035 = vmatmul.bf16.gmra.mxu0 %v3991
      %v4036 = vpop.f32.mrf.mxu0
      %v4037 = vadd.f32 0.0, %v4036
      %v4038 = vpop.f32.mrf.mxu0
      %4039 = vdwg.mxu0
      %4040 = vmatpush.bf16.msra.mxu0 0
      %4041 = vmatpush.bf16.msra.mxu0 0
      %4042 = vmatpush.bf16.msra.mxu0 0
      %4043 = vmatpush.bf16.msra.mxu0 0
      %4044 = vmatpush.bf16.msra.mxu0 0
      %4045 = vmatpush.bf16.msra.mxu0 0
      %4046 = vmatpush.bf16.msra.mxu0 0
      %4047 = vmatpush.bf16.msra.mxu0 %v4000
      %4048 = vmatmul.bf16.gmra.mxu0 %v3991
      %v4049 = vpop.f32.mrf.mxu0
      %v4050 = vadd.f32 0.0, %v4049
      %v4051 = vpop.f32.mrf.mxu0
      %4052 = vdwg.mxu0
      %4053 = vmatpush.bf16.msra.mxu0 0
      %4054 = vmatpush.bf16.msra.mxu0 0
      %4055 = vmatpush.bf16.msra.mxu0 0
      %4056 = vmatpush.bf16.msra.mxu0 0
      %4057 = vmatpush.bf16.msra.mxu0 0
      %4058 = vmatpush.bf16.msra.mxu0 0
      %4059 = vmatpush.bf16.msra.mxu0 0
      %4060 = vmatpush.bf16.msra.mxu0 %v4003
      %4061 = vmatmul.bf16.gmra.mxu0 %v3991
      %v4062 = vpop.f32.mrf.mxu0
      %v4063 = vadd.f32 0.0, %v4062
      %v4064 = vpop.f32.mrf.mxu0
      %4065 = vdwg.mxu0
      %4066 = vmatpush.bf16.msra.mxu0 0
      %4067 = vmatpush.bf16.msra.mxu0 0
      %4068 = vmatpush.bf16.msra.mxu0 0
      %4069 = vmatpush.bf16.msra.mxu0 0
      %4070 = vmatpush.bf16.msra.mxu0 0
      %4071 = vmatpush.bf16.msra.mxu0 0
      %4072 = vmatpush.bf16.msra.mxu0 0
      %4073 = vmatpush.bf16.msra.mxu0 %v4006
      %4074 = vmatmul.bf16.gmra.mxu0 %v3991
      %v4075 = vpop.f32.mrf.mxu0
      %v4076 = vadd.f32 0.0, %v4075
      %v4077 = vpop.f32.mrf.mxu0
      %4078 = vdwg.mxu0
      %4079 = vmatpush.bf16.msra.mxu0 0
      %4080 = vmatpush.bf16.msra.mxu0 0
      %4081 = vmatpush.bf16.msra.mxu0 0
      %4082 = vmatpush.bf16.msra.mxu0 0
      %4083 = vmatpush.bf16.msra.mxu0 0
      %4084 = vmatpush.bf16.msra.mxu0 0
      %4085 = vmatpush.bf16.msra.mxu0 0
      %4086 = vmatpush.bf16.msra.mxu0 %v4009
      %4087 = vmatmul.bf16.gmra.mxu0 %v3991
      %v4088 = vpop.f32.mrf.mxu0
      %v4089 = vadd.f32 0.0, %v4088
      %v4090 = vpop.f32.mrf.mxu0
      %4091 = vdwg.mxu0
      %4092 = vmatpush.bf16.msra.mxu0 0
      %4093 = vmatpush.bf16.msra.mxu0 0
      %4094 = vmatpush.bf16.msra.mxu0 0
      %4095 = vmatpush.bf16.msra.mxu0 0
      %4096 = vmatpush.bf16.msra.mxu0 0
      %4097 = vmatpush.bf16.msra.mxu0 0
      %4098 = vmatpush.bf16.msra.mxu0 0
      %4099 = vmatpush.bf16.msra.mxu0 %v4012
      %4100 = vmatmul.bf16.gmra.mxu0 %v3991
      %v4101 = vpop.f32.mrf.mxu0
      %v4102 = vadd.f32 0.0, %v4101
      %v4103 = vpop.f32.mrf.mxu0
      %4104 = vdwg.mxu0
      %v4105 = vadd.f32 %v3943, %v4024
      %v4106 = vadd.f32 %v3944, %v4037
      %v4107 = vadd.f32 %v3945, %v4050
      %v4108 = vadd.f32 %v3946, %v4063
      %v4109 = vadd.f32 %v3947, %v4076
      %v4110 = vadd.f32 %v3948, %v4089
      %v4111 = vadd.f32 %v3949, %v4102
      %4112 = vrot.lane.b32.xlu0 %v225, 32
      %v4113 = vpop.permute.xlu0 %4112
      %4114 = vst [vmem:[#allocation1] ss:$4 sm:$0xff] %v220
      %s4115 = scalar_lea.vmem [#allocation1], 32
      %4116 = vst [vmem:[%s4115] ss:$4 sm:$0xff] %v221
      %v4117 = vld.sshfl [vmem:[#allocation1 + $0x8] sm:$0xff pattern:$0x73625140]
      %v4119 = vld.sshfl [vmem:[#allocation1 + $0x10] sm:$0xff pattern:$0x73625140]
      %v4121 = vld.sshfl [vmem:[#allocation1 + $0x18] sm:$0xff pattern:$0x73625140]
      %v4123 = vld.sshfl [vmem:[#allocation1 + $0x20] sm:$0xff pattern:$0x73625140]
      %v4125 = vld.sshfl [vmem:[#allocation1 + $0x28] sm:$0xff pattern:$0x73625140]
      %v4127 = vld.sshfl [vmem:[#allocation1 + $0x30] sm:$0xff pattern:$0x73625140]
      %v4129 = vld.sshfl [vmem:[#allocation1 + $0x38] sm:$0xff pattern:$0x73625140]
      %4131 = vrot.lane.b32.xlu0 %v4117, 36
      %v4132 = vpop.permute.xlu0 %4131
      %4133 = vrot.lane.b32.xlu0 %v4119, 36
      %v4134 = vpop.permute.xlu0 %4133
      %4135 = vrot.lane.b32.xlu0 %v4121, 36
      %v4136 = vpop.permute.xlu0 %4135
      %4137 = vrot.lane.b32.xlu0 %v4123, 36
      %v4138 = vpop.permute.xlu0 %4137
      %4139 = vrot.lane.b32.xlu0 %v4125, 36
      %v4140 = vpop.permute.xlu0 %4139
      %4141 = vrot.lane.b32.xlu0 %v4127, 36
      %v4142 = vpop.permute.xlu0 %4141
      %4143 = vrot.lane.b32.xlu0 %v4129, 36
      %v4144 = vpop.permute.xlu0 %4143
      %vm4145 = vcmask 293888
      %v4146 = vsel %vm4145, %v4132, %v4134
      %v4147 = vsel %vm4145, %v4134, %v4136
      %v4148 = vsel %vm4145, %v4136, %v4138
      %v4149 = vsel %vm4145, %v4138, %v4140
      %v4150 = vsel %vm4145, %v4140, %v4142
      %v4151 = vsel %vm4145, %v4142, %v4144
      %v4153 = vsel %vm268, %v4113, 0
      %v4156 = vsel %vm272, %v4146, 0
      %v4159 = vsel %vm272, %v4147, 0
      %v4162 = vsel %vm272, %v4148, 0
      %v4165 = vsel %vm272, %v4149, 0
      %v4168 = vsel %vm272, %v4150, 0
      %v4171 = vsel %vm272, %v4151, 0
      %v4174 = vsel %vm272, %v4144, 0
      %4176 = vmatpush.bf16.msra.mxu0 0
      %4177 = vmatpush.bf16.msra.mxu0 0
      %4178 = vmatpush.bf16.msra.mxu0 0
      %4179 = vmatpush.bf16.msra.mxu0 0
      %4180 = vmatpush.bf16.msra.mxu0 0
      %4181 = vmatpush.bf16.msra.mxu0 0
      %4182 = vmatpush.bf16.msra.mxu0 0
      %4183 = vmatpush.bf16.msra.mxu0 %v4156
      %4184 = vmatmul.bf16.gmra.mxu0 %v4153
      %v4185 = vpop.f32.mrf.mxu0
      %v4186 = vadd.f32 0.0, %v4185
      %v4187 = vpop.f32.mrf.mxu0
      %4188 = vdwg.mxu0
      %4189 = vmatpush.bf16.msra.mxu0 0
      %4190 = vmatpush.bf16.msra.mxu0 0
      %4191 = vmatpush.bf16.msra.mxu0 0
      %4192 = vmatpush.bf16.msra.mxu0 0
      %4193 = vmatpush.bf16.msra.mxu0 0
      %4194 = vmatpush.bf16.msra.mxu0 0
      %4195 = vmatpush.bf16.msra.mxu0 0
      %4196 = vmatpush.bf16.msra.mxu0 %v4159
      %4197 = vmatmul.bf16.gmra.mxu0 %v4153
      %v4198 = vpop.f32.mrf.mxu0
      %v4199 = vadd.f32 0.0, %v4198
      %v4200 = vpop.f32.mrf.mxu0
      %4201 = vdwg.mxu0
      %4202 = vmatpush.bf16.msra.mxu0 0
      %4203 = vmatpush.bf16.msra.mxu0 0
      %4204 = vmatpush.bf16.msra.mxu0 0
      %4205 = vmatpush.bf16.msra.mxu0 0
      %4206 = vmatpush.bf16.msra.mxu0 0
      %4207 = vmatpush.bf16.msra.mxu0 0
      %4208 = vmatpush.bf16.msra.mxu0 0
      %4209 = vmatpush.bf16.msra.mxu0 %v4162
      %4210 = vmatmul.bf16.gmra.mxu0 %v4153
      %v4211 = vpop.f32.mrf.mxu0
      %v4212 = vadd.f32 0.0, %v4211
      %v4213 = vpop.f32.mrf.mxu0
      %4214 = vdwg.mxu0
      %4215 = vmatpush.bf16.msra.mxu0 0
      %4216 = vmatpush.bf16.msra.mxu0 0
      %4217 = vmatpush.bf16.msra.mxu0 0
      %4218 = vmatpush.bf16.msra.mxu0 0
      %4219 = vmatpush.bf16.msra.mxu0 0
      %4220 = vmatpush.bf16.msra.mxu0 0
      %4221 = vmatpush.bf16.msra.mxu0 0
      %4222 = vmatpush.bf16.msra.mxu0 %v4165
      %4223 = vmatmul.bf16.gmra.mxu0 %v4153
      %v4224 = vpop.f32.mrf.mxu0
      %v4225 = vadd.f32 0.0, %v4224
      %v4226 = vpop.f32.mrf.mxu0
      %4227 = vdwg.mxu0
      %4228 = vmatpush.bf16.msra.mxu0 0
      %4229 = vmatpush.bf16.msra.mxu0 0
      %4230 = vmatpush.bf16.msra.mxu0 0
      %4231 = vmatpush.bf16.msra.mxu0 0
      %4232 = vmatpush.bf16.msra.mxu0 0
      %4233 = vmatpush.bf16.msra.mxu0 0
      %4234 = vmatpush.bf16.msra.mxu0 0
      %4235 = vmatpush.bf16.msra.mxu0 %v4168
      %4236 = vmatmul.bf16.gmra.mxu0 %v4153
      %v4237 = vpop.f32.mrf.mxu0
      %v4238 = vadd.f32 0.0, %v4237
      %v4239 = vpop.f32.mrf.mxu0
      %4240 = vdwg.mxu0
      %4241 = vmatpush.bf16.msra.mxu0 0
      %4242 = vmatpush.bf16.msra.mxu0 0
      %4243 = vmatpush.bf16.msra.mxu0 0
      %4244 = vmatpush.bf16.msra.mxu0 0
      %4245 = vmatpush.bf16.msra.mxu0 0
      %4246 = vmatpush.bf16.msra.mxu0 0
      %4247 = vmatpush.bf16.msra.mxu0 0
      %4248 = vmatpush.bf16.msra.mxu0 %v4171
      %4249 = vmatmul.bf16.gmra.mxu0 %v4153
      %v4250 = vpop.f32.mrf.mxu0
      %v4251 = vadd.f32 0.0, %v4250
      %v4252 = vpop.f32.mrf.mxu0
      %4253 = vdwg.mxu0
      %4254 = vmatpush.bf16.msra.mxu0 0
      %4255 = vmatpush.bf16.msra.mxu0 0
      %4256 = vmatpush.bf16.msra.mxu0 0
      %4257 = vmatpush.bf16.msra.mxu0 0
      %4258 = vmatpush.bf16.msra.mxu0 0
      %4259 = vmatpush.bf16.msra.mxu0 0
      %4260 = vmatpush.bf16.msra.mxu0 0
      %4261 = vmatpush.bf16.msra.mxu0 %v4174
      %4262 = vmatmul.bf16.gmra.mxu0 %v4153
      %v4263 = vpop.f32.mrf.mxu0
      %v4264 = vadd.f32 0.0, %v4263
      %v4265 = vpop.f32.mrf.mxu0
      %4266 = vdwg.mxu0
      %v4267 = vadd.f32 %v4105, %v4186
      %v4268 = vadd.f32 %v4106, %v4199
      %v4269 = vadd.f32 %v4107, %v4212
      %v4270 = vadd.f32 %v4108, %v4225
      %v4271 = vadd.f32 %v4109, %v4238
      %v4272 = vadd.f32 %v4110, %v4251
      %v4273 = vadd.f32 %v4111, %v4264
      %4274 = vrot.lane.b32.xlu0 %v225, 28
      %v4275 = vpop.permute.xlu0 %4274
      %4276 = vst [vmem:[#allocation1] ss:$4 sm:$0xff] %v220
      %s4277 = scalar_lea.vmem [#allocation1], 32
      %4278 = vst [vmem:[%s4277] ss:$4 sm:$0xff] %v221
      %v4279 = vld.sshfl [vmem:[#allocation1 + $0x8] sm:$0xff pattern:$0x73625140]
      %v4281 = vld.sshfl [vmem:[#allocation1 + $0x10] sm:$0xff pattern:$0x73625140]
      %v4283 = vld.sshfl [vmem:[#allocation1 + $0x18] sm:$0xff pattern:$0x73625140]
      %v4285 = vld.sshfl [vmem:[#allocation1 + $0x20] sm:$0xff pattern:$0x73625140]
      %v4287 = vld.sshfl [vmem:[#allocation1 + $0x28] sm:$0xff pattern:$0x73625140]
      %v4289 = vld.sshfl [vmem:[#allocation1 + $0x30] sm:$0xff pattern:$0x73625140]
      %v4291 = vld.sshfl [vmem:[#allocation1 + $0x38] sm:$0xff pattern:$0x73625140]
      %4293 = vrot.lane.b32.xlu0 %v4279, 35
      %v4294 = vpop.permute.xlu0 %4293
      %4295 = vrot.lane.b32.xlu0 %v4281, 35
      %v4296 = vpop.permute.xlu0 %4295
      %4297 = vrot.lane.b32.xlu0 %v4283, 35
      %v4298 = vpop.permute.xlu0 %4297
      %4299 = vrot.lane.b32.xlu0 %v4285, 35
      %v4300 = vpop.permute.xlu0 %4299
      %4301 = vrot.lane.b32.xlu0 %v4287, 35
      %v4302 = vpop.permute.xlu0 %4301
      %4303 = vrot.lane.b32.xlu0 %v4289, 35
      %v4304 = vpop.permute.xlu0 %4303
      %4305 = vrot.lane.b32.xlu0 %v4291, 35
      %v4306 = vpop.permute.xlu0 %4305
      %vm4307 = vcmask 285696
      %v4308 = vsel %vm4307, %v4294, %v4296
      %v4309 = vsel %vm4307, %v4296, %v4298
      %v4310 = vsel %vm4307, %v4298, %v4300
      %v4311 = vsel %vm4307, %v4300, %v4302
      %v4312 = vsel %vm4307, %v4302, %v4304
      %v4313 = vsel %vm4307, %v4304, %v4306
      %v4315 = vsel %vm268, %v4275, 0
      %v4318 = vsel %vm272, %v4308, 0
      %v4321 = vsel %vm272, %v4309, 0
      %v4324 = vsel %vm272, %v4310, 0
      %v4327 = vsel %vm272, %v4311, 0
      %v4330 = vsel %vm272, %v4312, 0
      %v4333 = vsel %vm272, %v4313, 0
      %v4336 = vsel %vm272, %v4306, 0
      %4338 = vmatpush.bf16.msra.mxu0 0
      %4339 = vmatpush.bf16.msra.mxu0 0
      %4340 = vmatpush.bf16.msra.mxu0 0
      %4341 = vmatpush.bf16.msra.mxu0 0
      %4342 = vmatpush.bf16.msra.mxu0 0
      %4343 = vmatpush.bf16.msra.mxu0 0
      %4344 = vmatpush.bf16.msra.mxu0 0
      %4345 = vmatpush.bf16.msra.mxu0 %v4318
      %4346 = vmatmul.bf16.gmra.mxu0 %v4315
      %v4347 = vpop.f32.mrf.mxu0
      %v4348 = vadd.f32 0.0, %v4347
      %v4349 = vpop.f32.mrf.mxu0
      %4350 = vdwg.mxu0
      %4351 = vmatpush.bf16.msra.mxu0 0
      %4352 = vmatpush.bf16.msra.mxu0 0
      %4353 = vmatpush.bf16.msra.mxu0 0
      %4354 = vmatpush.bf16.msra.mxu0 0
      %4355 = vmatpush.bf16.msra.mxu0 0
      %4356 = vmatpush.bf16.msra.mxu0 0
      %4357 = vmatpush.bf16.msra.mxu0 0
      %4358 = vmatpush.bf16.msra.mxu0 %v4321
      %4359 = vmatmul.bf16.gmra.mxu0 %v4315
      %v4360 = vpop.f32.mrf.mxu0
      %v4361 = vadd.f32 0.0, %v4360
      %v4362 = vpop.f32.mrf.mxu0
      %4363 = vdwg.mxu0
      %4364 = vmatpush.bf16.msra.mxu0 0
      %4365 = vmatpush.bf16.msra.mxu0 0
      %4366 = vmatpush.bf16.msra.mxu0 0
      %4367 = vmatpush.bf16.msra.mxu0 0
      %4368 = vmatpush.bf16.msra.mxu0 0
      %4369 = vmatpush.bf16.msra.mxu0 0
      %4370 = vmatpush.bf16.msra.mxu0 0
      %4371 = vmatpush.bf16.msra.mxu0 %v4324
      %4372 = vmatmul.bf16.gmra.mxu0 %v4315
      %v4373 = vpop.f32.mrf.mxu0
      %v4374 = vadd.f32 0.0, %v4373
      %v4375 = vpop.f32.mrf.mxu0
      %4376 = vdwg.mxu0
      %4377 = vmatpush.bf16.msra.mxu0 0
      %4378 = vmatpush.bf16.msra.mxu0 0
      %4379 = vmatpush.bf16.msra.mxu0 0
      %4380 = vmatpush.bf16.msra.mxu0 0
      %4381 = vmatpush.bf16.msra.mxu0 0
      %4382 = vmatpush.bf16.msra.mxu0 0
      %4383 = vmatpush.bf16.msra.mxu0 0
      %4384 = vmatpush.bf16.msra.mxu0 %v4327
      %4385 = vmatmul.bf16.gmra.mxu0 %v4315
      %v4386 = vpop.f32.mrf.mxu0
      %v4387 = vadd.f32 0.0, %v4386
      %v4388 = vpop.f32.mrf.mxu0
      %4389 = vdwg.mxu0
      %4390 = vmatpush.bf16.msra.mxu0 0
      %4391 = vmatpush.bf16.msra.mxu0 0
      %4392 = vmatpush.bf16.msra.mxu0 0
      %4393 = vmatpush.bf16.msra.mxu0 0
      %4394 = vmatpush.bf16.msra.mxu0 0
      %4395 = vmatpush.bf16.msra.mxu0 0
      %4396 = vmatpush.bf16.msra.mxu0 0
      %4397 = vmatpush.bf16.msra.mxu0 %v4330
      %4398 = vmatmul.bf16.gmra.mxu0 %v4315
      %v4399 = vpop.f32.mrf.mxu0
      %v4400 = vadd.f32 0.0, %v4399
      %v4401 = vpop.f32.mrf.mxu0
      %4402 = vdwg.mxu0
      %4403 = vmatpush.bf16.msra.mxu0 0
      %4404 = vmatpush.bf16.msra.mxu0 0
      %4405 = vmatpush.bf16.msra.mxu0 0
      %4406 = vmatpush.bf16.msra.mxu0 0
      %4407 = vmatpush.bf16.msra.mxu0 0
      %4408 = vmatpush.bf16.msra.mxu0 0
      %4409 = vmatpush.bf16.msra.mxu0 0
      %4410 = vmatpush.bf16.msra.mxu0 %v4333
      %4411 = vmatmul.bf16.gmra.mxu0 %v4315
      %v4412 = vpop.f32.mrf.mxu0
      %v4413 = vadd.f32 0.0, %v4412
      %v4414 = vpop.f32.mrf.mxu0
      %4415 = vdwg.mxu0
      %4416 = vmatpush.bf16.msra.mxu0 0
      %4417 = vmatpush.bf16.msra.mxu0 0
      %4418 = vmatpush.bf16.msra.mxu0 0
      %4419 = vmatpush.bf16.msra.mxu0 0
      %4420 = vmatpush.bf16.msra.mxu0 0
      %4421 = vmatpush.bf16.msra.mxu0 0
      %4422 = vmatpush.bf16.msra.mxu0 0
      %4423 = vmatpush.bf16.msra.mxu0 %v4336
      %4424 = vmatmul.bf16.gmra.mxu0 %v4315
      %v4425 = vpop.f32.mrf.mxu0
      %v4426 = vadd.f32 0.0, %v4425
      %v4427 = vpop.f32.mrf.mxu0
      %4428 = vdwg.mxu0
      %v4429 = vadd.f32 %v4267, %v4348
      %v4430 = vadd.f32 %v4268, %v4361
      %v4431 = vadd.f32 %v4269, %v4374
      %v4432 = vadd.f32 %v4270, %v4387
      %v4433 = vadd.f32 %v4271, %v4400
      %v4434 = vadd.f32 %v4272, %v4413
      %v4435 = vadd.f32 %v4273, %v4426
      %4436 = vrot.lane.b32.xlu0 %v225, 24
      %v4437 = vpop.permute.xlu0 %4436
      %4438 = vst [vmem:[#allocation1] ss:$4 sm:$0xff] %v220
      %s4439 = scalar_lea.vmem [#allocation1], 32
      %4440 = vst [vmem:[%s4439] ss:$4 sm:$0xff] %v221
      %v4441 = vld.sshfl [vmem:[#allocation1 + $0x8] sm:$0xff pattern:$0x73625140]
      %v4443 = vld.sshfl [vmem:[#allocation1 + $0x10] sm:$0xff pattern:$0x73625140]
      %v4445 = vld.sshfl [vmem:[#allocation1 + $0x18] sm:$0xff pattern:$0x73625140]
      %v4447 = vld.sshfl [vmem:[#allocation1 + $0x20] sm:$0xff pattern:$0x73625140]
      %v4449 = vld.sshfl [vmem:[#allocation1 + $0x28] sm:$0xff pattern:$0x73625140]
      %v4451 = vld.sshfl [vmem:[#allocation1 + $0x30] sm:$0xff pattern:$0x73625140]
      %v4453 = vld.sshfl [vmem:[#allocation1 + $0x38] sm:$0xff pattern:$0x73625140]
      %4455 = vrot.lane.b32.xlu0 %v4441, 34
      %v4456 = vpop.permute.xlu0 %4455
      %4457 = vrot.lane.b32.xlu0 %v4443, 34
      %v4458 = vpop.permute.xlu0 %4457
      %4459 = vrot.lane.b32.xlu0 %v4445, 34
      %v4460 = vpop.permute.xlu0 %4459
      %4461 = vrot.lane.b32.xlu0 %v4447, 34
      %v4462 = vpop.permute.xlu0 %4461
      %4463 = vrot.lane.b32.xlu0 %v4449, 34
      %v4464 = vpop.permute.xlu0 %4463
      %4465 = vrot.lane.b32.xlu0 %v4451, 34
      %v4466 = vpop.permute.xlu0 %4465
      %4467 = vrot.lane.b32.xlu0 %v4453, 34
      %v4468 = vpop.permute.xlu0 %4467
      %vm4469 = vcmask 277504
      %v4470 = vsel %vm4469, %v4456, %v4458
      %v4471 = vsel %vm4469, %v4458, %v4460
      %v4472 = vsel %vm4469, %v4460, %v4462
      %v4473 = vsel %vm4469, %v4462, %v4464
      %v4474 = vsel %vm4469, %v4464, %v4466
      %v4475 = vsel %vm4469, %v4466, %v4468
      %v4477 = vsel %vm268, %v4437, 0
      %v4480 = vsel %vm272, %v4470, 0
      %v4483 = vsel %vm272, %v4471, 0
      %v4486 = vsel %vm272, %v4472, 0
      %v4489 = vsel %vm272, %v4473, 0
      %v4492 = vsel %vm272, %v4474, 0
      %v4495 = vsel %vm272, %v4475, 0
      %v4498 = vsel %vm272, %v4468, 0
      %4500 = vmatpush.bf16.msra.mxu0 0
      %4501 = vmatpush.bf16.msra.mxu0 0
      %4502 = vmatpush.bf16.msra.mxu0 0
      %4503 = vmatpush.bf16.msra.mxu0 0
      %4504 = vmatpush.bf16.msra.mxu0 0
      %4505 = vmatpush.bf16.msra.mxu0 0
      %4506 = vmatpush.bf16.msra.mxu0 0
      %4507 = vmatpush.bf16.msra.mxu0 %v4480
      %4508 = vmatmul.bf16.gmra.mxu0 %v4477
      %v4509 = vpop.f32.mrf.mxu0
      %v4510 = vadd.f32 0.0, %v4509
      %v4511 = vpop.f32.mrf.mxu0
      %4512 = vdwg.mxu0
      %4513 = vmatpush.bf16.msra.mxu0 0
      %4514 = vmatpush.bf16.msra.mxu0 0
      %4515 = vmatpush.bf16.msra.mxu0 0
      %4516 = vmatpush.bf16.msra.mxu0 0
      %4517 = vmatpush.bf16.msra.mxu0 0
      %4518 = vmatpush.bf16.msra.mxu0 0
      %4519 = vmatpush.bf16.msra.mxu0 0
      %4520 = vmatpush.bf16.msra.mxu0 %v4483
      %4521 = vmatmul.bf16.gmra.mxu0 %v4477
      %v4522 = vpop.f32.mrf.mxu0
      %v4523 = vadd.f32 0.0, %v4522
      %v4524 = vpop.f32.mrf.mxu0
      %4525 = vdwg.mxu0
      %4526 = vmatpush.bf16.msra.mxu0 0
      %4527 = vmatpush.bf16.msra.mxu0 0
      %4528 = vmatpush.bf16.msra.mxu0 0
      %4529 = vmatpush.bf16.msra.mxu0 0
      %4530 = vmatpush.bf16.msra.mxu0 0
      %4531 = vmatpush.bf16.msra.mxu0 0
      %4532 = vmatpush.bf16.msra.mxu0 0
      %4533 = vmatpush.bf16.msra.mxu0 %v4486
      %4534 = vmatmul.bf16.gmra.mxu0 %v4477
      %v4535 = vpop.f32.mrf.mxu0
      %v4536 = vadd.f32 0.0, %v4535
      %v4537 = vpop.f32.mrf.mxu0
      %4538 = vdwg.mxu0
      %4539 = vmatpush.bf16.msra.mxu0 0
      %4540 = vmatpush.bf16.msra.mxu0 0
      %4541 = vmatpush.bf16.msra.mxu0 0
      %4542 = vmatpush.bf16.msra.mxu0 0
      %4543 = vmatpush.bf16.msra.mxu0 0
      %4544 = vmatpush.bf16.msra.mxu0 0
      %4545 = vmatpush.bf16.msra.mxu0 0
      %4546 = vmatpush.bf16.msra.mxu0 %v4489
      %4547 = vmatmul.bf16.gmra.mxu0 %v4477
      %v4548 = vpop.f32.mrf.mxu0
      %v4549 = vadd.f32 0.0, %v4548
      %v4550 = vpop.f32.mrf.mxu0
      %4551 = vdwg.mxu0
      %4552 = vmatpush.bf16.msra.mxu0 0
      %4553 = vmatpush.bf16.msra.mxu0 0
      %4554 = vmatpush.bf16.msra.mxu0 0
      %4555 = vmatpush.bf16.msra.mxu0 0
      %4556 = vmatpush.bf16.msra.mxu0 0
      %4557 = vmatpush.bf16.msra.mxu0 0
      %4558 = vmatpush.bf16.msra.mxu0 0
      %4559 = vmatpush.bf16.msra.mxu0 %v4492
      %4560 = vmatmul.bf16.gmra.mxu0 %v4477
      %v4561 = vpop.f32.mrf.mxu0
      %v4562 = vadd.f32 0.0, %v4561
      %v4563 = vpop.f32.mrf.mxu0
      %4564 = vdwg.mxu0
      %4565 = vmatpush.bf16.msra.mxu0 0
      %4566 = vmatpush.bf16.msra.mxu0 0
      %4567 = vmatpush.bf16.msra.mxu0 0
      %4568 = vmatpush.bf16.msra.mxu0 0
      %4569 = vmatpush.bf16.msra.mxu0 0
      %4570 = vmatpush.bf16.msra.mxu0 0
      %4571 = vmatpush.bf16.msra.mxu0 0
      %4572 = vmatpush.bf16.msra.mxu0 %v4495
      %4573 = vmatmul.bf16.gmra.mxu0 %v4477
      %v4574 = vpop.f32.mrf.mxu0
      %v4575 = vadd.f32 0.0, %v4574
      %v4576 = vpop.f32.mrf.mxu0
      %4577 = vdwg.mxu0
      %4578 = vmatpush.bf16.msra.mxu0 0
      %4579 = vmatpush.bf16.msra.mxu0 0
      %4580 = vmatpush.bf16.msra.mxu0 0
      %4581 = vmatpush.bf16.msra.mxu0 0
      %4582 = vmatpush.bf16.msra.mxu0 0
      %4583 = vmatpush.bf16.msra.mxu0 0
      %4584 = vmatpush.bf16.msra.mxu0 0
      %4585 = vmatpush.bf16.msra.mxu0 %v4498
      %4586 = vmatmul.bf16.gmra.mxu0 %v4477
      %v4587 = vpop.f32.mrf.mxu0
      %v4588 = vadd.f32 0.0, %v4587
      %v4589 = vpop.f32.mrf.mxu0
      %4590 = vdwg.mxu0
      %v4591 = vadd.f32 %v4429, %v4510
      %v4592 = vadd.f32 %v4430, %v4523
      %v4593 = vadd.f32 %v4431, %v4536
      %v4594 = vadd.f32 %v4432, %v4549
      %v4595 = vadd.f32 %v4433, %v4562
      %v4596 = vadd.f32 %v4434, %v4575
      %v4597 = vadd.f32 %v4435, %v4588
      %v4598 = vlaneseq
      %v4599 = vand.u32 %v4598, 127
      %v4600 = vadd.s32 %v4599, 128
      %v4601 = vadd.s32 %v4599, 256
      %v4602 = vadd.s32 %v4599, 384
      %v4603 = vadd.s32 %v4599, 512
      %v4604 = vadd.s32 %v4599, 640
      %v4605 = vadd.s32 %v4599, 768
      %v4606 = vcvt.s32.f32 %v4599
      %v4607 = vcvt.s32.f32 %v4600
      %v4608 = vcvt.s32.f32 %v4601
      %v4609 = vcvt.s32.f32 %v4602
      %v4610 = vcvt.s32.f32 %v4603
      %v4611 = vcvt.s32.f32 %v4604
      %v4612 = vcvt.s32.f32 %v4605
      %v4613 = vadd.f32 %v4606, 0.5
      %v4614 = vadd.f32 %v4607, 0.5
      %v4615 = vadd.f32 %v4608, 0.5
      %v4616 = vadd.f32 %v4609, 0.5
      %v4617 = vadd.f32 %v4610, 0.5
      %v4618 = vadd.f32 %v4611, 0.5
      %v4619 = vadd.f32 %v4612, 0.5
      %v4620 = vrcp.pop 100.0
      %v4621 = vmul.f32 100.0, %v4620
      %v4622 = vsub.f32 1.0, %v4621
      %v4623 = vmul.f32 %v4620, %v4622
      %v4624 = vadd.f32 %v4620, %v4623
      %vm4625 = vweird.f32 %v4620
      %v4626 = vsel %vm4625, %v4620, %v4624
      %v4627 = vmul.f32 %v4613, %v4626
      %v4628 = vmul.f32 %v4614, %v4626
      %v4629 = vmul.f32 %v4615, %v4626
      %v4630 = vmul.f32 %v4616, %v4626
      %v4631 = vmul.f32 %v4617, %v4626
      %v4632 = vmul.f32 %v4618, %v4626
      %v4633 = vmul.f32 %v4619, %v4626
      %v4634 = vfloor.f32 %v4627
      %v4635 = vfloor.f32 %v4628
      %v4636 = vfloor.f32 %v4629
      %v4637 = vfloor.f32 %v4630
      %v4638 = vfloor.f32 %v4631
      %v4639 = vfloor.f32 %v4632
      %v4640 = vfloor.f32 %v4633
      %v4641 = vmul.f32 %v4634, 100.0
      %v4642 = vmul.f32 %v4635, 100.0
      %v4643 = vmul.f32 %v4636, 100.0
      %v4644 = vmul.f32 %v4637, 100.0
      %v4645 = vmul.f32 %v4638, 100.0
      %v4646 = vmul.f32 %v4639, 100.0
      %v4647 = vmul.f32 %v4640, 100.0
      %v4648 = vsub.f32 %v4606, %v4641
      %v4649 = vsub.f32 %v4607, %v4642
      %v4650 = vsub.f32 %v4608, %v4643
      %v4651 = vsub.f32 %v4609, %v4644
      %v4652 = vsub.f32 %v4610, %v4645
      %v4653 = vsub.f32 %v4611, %v4646
      %v4654 = vsub.f32 %v4612, %v4647
      %v4655 = vadd.f32 %v4648, 0.5
      %v4656 = vadd.f32 %v4649, 0.5
      %v4657 = vadd.f32 %v4650, 0.5
      %v4658 = vadd.f32 %v4651, 0.5
      %v4659 = vadd.f32 %v4652, 0.5
      %v4660 = vadd.f32 %v4653, 0.5
      %v4661 = vadd.f32 %v4654, 0.5
      %v4662 = vrcp.pop 10.0
      %v4663 = vmul.f32 10.0, %v4662
      %v4664 = vsub.f32 1.0, %v4663
      %v4665 = vmul.f32 %v4662, %v4664
      %v4666 = vadd.f32 %v4662, %v4665
      %vm4667 = vweird.f32 %v4662
      %v4668 = vsel %vm4667, %v4662, %v4666
      %v4669 = vmul.f32 %v4655, %v4668
      %v4670 = vmul.f32 %v4656, %v4668
      %v4671 = vmul.f32 %v4657, %v4668
      %v4672 = vmul.f32 %v4658, %v4668
      %v4673 = vmul.f32 %v4659, %v4668
      %v4674 = vmul.f32 %v4660, %v4668
      %v4675 = vmul.f32 %v4661, %v4668
      %v4676 = vfloor.f32 %v4669
      %v4677 = vfloor.f32 %v4670
      %v4678 = vfloor.f32 %v4671
      %v4679 = vfloor.f32 %v4672
      %v4680 = vfloor.f32 %v4673
      %v4681 = vfloor.f32 %v4674
      %v4682 = vfloor.f32 %v4675
      %v4683 = vmul.f32 %v4676, 10.0
      %v4684 = vmul.f32 %v4677, 10.0
      %v4685 = vmul.f32 %v4678, 10.0
      %v4686 = vmul.f32 %v4679, 10.0
      %v4687 = vmul.f32 %v4680, 10.0
      %v4688 = vmul.f32 %v4681, 10.0
      %v4689 = vmul.f32 %v4682, 10.0
      %v4690 = vsub.f32 %v4648, %v4683
      %v4691 = vsub.f32 %v4649, %v4684
      %v4692 = vsub.f32 %v4650, %v4685
      %v4693 = vsub.f32 %v4651, %v4686
      %v4694 = vsub.f32 %v4652, %v4687
      %v4695 = vsub.f32 %v4653, %v4688
      %v4696 = vsub.f32 %v4654, %v4689
      %vm4697 = vcmp.lt.f32.partialorder %v4676, 8.0
      %vm4698 = vcmp.lt.f32.partialorder %v4677, 8.0
      %vm4699 = vcmp.lt.f32.partialorder %v4678, 8.0
      %vm4700 = vcmp.lt.f32.partialorder %v4679, 8.0
      %vm4701 = vcmp.lt.f32.partialorder %v4680, 8.0
      %vm4702 = vcmp.lt.f32.partialorder %v4681, 8.0
      %vm4703 = vcmp.lt.f32.partialorder %v4682, 8.0
      %vm4704 = vcmp.ge.f32.partialorder %v4690, 1.0
      %vm4705 = vcmp.ge.f32.partialorder %v4691, 1.0
      %vm4706 = vcmp.ge.f32.partialorder %v4692, 1.0
      %vm4707 = vcmp.ge.f32.partialorder %v4693, 1.0
      %vm4708 = vcmp.ge.f32.partialorder %v4694, 1.0
      %vm4709 = vcmp.ge.f32.partialorder %v4695, 1.0
      %vm4710 = vcmp.ge.f32.partialorder %v4696, 1.0
      %vm4711 = vmand %vm4697, %vm4704
      %vm4712 = vmand %vm4698, %vm4705
      %vm4713 = vmand %vm4699, %vm4706
      %vm4714 = vmand %vm4700, %vm4707
      %vm4715 = vmand %vm4701, %vm4708
      %vm4716 = vmand %vm4702, %vm4709
      %vm4717 = vmand %vm4703, %vm4710
      %vm4718 = vcmp.le.f32.partialorder %v4690, 8.0
      %vm4719 = vcmp.le.f32.partialorder %v4691, 8.0
      %vm4720 = vcmp.le.f32.partialorder %v4692, 8.0
      %vm4721 = vcmp.le.f32.partialorder %v4693, 8.0
      %vm4722 = vcmp.le.f32.partialorder %v4694, 8.0
      %vm4723 = vcmp.le.f32.partialorder %v4695, 8.0
      %vm4724 = vcmp.le.f32.partialorder %v4696, 8.0
      %vm4725 = vmand %vm4711, %vm4718
      %vm4726 = vmand %vm4712, %vm4719
      %vm4727 = vmand %vm4713, %vm4720
      %vm4728 = vmand %vm4714, %vm4721
      %vm4729 = vmand %vm4715, %vm4722
      %vm4730 = vmand %vm4716, %vm4723
      %vm4731 = vmand %vm4717, %vm4724
      %v4732 = vsel %vm4725, 1.0, 0.0
      %v4733 = vsel %vm4726, 1.0, 0.0
      %v4734 = vsel %vm4727, 1.0, 0.0
      %v4735 = vsel %vm4728, 1.0, 0.0
      %v4736 = vsel %vm4729, 1.0, 0.0
      %v4737 = vsel %vm4730, 1.0, 0.0
      %v4738 = vsel %vm4731, 1.0, 0.0
      %v4739 = vmul.f32 %v4591, %v4732
      %v4740 = vmul.f32 %v4592, %v4733
      %v4741 = vmul.f32 %v4593, %v4734
      %v4742 = vmul.f32 %v4594, %v4735
      %v4743 = vmul.f32 %v4595, %v4736
      %v4744 = vmul.f32 %v4596, %v4737
      %v4745 = vmul.f32 %v4597, %v4738
      %v4746 = vpack.c.bf16 %v4592, %v4591
      %v4747 = vpack.c.bf16 %v4594, %v4593
      %v4748 = vpack.c.bf16 %v4596, %v4595
      %v4749 = vpack.c.bf16 %v4597, %v4597
      %4750 = vst [vmem:[%s210] sm:$0xff] %v4746
      %4751 = vst [vmem:[%s210 + $0x8] sm:$0xff] %v4747
      %4752 = vst [vmem:[%s210 + $0x10] sm:$0xff] %v4748
      %vm4753 = vcmask 257024
      %4754 = vst.msk [vmem:[%s210 + $0x18] sm:$0xf] %vm4753, %v4749
      %v4755 = vadd.f32 %v4739, %v4740
      %v4756 = vadd.f32 %v4755, %v4741
      %v4757 = vadd.f32 %v4756, %v4742
      %v4758 = vadd.f32 %v4757, %v4743
      %v4759 = vadd.f32 %v4758, %v4744
      %vm4760 = vcmask 261120
      %v4761 = vsel %vm4760, %v4745, 0.0
      %v4762 = vadd.f32 %v4759, %v4761
      %4763 = vadd.xlane.f32.xlu0 %v4762
      %v4764 = vpop.xlane.xlu0 %4763
      %vm4765 = vcmask 7168
      %4766 = vst.msk [vmem:[%s214] sm:$0xff] %vm4765, %v4764
      %v4767 = vmul.f32 %v4739, %v4739
      %v4768 = vmul.f32 %v4740, %v4740
      %v4769 = vmul.f32 %v4741, %v4741
      %v4770 = vmul.f32 %v4742, %v4742
      %v4771 = vmul.f32 %v4743, %v4743
      %v4772 = vmul.f32 %v4744, %v4744
      %v4773 = vmul.f32 %v4745, %v4745
      %v4774 = vadd.f32 %v4767, %v4768
      %v4775 = vadd.f32 %v4774, %v4769
      %v4776 = vadd.f32 %v4775, %v4770
      %v4777 = vadd.f32 %v4776, %v4771
      %v4778 = vadd.f32 %v4777, %v4772
      %v4779 = vsel %vm4760, %v4773, 0.0
      %v4780 = vadd.f32 %v4778, %v4779
      %4781 = vadd.xlane.f32.xlu0 %v4780
      %v4782 = vpop.xlane.xlu0 %4781
      %4783 = vst.msk [vmem:[%s218] sm:$0xff] %vm4765, %v4782
      %p4784 = scmp.lt.s32.totalorder %s16, 1
      %s4785 = scalar_select %p4784, %s16, 1
      %s4786 = smul.addr %s4785, 7
      %s4787 = smul.addr %s4786, 4
      %s4788 = scalar_lea.vmem %s2, %s4787
      %p4789 = scmp.lt.s32.totalorder %s16, 1
      %s4790 = scalar_select %p4789, %s16, 1
      %s4791 = smul.addr %s4790, 8
      %s4792 = scalar_lea.vmem %s3, %s4791
      %p4793 = scmp.lt.s32.totalorder %s16, 1
      %s4794 = scalar_select %p4793, %s16, 1
      %s4795 = smul.addr %s4794, 8
      %s4796 = scalar_lea.vmem %s4, %s4795
      // Predicated region
      $region29: #{conv_bn_3d.2} parent=27 // pred_check
        %p4797 = pneg %p81
      $region30: #{conv_bn_3d.2} parent=27 // pred_check_branch
        %4799 = sbr.rel (%p4797) target = $region32
      $region31: #{conv_bn_3d.2} parent=27 // pred_region
        _
      $region32: #{conv_bn_3d.2} parent=27 // pred_fallthru
        _
      // Predicated region
      $region33: #{conv_bn_3d.2} parent=27 // pred_check
        %p4800 = pneg %p107
      $region34: #{conv_bn_3d.2} parent=27 // pred_check_branch
        %4802 = sbr.rel (%p4800) target = $region36
      $region35: #{conv_bn_3d.2} parent=27 // pred_region
        _
      $region36: #{conv_bn_3d.2} parent=27 // pred_fallthru
        _
      // Predicated region
      $region37: #{conv_bn_3d.2} parent=27 // pred_check
        %p4803 = pneg %p133
      $region38: #{conv_bn_3d.2} parent=27 // pred_check_branch
        %4805 = sbr.rel (%p4803) target = $region40
      $region39: #{conv_bn_3d.2} parent=27 // pred_region
        _
      $region40: #{conv_bn_3d.2} parent=27 // pred_fallthru
        _
    $region28: #{conv_bn_3d.2} parent=5 // pred_fallthru
      _
    %p4806 = scmp.le.s32.totalorder 2, %s11
    // Predicated region
    $region41: #{conv_bn_3d.2} parent=5 // pred_check
      %p4807 = pneg %p4806
    $region42: #{conv_bn_3d.2} parent=5 // pred_check_branch
      %4809 = sbr.rel (%p4807) target = $region44
    $region43: #{conv_bn_3d.2} parent=5 // pred_region
      %s4810 = ssub.s32 %s11, 2
      // Predicated region
      $region45: #{conv_bn_3d.2} parent=43 // pred_check
        %p4811 = pneg %p87
      $region46: #{conv_bn_3d.2} parent=43 // pred_check_branch
        %4813 = sbr.rel (%p4811) target = $region48
      $region47: #{conv_bn_3d.2} parent=43 // pred_region
        %p4814 = scmp.lt.s32.totalorder %s17, 1
        %s4815 = scalar_select %p4814, %s17, 1
        %s4816 = smul.addr %s4815, 7
        %s4817 = smul.addr %s4816, 4
        %s4818 = scalar_lea.vmem %s2, %s4817
      $region48: #{conv_bn_3d.2} parent=43 // pred_fallthru
        _
      // Predicated region
      $region49: #{conv_bn_3d.2} parent=43 // pred_check
        %p4819 = pneg %p113
      $region50: #{conv_bn_3d.2} parent=43 // pred_check_branch
        %4821 = sbr.rel (%p4819) target = $region52
      $region51: #{conv_bn_3d.2} parent=43 // pred_region
        %p4822 = scmp.lt.s32.totalorder %s17, 1
        %s4823 = scalar_select %p4822, %s17, 1
        %s4824 = smul.addr %s4823, 8
        %s4825 = scalar_lea.vmem %s3, %s4824
      $region52: #{conv_bn_3d.2} parent=43 // pred_fallthru
        _
      // Predicated region
      $region53: #{conv_bn_3d.2} parent=43 // pred_check
        %p4826 = pneg %p139
      $region54: #{conv_bn_3d.2} parent=43 // pred_check_branch
        %4828 = sbr.rel (%p4826) target = $region56
      $region55: #{conv_bn_3d.2} parent=43 // pred_region
        %p4829 = scmp.lt.s32.totalorder %s17, 1
        %s4830 = scalar_select %p4829, %s17, 1
        %s4831 = smul.addr %s4830, 8
        %s4832 = scalar_lea.vmem %s4, %s4831
      $region56: #{conv_bn_3d.2} parent=43 // pred_fallthru
        _
    $region44: #{conv_bn_3d.2} parent=5 // pred_fallthru
      _
  $region6: #{conv_bn_3d.2} parent=0 // loop_footer
    %s15 = sadd.s32 1, %s11
  $region7: #{conv_bn_3d.2} parent=0 // loop_footer_branch
    %10 = sbr.rel target = $region3
  $region8: #{conv_bn_3d.2} parent=0 // loop_exit
    _

</llo_original>
